<compile_context>
chip_gen: v6e
topology: v6e:2x2x1
jax: 0.10.0
libtpu: 0.0.40
codegen_flags: <defaults>
</compile_context>

<pallas_src>
import functools

import jax
import jax.numpy as jnp
from jax.experimental import pallas as pl
from jax.experimental.pallas import tpu as pltpu


LANE = 128      # pairs per lane row
BLK_SUB = 512   # sublane rows per grid step -> 512 * 128 = 65536 pairs (~1.75 MB) / step


def _num_parallel_cores() -> int:
    """Size of the leading 'parallel' grid axis: 2 on v7x (2 TC/chip), else 1."""
    try:
        kind = jax.devices()[0].device_kind.lower()
    except Exception:
        return 1
    return 2 if "7" in kind else 1


def _lj_kernel(feat_ref, batch_ref, out_ref, *, f_pad):
    # out_ref is resident across the inner (pair-tile) grid axis -> accumulator.
    @pl.when(pl.program_id(1) == 0)
    def _():
        out_ref[...] = jnp.zeros_like(out_ref)

    # ---- unpack the fused feature stream ----
    dx = feat_ref[0]                                      # (BLK_SUB, LANE)
    dy = feat_ref[1]
    dz = feat_ref[2]
    c6 = feat_ref[3]                                      # 4*eps*sigma^6
    c12 = feat_ref[4]                                     # 4*eps*sigma^12
    cut2 = feat_ref[5]                                    # cutoff^2 (0 for padded pairs)

    # ---- squared distances (no sqrt needed; mask uses cutoff^2) ----
    d2 = dx * dx + dy * dy + dz * dz
    mask = d2 < cut2

    # Exact reciprocal for the distance: approx-recip error is amplified by the
    # 6th/12th powers and would break the rtol=1e-3 tolerance.
    d2_safe = jnp.where(mask, d2, jnp.ones_like(d2))
    inv2 = 1.0 / d2_safe
    inv6 = inv2 * inv2 * inv2

    # Shift term recomputed in-kernel (saves 4 B/pair of HBM traffic).  Approx
    # reciprocal is safe here (goes to the otherwise-idle EUP slot; the shift term
    # is tiny relative to the energy scale).
    cut2_safe = jnp.where(cut2 > 0.0, cut2, jnp.ones_like(cut2))
    icut2 = pl.reciprocal(cut2_safe, approx=True)
    icut6 = icut2 * icut2 * icut2
    vshift = c12 * (icut6 * icut6) - c6 * icut6

    energy = jnp.where(mask, c12 * (inv6 * inv6) - c6 * inv6 - vshift, 0.0)

    # ---- scatter-sum over frames: vectorized one-hot sublane reduce ----
    batch = batch_ref[...]                                # (BLK_SUB, LANE) int32
    fids = jax.lax.broadcasted_iota(jnp.int32, (f_pad,) + batch.shape, 0)
    hit = batch[None, :, :] == fids                       # (f_pad, BLK_SUB, LANE)
    out_ref[...] += jnp.sum(jnp.where(hit, energy[None, :, :], 0.0), axis=1)


@functools.partial(jax.jit, static_argnames=("num_frames",))
def lj_shifted_energy(pos, mapping, atom_types, mapping_batch,
                      sigma_tbl, eps_tbl, cutoff_tbl, *, num_frames):
    """Pure-JAX glue (gathers / coefficient tables / padding) + Pallas hot path."""
    n_pairs = mapping.shape[1]
    ncores = _num_parallel_cores()

    pairs_per_block = BLK_SUB * LANE
    n_blocks = pl.cdiv(n_pairs, pairs_per_block)
    n_blocks = pl.cdiv(n_blocks, ncores) * ncores          # divisible by core axis
    nbpc = n_blocks // ncores                              # blocks per core
    p_pad = n_blocks * pairs_per_block
    pad = p_pad - n_pairs
    rows = p_pad // LANE

    f_pad = max(8, ((int(num_frames) + 7) // 8) * 8)       # frames padded to mult of 8

    # ---- glue: gather endpoints / per-pair-type coefficients ----
    it0 = atom_types[mapping[0]]
    it1 = atom_types[mapping[1]]
    sig = sigma_tbl[it0, it1].astype(jnp.float32)          # (P,)
    eps = eps_tbl[it0, it1].astype(jnp.float32)
    cut = cutoff_tbl[it0, it1].astype(jnp.float32)

    sig6 = sig ** 6
    c6 = 4.0 * eps * sig6                                  # 4*eps*sigma^6
    c12 = c6 * sig6                                        # 4*eps*sigma^12
    cut2 = cut * cut                                       # padded pairs -> 0 -> masked

    dr = (pos[mapping[0]] - pos[mapping[1]]).astype(jnp.float32)   # (P, 3)

    def pad1(a):
        return jnp.pad(a, ((0, pad),))

    # single fused f32 stream: [dx, dy, dz, c6, c12, cut2]  -> (6, rows, LANE)
    feat = jnp.stack(
        [pad1(dr[:, 0]), pad1(dr[:, 1]), pad1(dr[:, 2]),
         pad1(c6), pad1(c12), pad1(cut2)], axis=0).reshape(6, rows, LANE)
    batch = pad1(mapping_batch.astype(jnp.int32)).reshape(rows, LANE)

    feat_spec = pl.BlockSpec((6, BLK_SUB, LANE), lambda c, i: (0, c * nbpc + i, 0))
    bat_spec = pl.BlockSpec((BLK_SUB, LANE), lambda c, i: (c * nbpc + i, 0))
    out_spec = pl.BlockSpec((None, f_pad, LANE), lambda c, i: (c, 0, 0))

    out = pl.pallas_call(
        functools.partial(_lj_kernel, f_pad=f_pad),
        out_shape=jax.ShapeDtypeStruct((ncores, f_pad, LANE), jnp.float32),
        grid_spec=pltpu.PrefetchScalarGridSpec(
            num_scalar_prefetch=0,
            grid=(ncores, nbpc),
            in_specs=[feat_spec, bat_spec],
            out_specs=out_spec,
        ),
        compiler_params=pltpu.CompilerParams(
            dimension_semantics=("parallel", "arbitrary")),
    )(feat, batch)                                         # (ncores, f_pad, LANE)

    # Combine per-core partials and lane partials (cheap wrapper reduce).
    return jnp.sum(out, axis=(0, 2))[:num_frames]          # (num_frames,)


def _reference(pos, mapping, atom_types, mapping_batch,
               sigma_tbl, eps_tbl, cutoff_tbl, num_frames):
    """Pure-JAX reference matching the PyTorch forward semantics."""
    pi = pos[mapping[0]]
    pj = pos[mapping[1]]
    x = jnp.sqrt(jnp.sum((pi - pj) ** 2, axis=-1))
    s = sigma_tbl[atom_types[mapping[0]], atom_types[mapping[1]]]
    e = eps_tbl[atom_types[mapping[0]], atom_types[mapping[1]]]
    c = cutoff_tbl[atom_types[mapping[0]], atom_types[mapping[1]]]
    mask = x < c
    xs = jnp.where(mask, x, 1.0)
    cs = jnp.where(mask, c, 1.0)
    r6 = (s / xs) ** 6
    rc6 = (s / cs) ** 6
    y = jnp.where(mask, 4.0 * e * (r6 * r6 - r6) - 4.0 * e * (rc6 * rc6 - rc6),
                  0.0)
    return jax.ops.segment_sum(y, mapping_batch, num_segments=num_frames)


if __name__ == "__main__":
    key = jax.random.PRNGKey(0)

    # Small synthetic system: 2 frames, 8 atoms each, 3 atom types.
    num_frames = 2
    atoms_per_frame = 8
    n_atoms = num_frames * atoms_per_frame
    n_types = 3

    k_pos, k_typ = jax.random.split(key)
    pos = jax.random.uniform(k_pos, (n_atoms, 3), jnp.float32,
                             minval=0.0, maxval=2.0)
    atom_types = jax.random.randint(k_typ, (n_atoms,), 0, n_types)
    batch = jnp.repeat(jnp.arange(num_frames), atoms_per_frame)

    # Fully-connected intra-frame pair list (order=2 mapping) + mapping_batch.
    src, dst = [], []
    for f in range(num_frames):
        base = f * atoms_per_frame
        for a in range(atoms_per_frame):
            for b in range(a + 1, atoms_per_frame):
                src.append(base + a)
                dst.append(base + b)
    mapping = jnp.stack([jnp.array(src, jnp.int32), jnp.array(dst, jnp.int32)])
    mapping_batch = batch[mapping[0]]

    # Parameter tables (shape (n_types, n_types) each, per module __init__).
    # NOTE: the reference __init__ zero-fills these buffers; here we use
    # deterministic nonzero, symmetric values so the kernel does real work.
    i_idx = jnp.arange(n_types)
    sigma_tbl = (0.3 + 0.05 * (i_idx[:, None] + i_idx[None, :])).astype(jnp.float32)
    eps_tbl = (0.5 + 0.1 * (i_idx[:, None] * i_idx[None, :])).astype(jnp.float32)
    cutoff_tbl = (2.5 * sigma_tbl).astype(jnp.float32)

    out = lj_shifted_energy(pos, mapping, atom_types, mapping_batch,
                            sigma_tbl, eps_tbl, cutoff_tbl,
                            num_frames=num_frames)
    out = jax.block_until_ready(out)

    ref = _reference(pos, mapping, atom_types, mapping_batch,
                     sigma_tbl, eps_tbl, cutoff_tbl, num_frames)
    ref = jax.block_until_ready(ref)

    assert out.shape == (num_frames,)
    # Kernel uses the algebraically-equivalent factored form (c12/d^12 - c6/d^6),
    # so allow f32 reassociation noise.
    assert jnp.allclose(out, ref, rtol=1e-3, atol=1e-4), (out, ref)
    print("KERNEL_OK")
</pallas_src>

<mosaic_0001>
module attributes {stable_mosaic.version = 11 : i64} {
  func.func @_lj_kernel(%arg0: i32, %arg1: i32, %arg2: memref<6x512x128xf32, #tpu.memory_space<vmem>>, %arg3: memref<512x128xi32, #tpu.memory_space<vmem>>, %arg4: memref<1x8x128xf32, #tpu.memory_space<vmem>>) attributes {dimension_semantics = [#tpu.dimension_semantics<parallel>, #tpu.dimension_semantics<arbitrary>], iteration_bounds = array<i64: 1, 1>, scalar_prefetch = 0 : i64, scratch_operands = 0 : i64, tpu.core_type = #tpu.core_type<tc>, window_params = [{transform_indices = @transform_0, window_bounds = array<i64: 6, 512, 128>}, {transform_indices = @transform_1, window_bounds = array<i64: 512, 128>}, {transform_indices = @transform_2, window_bounds = array<i64: 1, 8, 128>}]} {
    %c0_i32 = arith.constant 0 : i32
    %0 = arith.cmpi eq, %arg1, %c0_i32 : i32
    %1 = arith.extui %0 : i1 to i32
    %c0_i32_0 = arith.constant 0 : i32
    %2 = arith.cmpi ne, %1, %c0_i32_0 : i32
    scf.if %2 {
      %cst_27 = arith.constant 0.000000e+00 : f32
      %62 = vector.broadcast %cst_27 : f32 to vector<8x128xf32>
      %c0_28 = arith.constant 0 : index
      %c0_29 = arith.constant 0 : index
      %c0_30 = arith.constant 0 : index
      %63 = vector.load %arg4[%c0_28, %c0_29, %c0_30] : memref<1x8x128xf32, #tpu.memory_space<vmem>>, vector<1x8x128xf32>
      %64 = vector.shape_cast %63 : vector<1x8x128xf32> to vector<8x128xf32>
      %65 = vector.shape_cast %62 : vector<8x128xf32> to vector<1x8x128xf32>
      tpu.vector_store %arg4[%c0_28, %c0_29, %c0_30], %65 {strides = array<i32>} : memref<1x8x128xf32, #tpu.memory_space<vmem>>, vector<1x8x128xf32>,
    } else {
    }
    %c0 = arith.constant 0 : index
    %c0_1 = arith.constant 0 : index
    %c0_2 = arith.constant 0 : index
    %3 = vector.load %arg2[%c0, %c0_1, %c0_2] : memref<6x512x128xf32, #tpu.memory_space<vmem>>, vector<1x512x128xf32>
    %4 = vector.shape_cast %3 : vector<1x512x128xf32> to vector<512x128xf32>
    %c1 = arith.constant 1 : index
    %c0_3 = arith.constant 0 : index
    %c0_4 = arith.constant 0 : index
    %5 = vector.load %arg2[%c1, %c0_3, %c0_4] : memref<6x512x128xf32, #tpu.memory_space<vmem>>, vector<1x512x128xf32>
    %6 = vector.shape_cast %5 : vector<1x512x128xf32> to vector<512x128xf32>
    %c2 = arith.constant 2 : index
    %c0_5 = arith.constant 0 : index
    %c0_6 = arith.constant 0 : index
    %7 = vector.load %arg2[%c2, %c0_5, %c0_6] : memref<6x512x128xf32, #tpu.memory_space<vmem>>, vector<1x512x128xf32>
    %8 = vector.shape_cast %7 : vector<1x512x128xf32> to vector<512x128xf32>
    %c3 = arith.constant 3 : index
    %c0_7 = arith.constant 0 : index
    %c0_8 = arith.constant 0 : index
    %9 = vector.load %arg2[%c3, %c0_7, %c0_8] : memref<6x512x128xf32, #tpu.memory_space<vmem>>, vector<1x512x128xf32>
    %10 = vector.shape_cast %9 : vector<1x512x128xf32> to vector<512x128xf32>
    %c4 = arith.constant 4 : index
    %c0_9 = arith.constant 0 : index
    %c0_10 = arith.constant 0 : index
    %11 = vector.load %arg2[%c4, %c0_9, %c0_10] : memref<6x512x128xf32, #tpu.memory_space<vmem>>, vector<1x512x128xf32>
    %12 = vector.shape_cast %11 : vector<1x512x128xf32> to vector<512x128xf32>
    %c5 = arith.constant 5 : index
    %c0_11 = arith.constant 0 : index
    %c0_12 = arith.constant 0 : index
    %13 = vector.load %arg2[%c5, %c0_11, %c0_12] : memref<6x512x128xf32, #tpu.memory_space<vmem>>, vector<1x512x128xf32>
    %14 = vector.shape_cast %13 : vector<1x512x128xf32> to vector<512x128xf32>
    %15 = arith.mulf %4, %4 : vector<512x128xf32>
    %16 = arith.mulf %6, %6 : vector<512x128xf32>
    %17 = arith.addf %15, %16 : vector<512x128xf32>
    %18 = arith.mulf %8, %8 : vector<512x128xf32>
    %19 = arith.addf %17, %18 : vector<512x128xf32>
    %20 = arith.cmpf olt, %19, %14 : vector<512x128xf32>
    %cst = arith.constant 1.000000e+00 : f32
    %21 = vector.broadcast %cst : f32 to vector<512x128xf32>
    %22 = arith.select %20, %19, %21 : vector<512x128xi1>, vector<512x128xf32>
    %cst_13 = arith.constant 1.000000e+00 : f32
    %23 = vector.broadcast %cst_13 : f32 to vector<512x128xf32>
    %24 = arith.divf %23, %22 : vector<512x128xf32>
    %25 = arith.mulf %24, %24 : vector<512x128xf32>
    %26 = arith.mulf %25, %24 : vector<512x128xf32>
    %cst_14 = arith.constant 0.000000e+00 : f32
    %27 = vector.broadcast %cst_14 : f32 to vector<512x128xf32>
    %28 = arith.cmpf ogt, %14, %27 : vector<512x128xf32>
    %cst_15 = arith.constant 1.000000e+00 : f32
    %29 = vector.broadcast %cst_15 : f32 to vector<512x128xf32>
    %30 = arith.select %28, %14, %29 : vector<512x128xi1>, vector<512x128xf32>
    %31 = tpu.reciprocal %30 {approx = true} : vector<512x128xf32> -> vector<512x128xf32>
    %32 = arith.mulf %31, %31 : vector<512x128xf32>
    %33 = arith.mulf %32, %31 : vector<512x128xf32>
    %34 = arith.mulf %33, %33 : vector<512x128xf32>
    %35 = arith.mulf %12, %34 : vector<512x128xf32>
    %36 = arith.mulf %10, %33 : vector<512x128xf32>
    %37 = arith.subf %35, %36 : vector<512x128xf32>
    %38 = arith.mulf %26, %26 : vector<512x128xf32>
    %39 = arith.mulf %12, %38 : vector<512x128xf32>
    %40 = arith.mulf %10, %26 : vector<512x128xf32>
    %41 = arith.subf %39, %40 : vector<512x128xf32>
    %42 = arith.subf %41, %37 : vector<512x128xf32>
    %cst_16 = arith.constant 0.000000e+00 : f32
    %43 = vector.broadcast %cst_16 : f32 to vector<512x128xf32>
    %44 = arith.select %20, %42, %43 : vector<512x128xi1>, vector<512x128xf32>
    %c0_17 = arith.constant 0 : index
    %c0_18 = arith.constant 0 : index
    %45 = vector.load %arg3[%c0_17, %c0_18] : memref<512x128xi32, #tpu.memory_space<vmem>>, vector<512x128xi32>
    %46 = tpu.iota {dimensions = array<i32: 0>} : vector<8x512x128xi32>
    %47 = vector.shape_cast %45 : vector<512x128xi32> to vector<1x512x128xi32>
    %48 = vector.broadcast %47 : vector<1x512x128xi32> to vector<8x512x128xi32>
    %49 = arith.cmpi eq, %48, %46 : vector<8x512x128xi32>
    %c0_19 = arith.constant 0 : index
    %c0_20 = arith.constant 0 : index
    %c0_21 = arith.constant 0 : index
    %50 = vector.load %arg4[%c0_19, %c0_20, %c0_21] : memref<1x8x128xf32, #tpu.memory_space<vmem>>, vector<1x8x128xf32>
    %51 = vector.shape_cast %50 : vector<1x8x128xf32> to vector<8x128xf32>
    %52 = vector.shape_cast %44 : vector<512x128xf32> to vector<1x512x128xf32>
    %cst_22 = arith.constant 0.000000e+00 : f32
    %53 = vector.shape_cast %52 : vector<1x512x128xf32> to vector<1x512x128xf32>
    %54 = vector.broadcast %53 : vector<1x512x128xf32> to vector<8x512x128xf32>
    %55 = vector.broadcast %cst_22 : f32 to vector<8x512x128xf32>
    %56 = arith.select %49, %54, %55 : vector<8x512x128xi1>, vector<8x512x128xf32>
    %cst_23 = arith.constant dense<0.000000e+00> : vector<8x128xf32>
    %57 = vector.multi_reduction <add>, %56, %cst_23 [1] : vector<8x512x128xf32> to vector<8x128xf32>
    %58 = arith.addf %51, %57 : vector<8x128xf32>
    %c0_24 = arith.constant 0 : index
    %c0_25 = arith.constant 0 : index
    %c0_26 = arith.constant 0 : index
    %59 = vector.load %arg4[%c0_24, %c0_25, %c0_26] : memref<1x8x128xf32, #tpu.memory_space<vmem>>, vector<1x8x128xf32>
    %60 = vector.shape_cast %59 : vector<1x8x128xf32> to vector<8x128xf32>
    %61 = vector.shape_cast %58 : vector<8x128xf32> to vector<1x8x128xf32>
    tpu.vector_store %arg4[%c0_24, %c0_25, %c0_26], %61 {strides = array<i32>} : memref<1x8x128xf32, #tpu.memory_space<vmem>>, vector<1x8x128xf32>,
    return
  }
  func.func @transform_0(%arg0: i32, %arg1: i32) -> (i32, i32, i32) {
    %c1_i32 = arith.constant 1 : i32
    %0 = arith.muli %arg0, %c1_i32 : i32
    %1 = arith.addi %0, %arg1 : i32
    %c0_i32 = arith.constant 0 : i32
    %c0_i32_0 = arith.constant 0 : i32
    %c0_i32_1 = arith.constant 0 : i32
    return %c0_i32, %1, %c0_i32_0 : i32, i32, i32
  }
  func.func @transform_1(%arg0: i32, %arg1: i32) -> (i32, i32) {
    %c1_i32 = arith.constant 1 : i32
    %0 = arith.muli %arg0, %c1_i32 : i32
    %1 = arith.addi %0, %arg1 : i32
    %c0_i32 = arith.constant 0 : i32
    %c0_i32_0 = arith.constant 0 : i32
    return %1, %c0_i32 : i32, i32
  }
  func.func @transform_2(%arg0: i32, %arg1: i32) -> (i32, i32, i32) {
    %c0_i32 = arith.constant 0 : i32
    %c0_i32_0 = arith.constant 0 : i32
    %c0_i32_1 = arith.constant 0 : i32
    return %arg0, %c0_i32, %c0_i32_0 : i32, i32, i32
  }
}

</mosaic_0001>

<llo_original>
// kernel: sub.1
$region0: #{sub.1}
  #allocation0 [shape = 's32[1]{0}', space=sflag, size = 0x4, scoped, tag = 'scoped memory for sub.1']
  %s0 = inlined_call_operand.vmem [shape: f32[56,3], index: 0, kind: input, shape index: {}]
  %s1 = inlined_call_operand.vmem [shape: f32[56,3], index: 1, kind: input, shape index: {}]
  %s2 = inlined_call_operand.vmem [shape: f32[56,3], index: 2, kind: output, shape index: {}]
  %v3 = vld [vmem:[%s0] sm:$0xff]
  %v4 = vld [vmem:[%s1] sm:$0xff]
  %5 = xla_tuple %v3, %v4
  %6 = xla_tuple %5
  %v7 = vsub.f32 %v3, %v4
  %8 = xla_tuple %v7
  %9 = vst [vmem:[%s2] sm:$0xff] %v7
  %s10 = scalar_lea.vmem %s0, 8
  %v11 = vld [vmem:[%s10] sm:$0xff]
  %s12 = scalar_lea.vmem %s1, 8
  %v13 = vld [vmem:[%s12] sm:$0xff]
  %14 = xla_tuple %v11, %v13
  %15 = xla_tuple %14
  %v16 = vsub.f32 %v11, %v13
  %17 = xla_tuple %v16
  %s18 = scalar_lea.vmem %s2, 8
  %19 = vst [vmem:[%s18] sm:$0xff] %v16
  %s20 = scalar_lea.vmem %s0, 16
  %v21 = vld [vmem:[%s20] sm:$0xff]
  %s22 = scalar_lea.vmem %s1, 16
  %v23 = vld [vmem:[%s22] sm:$0xff]
  %24 = xla_tuple %v21, %v23
  %25 = xla_tuple %24
  %v26 = vsub.f32 %v21, %v23
  %27 = xla_tuple %v26
  %s28 = scalar_lea.vmem %s2, 16
  %29 = vst [vmem:[%s28] sm:$0xff] %v26
  %s30 = scalar_lea.vmem %s0, 24
  %v31 = vld [vmem:[%s30] sm:$0xff]
  %s32 = scalar_lea.vmem %s1, 24
  %v33 = vld [vmem:[%s32] sm:$0xff]
  %34 = xla_tuple %v31, %v33
  %35 = xla_tuple %34
  %v36 = vsub.f32 %v31, %v33
  %37 = xla_tuple %v36
  %s38 = scalar_lea.vmem %s2, 24
  %39 = vst [vmem:[%s38] sm:$0xff] %v36
  %s40 = scalar_lea.vmem %s0, 32
  %v41 = vld [vmem:[%s40] sm:$0xff]
  %s42 = scalar_lea.vmem %s1, 32
  %v43 = vld [vmem:[%s42] sm:$0xff]
  %44 = xla_tuple %v41, %v43
  %45 = xla_tuple %44
  %v46 = vsub.f32 %v41, %v43
  %47 = xla_tuple %v46
  %s48 = scalar_lea.vmem %s2, 32
  %49 = vst [vmem:[%s48] sm:$0xff] %v46
  %s50 = scalar_lea.vmem %s0, 40
  %v51 = vld [vmem:[%s50] sm:$0xff]
  %s52 = scalar_lea.vmem %s1, 40
  %v53 = vld [vmem:[%s52] sm:$0xff]
  %54 = xla_tuple %v51, %v53
  %55 = xla_tuple %54
  %v56 = vsub.f32 %v51, %v53
  %57 = xla_tuple %v56
  %s58 = scalar_lea.vmem %s2, 40
  %59 = vst [vmem:[%s58] sm:$0xff] %v56
  %s60 = scalar_lea.vmem %s0, 48
  %v61 = vld [vmem:[%s60] sm:$0xff]
  %s62 = scalar_lea.vmem %s1, 48
  %v63 = vld [vmem:[%s62] sm:$0xff]
  %64 = xla_tuple %v61, %v63
  %65 = xla_tuple %64
  %v66 = vsub.f32 %v61, %v63
  %67 = xla_tuple %v66
  %s68 = scalar_lea.vmem %s2, 48
  %69 = vst [vmem:[%s68] sm:$0xff] %v66

// kernel: mul.15
$region0: #{mul.15}
  #allocation0 [shape = 's32[1]{0}', space=sflag, size = 0x4, scoped, tag = 'scoped memory for mul.15']
  %s0 = inlined_call_operand.vmem [shape: f32[56], index: 0, kind: input, shape index: {}, may-alias: {0,1}]
  %s1 = inlined_call_operand.vmem [shape: f32[56], index: 1, kind: input, shape index: {}, may-alias: {0,1}]
  %s2 = inlined_call_operand.vmem [shape: f32[56], index: 2, kind: output, shape index: {}]
  %v3 = vld [vmem:[%s0] sm:$0x1]
  %v4 = vld [vmem:[%s1] sm:$0x1]
  %5 = xla_tuple %v3, %v4
  %6 = xla_tuple %5
  %v7 = vmul.f32 %v3, %v4
  %8 = xla_tuple %v7
  %9 = vst [vmem:[%s2] sm:$0x1] %v7

// kernel: lj_shifted_energy.1
$region0: #{lj_shifted_energy.1}
  #allocation0 [shape = 'u32[]', space=smem, size = 0x4, offset = 0x4, fixed_abs, tag = 'smem constant byte address 0x4 - core index']
  #allocation1 [shape = 'u32[144,128]{1,0:T(1,128)}', space=vmem, size = 0x12000, scoped, tag = 'internal scratch']
  %s0 = inlined_call_operand.vmem [shape: f32[6,512,128], index: 0, kind: input, shape index: {}]
  %s1 = inlined_call_operand.vmem [shape: s32[512,128], index: 1, kind: input, shape index: {}]
  %s2 = inlined_call_operand.vmem [shape: f32[1,8,128], index: 2, kind: output, shape index: {}]
  %s3 = sld [smem:[#allocation0]]
  $region22: #{lj_shifted_energy.1} parent=0
    _
  %s5 = ssub.s32 1, %s3
  %s6 = scalar_select 0, %s5, %s3
  // Predicated region
  $region2: #{lj_shifted_energy.1} parent=0 // pred_check
    _
  $region3: #{lj_shifted_energy.1} parent=0 // pred_check_branch
    %8 = sbr.rel (0) target = $region5
  $region4: #{lj_shifted_energy.1} parent=0 // pred_region
    %s9 = sadd.s32 0, 0
    %s10 = smul.u32 64, %s9
    %p11 = scmp.lt.s32.totalorder %s10, 63
    %s12 = scalar_select %p11, %s10, 63
    %s13 = smul.addr %s12, 8
    %s14 = scalar_lea.vmem %s0, %s13
    %s15 = sadd.s32 0, 0
    %s16 = smul.u32 64, %s15
  $region5: #{lj_shifted_energy.1} parent=0 // pred_fallthru
    _
  // Predicated region
  $region6: #{lj_shifted_energy.1} parent=0 // pred_check
    _
  $region7: #{lj_shifted_energy.1} parent=0 // pred_check_branch
    %18 = sbr.rel (0) target = $region9
  $region8: #{lj_shifted_energy.1} parent=0 // pred_region
    %s19 = sadd.s32 0, 0
    %s20 = smul.u32 64, %s19
    %p21 = scmp.lt.s32.totalorder %s20, 63
    %s22 = scalar_select %p21, %s20, 63
    %s23 = smul.addr %s22, 8
    %s24 = scalar_lea.vmem %s1, %s23
    %s25 = sadd.s32 0, 0
    %s26 = smul.u32 64, %s25
  $region9: #{lj_shifted_energy.1} parent=0 // pred_fallthru
    _
  %s27 = sadd.s32 0, 0
  %s28 = smul.u32 64, %s27
  %p29 = scmp.lt.s32.totalorder %s28, 63
  %s30 = scalar_select %p29, %s28, 63
  %s31 = smul.addr %s30, 8
  %s32 = scalar_lea.vmem %s0, %s31
  %s33 = sadd.s32 0, 0
  %s34 = smul.u32 64, %s33
  %p35 = scmp.lt.s32.totalorder %s34, 63
  %s36 = scalar_select %p35, %s34, 63
  %s37 = smul.addr %s36, 8
  %s38 = scalar_lea.vmem %s1, %s37
  %s39 = sadd.s32 0, 0
  %s40 = smul.u32 64, %s39
  %p41 = scmp.lt.s32.totalorder %s40, 63
  %s42 = scalar_select %p41, %s40, 63
  %s43 = smul.addr %s42, 8
  %s44 = scalar_lea.vmem %s0, %s43
  %s45 = sadd.s32 0, 0
  %s46 = smul.u32 64, %s45
  %s47 = sadd.s32 0, 0
  %s48 = smul.u32 64, %s47
  %p49 = scmp.lt.s32.totalorder %s48, 63
  %s50 = scalar_select %p49, %s48, 63
  %s51 = smul.addr %s50, 8
  %s52 = scalar_lea.vmem %s1, %s51
  %s53 = sadd.s32 0, 0
  %s54 = smul.u32 64, %s53
  %p55 = scmp.eq.s32.totalorder 0, 0
  // Predicated region
  $region10: #{lj_shifted_energy.1} parent=0 // pred_check
    %p56 = pneg %p55
  $region11: #{lj_shifted_energy.1} parent=0 // pred_check_branch
    %58 = sbr.rel (%p56) target = $region13
  $region12: #{lj_shifted_energy.1} parent=0 // pred_region
    %59 = vst [vmem:[%s2] sm:$0xff] 0.0
  $region13: #{lj_shifted_energy.1} parent=0 // pred_fallthru
    _
  %v60 = vld [vmem:[%s44] sm:$0xff]
  %v61 = vld [vmem:[%s44 + $0x8] sm:$0xff]
  %v62 = vld [vmem:[%s44 + $0x10] sm:$0xff]
  %v63 = vld [vmem:[%s44 + $0x18] sm:$0xff]
  %v64 = vld [vmem:[%s44 + $0x20] sm:$0xff]
  %v65 = vld [vmem:[%s44 + $0x28] sm:$0xff]
  %v66 = vld [vmem:[%s44 + $0x30] sm:$0xff]
  %v67 = vld [vmem:[%s44 + $0x38] sm:$0xff]
  %v68 = vld [vmem:[%s44 + $0x40] sm:$0xff]
  %v69 = vld [vmem:[%s44 + $0x48] sm:$0xff]
  %v70 = vld [vmem:[%s44 + $0x50] sm:$0xff]
  %v71 = vld [vmem:[%s44 + $0x58] sm:$0xff]
  %v72 = vld [vmem:[%s44 + $0x60] sm:$0xff]
  %v73 = vld [vmem:[%s44 + $0x68] sm:$0xff]
  %v74 = vld [vmem:[%s44 + $0x70] sm:$0xff]
  %v75 = vld [vmem:[%s44 + $0x78] sm:$0xff]
  %v76 = vld [vmem:[%s44 + $0x80] sm:$0xff]
  %v77 = vld [vmem:[%s44 + $0x88] sm:$0xff]
  %v78 = vld [vmem:[%s44 + $0x90] sm:$0xff]
  %v79 = vld [vmem:[%s44 + $0x98] sm:$0xff]
  %v80 = vld [vmem:[%s44 + $0xa0] sm:$0xff]
  %v81 = vld [vmem:[%s44 + $0xa8] sm:$0xff]
  %v82 = vld [vmem:[%s44 + $0xb0] sm:$0xff]
  %v83 = vld [vmem:[%s44 + $0xb8] sm:$0xff]
  %v84 = vld [vmem:[%s44 + $0xc0] sm:$0xff]
  %v85 = vld [vmem:[%s44 + $0xc8] sm:$0xff]
  %v86 = vld [vmem:[%s44 + $0xd0] sm:$0xff]
  %v87 = vld [vmem:[%s44 + $0xd8] sm:$0xff]
  %v88 = vld [vmem:[%s44 + $0xe0] sm:$0xff]
  %v89 = vld [vmem:[%s44 + $0xe8] sm:$0xff]
  %v90 = vld [vmem:[%s44 + $0xf0] sm:$0xff]
  %v91 = vld [vmem:[%s44 + $0xf8] sm:$0xff]
  %v92 = vld [vmem:[%s44 + $0x100] sm:$0xff]
  %v93 = vld [vmem:[%s44 + $0x108] sm:$0xff]
  %v94 = vld [vmem:[%s44 + $0x110] sm:$0xff]
  %v95 = vld [vmem:[%s44 + $0x118] sm:$0xff]
  %v96 = vld [vmem:[%s44 + $0x120] sm:$0xff]
  %v97 = vld [vmem:[%s44 + $0x128] sm:$0xff]
  %v98 = vld [vmem:[%s44 + $0x130] sm:$0xff]
  %v99 = vld [vmem:[%s44 + $0x138] sm:$0xff]
  %v100 = vld [vmem:[%s44 + $0x140] sm:$0xff]
  %v101 = vld [vmem:[%s44 + $0x148] sm:$0xff]
  %v102 = vld [vmem:[%s44 + $0x150] sm:$0xff]
  %v103 = vld [vmem:[%s44 + $0x158] sm:$0xff]
  %v104 = vld [vmem:[%s44 + $0x160] sm:$0xff]
  %v105 = vld [vmem:[%s44 + $0x168] sm:$0xff]
  %v106 = vld [vmem:[%s44 + $0x170] sm:$0xff]
  %v107 = vld [vmem:[%s44 + $0x178] sm:$0xff]
  %v108 = vld [vmem:[%s44 + $0x180] sm:$0xff]
  %v109 = vld [vmem:[%s44 + $0x188] sm:$0xff]
  %v110 = vld [vmem:[%s44 + $0x190] sm:$0xff]
  %v111 = vld [vmem:[%s44 + $0x198] sm:$0xff]
  %v112 = vld [vmem:[%s44 + $0x1a0] sm:$0xff]
  %v113 = vld [vmem:[%s44 + $0x1a8] sm:$0xff]
  %v114 = vld [vmem:[%s44 + $0x1b0] sm:$0xff]
  %v115 = vld [vmem:[%s44 + $0x1b8] sm:$0xff]
  %v116 = vld [vmem:[%s44 + $0x1c0] sm:$0xff]
  %v117 = vld [vmem:[%s44 + $0x1c8] sm:$0xff]
  %v118 = vld [vmem:[%s44 + $0x1d0] sm:$0xff]
  %v119 = vld [vmem:[%s44 + $0x1d8] sm:$0xff]
  %v120 = vld [vmem:[%s44 + $0x1e0] sm:$0xff]
  %v121 = vld [vmem:[%s44 + $0x1e8] sm:$0xff]
  %v122 = vld [vmem:[%s44 + $0x1f0] sm:$0xff]
  %v123 = vld [vmem:[%s44 + $0x1f8] sm:$0xff]
  %s124 = scalar_lea.vmem %s44, 512
  %v125 = vld [vmem:[%s124] sm:$0xff]
  %v126 = vld [vmem:[%s124 + $0x8] sm:$0xff]
  %v127 = vld [vmem:[%s124 + $0x10] sm:$0xff]
  %v128 = vld [vmem:[%s124 + $0x18] sm:$0xff]
  %v129 = vld [vmem:[%s124 + $0x20] sm:$0xff]
  %v130 = vld [vmem:[%s124 + $0x28] sm:$0xff]
  %v131 = vld [vmem:[%s124 + $0x30] sm:$0xff]
  %v132 = vld [vmem:[%s124 + $0x38] sm:$0xff]
  %v133 = vld [vmem:[%s124 + $0x40] sm:$0xff]
  %v134 = vld [vmem:[%s124 + $0x48] sm:$0xff]
  %v135 = vld [vmem:[%s124 + $0x50] sm:$0xff]
  %v136 = vld [vmem:[%s124 + $0x58] sm:$0xff]
  %v137 = vld [vmem:[%s124 + $0x60] sm:$0xff]
  %v138 = vld [vmem:[%s124 + $0x68] sm:$0xff]
  %v139 = vld [vmem:[%s124 + $0x70] sm:$0xff]
  %v140 = vld [vmem:[%s124 + $0x78] sm:$0xff]
  %v141 = vld [vmem:[%s124 + $0x80] sm:$0xff]
  %v142 = vld [vmem:[%s124 + $0x88] sm:$0xff]
  %v143 = vld [vmem:[%s124 + $0x90] sm:$0xff]
  %v144 = vld [vmem:[%s124 + $0x98] sm:$0xff]
  %v145 = vld [vmem:[%s124 + $0xa0] sm:$0xff]
  %v146 = vld [vmem:[%s124 + $0xa8] sm:$0xff]
  %v147 = vld [vmem:[%s124 + $0xb0] sm:$0xff]
  %v148 = vld [vmem:[%s124 + $0xb8] sm:$0xff]
  %v149 = vld [vmem:[%s124 + $0xc0] sm:$0xff]
  %v150 = vld [vmem:[%s124 + $0xc8] sm:$0xff]
  %v151 = vld [vmem:[%s124 + $0xd0] sm:$0xff]
  %v152 = vld [vmem:[%s124 + $0xd8] sm:$0xff]
  %v153 = vld [vmem:[%s124 + $0xe0] sm:$0xff]
  %v154 = vld [vmem:[%s124 + $0xe8] sm:$0xff]
  %v155 = vld [vmem:[%s124 + $0xf0] sm:$0xff]
  %v156 = vld [vmem:[%s124 + $0xf8] sm:$0xff]
  %v157 = vld [vmem:[%s124 + $0x100] sm:$0xff]
  %v158 = vld [vmem:[%s124 + $0x108] sm:$0xff]
  %v159 = vld [vmem:[%s124 + $0x110] sm:$0xff]
  %v160 = vld [vmem:[%s124 + $0x118] sm:$0xff]
  %v161 = vld [vmem:[%s124 + $0x120] sm:$0xff]
  %v162 = vld [vmem:[%s124 + $0x128] sm:$0xff]
  %v163 = vld [vmem:[%s124 + $0x130] sm:$0xff]
  %v164 = vld [vmem:[%s124 + $0x138] sm:$0xff]
  %v165 = vld [vmem:[%s124 + $0x140] sm:$0xff]
  %v166 = vld [vmem:[%s124 + $0x148] sm:$0xff]
  %v167 = vld [vmem:[%s124 + $0x150] sm:$0xff]
  %v168 = vld [vmem:[%s124 + $0x158] sm:$0xff]
  %v169 = vld [vmem:[%s124 + $0x160] sm:$0xff]
  %v170 = vld [vmem:[%s124 + $0x168] sm:$0xff]
  %v171 = vld [vmem:[%s124 + $0x170] sm:$0xff]
  %v172 = vld [vmem:[%s124 + $0x178] sm:$0xff]
  %v173 = vld [vmem:[%s124 + $0x180] sm:$0xff]
  %v174 = vld [vmem:[%s124 + $0x188] sm:$0xff]
  %v175 = vld [vmem:[%s124 + $0x190] sm:$0xff]
  %v176 = vld [vmem:[%s124 + $0x198] sm:$0xff]
  %v177 = vld [vmem:[%s124 + $0x1a0] sm:$0xff]
  %v178 = vld [vmem:[%s124 + $0x1a8] sm:$0xff]
  %v179 = vld [vmem:[%s124 + $0x1b0] sm:$0xff]
  %v180 = vld [vmem:[%s124 + $0x1b8] sm:$0xff]
  %v181 = vld [vmem:[%s124 + $0x1c0] sm:$0xff]
  %v182 = vld [vmem:[%s124 + $0x1c8] sm:$0xff]
  %v183 = vld [vmem:[%s124 + $0x1d0] sm:$0xff]
  %v184 = vld [vmem:[%s124 + $0x1d8] sm:$0xff]
  %v185 = vld [vmem:[%s124 + $0x1e0] sm:$0xff]
  %v186 = vld [vmem:[%s124 + $0x1e8] sm:$0xff]
  %v187 = vld [vmem:[%s124 + $0x1f0] sm:$0xff]
  %v188 = vld [vmem:[%s124 + $0x1f8] sm:$0xff]
  %s189 = scalar_lea.vmem %s44, 1024
  %v190 = vld [vmem:[%s189] sm:$0xff]
  %v191 = vld [vmem:[%s189 + $0x8] sm:$0xff]
  %v192 = vld [vmem:[%s189 + $0x10] sm:$0xff]
  %v193 = vld [vmem:[%s189 + $0x18] sm:$0xff]
  %v194 = vld [vmem:[%s189 + $0x20] sm:$0xff]
  %v195 = vld [vmem:[%s189 + $0x28] sm:$0xff]
  %v196 = vld [vmem:[%s189 + $0x30] sm:$0xff]
  %v197 = vld [vmem:[%s189 + $0x38] sm:$0xff]
  %v198 = vld [vmem:[%s189 + $0x40] sm:$0xff]
  %v199 = vld [vmem:[%s189 + $0x48] sm:$0xff]
  %v200 = vld [vmem:[%s189 + $0x50] sm:$0xff]
  %v201 = vld [vmem:[%s189 + $0x58] sm:$0xff]
  %v202 = vld [vmem:[%s189 + $0x60] sm:$0xff]
  %v203 = vld [vmem:[%s189 + $0x68] sm:$0xff]
  %v204 = vld [vmem:[%s189 + $0x70] sm:$0xff]
  %v205 = vld [vmem:[%s189 + $0x78] sm:$0xff]
  %v206 = vld [vmem:[%s189 + $0x80] sm:$0xff]
  %v207 = vld [vmem:[%s189 + $0x88] sm:$0xff]
  %v208 = vld [vmem:[%s189 + $0x90] sm:$0xff]
  %v209 = vld [vmem:[%s189 + $0x98] sm:$0xff]
  %v210 = vld [vmem:[%s189 + $0xa0] sm:$0xff]
  %v211 = vld [vmem:[%s189 + $0xa8] sm:$0xff]
  %v212 = vld [vmem:[%s189 + $0xb0] sm:$0xff]
  %v213 = vld [vmem:[%s189 + $0xb8] sm:$0xff]
  %v214 = vld [vmem:[%s189 + $0xc0] sm:$0xff]
  %v215 = vld [vmem:[%s189 + $0xc8] sm:$0xff]
  %v216 = vld [vmem:[%s189 + $0xd0] sm:$0xff]
  %v217 = vld [vmem:[%s189 + $0xd8] sm:$0xff]
  %v218 = vld [vmem:[%s189 + $0xe0] sm:$0xff]
  %v219 = vld [vmem:[%s189 + $0xe8] sm:$0xff]
  %v220 = vld [vmem:[%s189 + $0xf0] sm:$0xff]
  %v221 = vld [vmem:[%s189 + $0xf8] sm:$0xff]
  %v222 = vld [vmem:[%s189 + $0x100] sm:$0xff]
  %v223 = vld [vmem:[%s189 + $0x108] sm:$0xff]
  %v224 = vld [vmem:[%s189 + $0x110] sm:$0xff]
  %v225 = vld [vmem:[%s189 + $0x118] sm:$0xff]
  %v226 = vld [vmem:[%s189 + $0x120] sm:$0xff]
  %v227 = vld [vmem:[%s189 + $0x128] sm:$0xff]
  %v228 = vld [vmem:[%s189 + $0x130] sm:$0xff]
  %v229 = vld [vmem:[%s189 + $0x138] sm:$0xff]
  %v230 = vld [vmem:[%s189 + $0x140] sm:$0xff]
  %v231 = vld [vmem:[%s189 + $0x148] sm:$0xff]
  %v232 = vld [vmem:[%s189 + $0x150] sm:$0xff]
  %v233 = vld [vmem:[%s189 + $0x158] sm:$0xff]
  %v234 = vld [vmem:[%s189 + $0x160] sm:$0xff]
  %v235 = vld [vmem:[%s189 + $0x168] sm:$0xff]
  %v236 = vld [vmem:[%s189 + $0x170] sm:$0xff]
  %v237 = vld [vmem:[%s189 + $0x178] sm:$0xff]
  %v238 = vld [vmem:[%s189 + $0x180] sm:$0xff]
  %v239 = vld [vmem:[%s189 + $0x188] sm:$0xff]
  %v240 = vld [vmem:[%s189 + $0x190] sm:$0xff]
  %v241 = vld [vmem:[%s189 + $0x198] sm:$0xff]
  %v242 = vld [vmem:[%s189 + $0x1a0] sm:$0xff]
  %v243 = vld [vmem:[%s189 + $0x1a8] sm:$0xff]
  %v244 = vld [vmem:[%s189 + $0x1b0] sm:$0xff]
  %v245 = vld [vmem:[%s189 + $0x1b8] sm:$0xff]
  %v246 = vld [vmem:[%s189 + $0x1c0] sm:$0xff]
  %v247 = vld [vmem:[%s189 + $0x1c8] sm:$0xff]
  %v248 = vld [vmem:[%s189 + $0x1d0] sm:$0xff]
  %v249 = vld [vmem:[%s189 + $0x1d8] sm:$0xff]
  %v250 = vld [vmem:[%s189 + $0x1e0] sm:$0xff]
  %v251 = vld [vmem:[%s189 + $0x1e8] sm:$0xff]
  %v252 = vld [vmem:[%s189 + $0x1f0] sm:$0xff]
  %v253 = vld [vmem:[%s189 + $0x1f8] sm:$0xff]
  %s254 = scalar_lea.vmem %s44, 1536
  %v255 = vld [vmem:[%s254] sm:$0xff]
  %v256 = vld [vmem:[%s254 + $0x8] sm:$0xff]
  %v257 = vld [vmem:[%s254 + $0x10] sm:$0xff]
  %v258 = vld [vmem:[%s254 + $0x18] sm:$0xff]
  %v259 = vld [vmem:[%s254 + $0x20] sm:$0xff]
  %v260 = vld [vmem:[%s254 + $0x28] sm:$0xff]
  %v261 = vld [vmem:[%s254 + $0x30] sm:$0xff]
  %v262 = vld [vmem:[%s254 + $0x38] sm:$0xff]
  %v263 = vld [vmem:[%s254 + $0x40] sm:$0xff]
  %v264 = vld [vmem:[%s254 + $0x48] sm:$0xff]
  %v265 = vld [vmem:[%s254 + $0x50] sm:$0xff]
  %v266 = vld [vmem:[%s254 + $0x58] sm:$0xff]
  %v267 = vld [vmem:[%s254 + $0x60] sm:$0xff]
  %v268 = vld [vmem:[%s254 + $0x68] sm:$0xff]
  %v269 = vld [vmem:[%s254 + $0x70] sm:$0xff]
  %v270 = vld [vmem:[%s254 + $0x78] sm:$0xff]
  %v271 = vld [vmem:[%s254 + $0x80] sm:$0xff]
  %v272 = vld [vmem:[%s254 + $0x88] sm:$0xff]
  %v273 = vld [vmem:[%s254 + $0x90] sm:$0xff]
  %v274 = vld [vmem:[%s254 + $0x98] sm:$0xff]
  %v275 = vld [vmem:[%s254 + $0xa0] sm:$0xff]
  %v276 = vld [vmem:[%s254 + $0xa8] sm:$0xff]
  %v277 = vld [vmem:[%s254 + $0xb0] sm:$0xff]
  %v278 = vld [vmem:[%s254 + $0xb8] sm:$0xff]
  %v279 = vld [vmem:[%s254 + $0xc0] sm:$0xff]
  %v280 = vld [vmem:[%s254 + $0xc8] sm:$0xff]
  %v281 = vld [vmem:[%s254 + $0xd0] sm:$0xff]
  %v282 = vld [vmem:[%s254 + $0xd8] sm:$0xff]
  %v283 = vld [vmem:[%s254 + $0xe0] sm:$0xff]
  %v284 = vld [vmem:[%s254 + $0xe8] sm:$0xff]
  %v285 = vld [vmem:[%s254 + $0xf0] sm:$0xff]
  %v286 = vld [vmem:[%s254 + $0xf8] sm:$0xff]
  %v287 = vld [vmem:[%s254 + $0x100] sm:$0xff]
  %v288 = vld [vmem:[%s254 + $0x108] sm:$0xff]
  %v289 = vld [vmem:[%s254 + $0x110] sm:$0xff]
  %v290 = vld [vmem:[%s254 + $0x118] sm:$0xff]
  %v291 = vld [vmem:[%s254 + $0x120] sm:$0xff]
  %v292 = vld [vmem:[%s254 + $0x128] sm:$0xff]
  %v293 = vld [vmem:[%s254 + $0x130] sm:$0xff]
  %v294 = vld [vmem:[%s254 + $0x138] sm:$0xff]
  %v295 = vld [vmem:[%s254 + $0x140] sm:$0xff]
  %v296 = vld [vmem:[%s254 + $0x148] sm:$0xff]
  %v297 = vld [vmem:[%s254 + $0x150] sm:$0xff]
  %v298 = vld [vmem:[%s254 + $0x158] sm:$0xff]
  %v299 = vld [vmem:[%s254 + $0x160] sm:$0xff]
  %v300 = vld [vmem:[%s254 + $0x168] sm:$0xff]
  %v301 = vld [vmem:[%s254 + $0x170] sm:$0xff]
  %v302 = vld [vmem:[%s254 + $0x178] sm:$0xff]
  %v303 = vld [vmem:[%s254 + $0x180] sm:$0xff]
  %v304 = vld [vmem:[%s254 + $0x188] sm:$0xff]
  %v305 = vld [vmem:[%s254 + $0x190] sm:$0xff]
  %v306 = vld [vmem:[%s254 + $0x198] sm:$0xff]
  %v307 = vld [vmem:[%s254 + $0x1a0] sm:$0xff]
  %v308 = vld [vmem:[%s254 + $0x1a8] sm:$0xff]
  %v309 = vld [vmem:[%s254 + $0x1b0] sm:$0xff]
  %v310 = vld [vmem:[%s254 + $0x1b8] sm:$0xff]
  %v311 = vld [vmem:[%s254 + $0x1c0] sm:$0xff]
  %v312 = vld [vmem:[%s254 + $0x1c8] sm:$0xff]
  %v313 = vld [vmem:[%s254 + $0x1d0] sm:$0xff]
  %v314 = vld [vmem:[%s254 + $0x1d8] sm:$0xff]
  %v315 = vld [vmem:[%s254 + $0x1e0] sm:$0xff]
  %v316 = vld [vmem:[%s254 + $0x1e8] sm:$0xff]
  %v317 = vld [vmem:[%s254 + $0x1f0] sm:$0xff]
  %v318 = vld [vmem:[%s254 + $0x1f8] sm:$0xff]
  %s319 = scalar_lea.vmem %s44, 2048
  %v320 = vld [vmem:[%s319] sm:$0xff]
  %v321 = vld [vmem:[%s319 + $0x8] sm:$0xff]
  %v322 = vld [vmem:[%s319 + $0x10] sm:$0xff]
  %v323 = vld [vmem:[%s319 + $0x18] sm:$0xff]
  %v324 = vld [vmem:[%s319 + $0x20] sm:$0xff]
  %v325 = vld [vmem:[%s319 + $0x28] sm:$0xff]
  %v326 = vld [vmem:[%s319 + $0x30] sm:$0xff]
  %v327 = vld [vmem:[%s319 + $0x38] sm:$0xff]
  %v328 = vld [vmem:[%s319 + $0x40] sm:$0xff]
  %v329 = vld [vmem:[%s319 + $0x48] sm:$0xff]
  %v330 = vld [vmem:[%s319 + $0x50] sm:$0xff]
  %v331 = vld [vmem:[%s319 + $0x58] sm:$0xff]
  %v332 = vld [vmem:[%s319 + $0x60] sm:$0xff]
  %v333 = vld [vmem:[%s319 + $0x68] sm:$0xff]
  %v334 = vld [vmem:[%s319 + $0x70] sm:$0xff]
  %v335 = vld [vmem:[%s319 + $0x78] sm:$0xff]
  %v336 = vld [vmem:[%s319 + $0x80] sm:$0xff]
  %v337 = vld [vmem:[%s319 + $0x88] sm:$0xff]
  %v338 = vld [vmem:[%s319 + $0x90] sm:$0xff]
  %v339 = vld [vmem:[%s319 + $0x98] sm:$0xff]
  %v340 = vld [vmem:[%s319 + $0xa0] sm:$0xff]
  %v341 = vld [vmem:[%s319 + $0xa8] sm:$0xff]
  %v342 = vld [vmem:[%s319 + $0xb0] sm:$0xff]
  %v343 = vld [vmem:[%s319 + $0xb8] sm:$0xff]
  %v344 = vld [vmem:[%s319 + $0xc0] sm:$0xff]
  %v345 = vld [vmem:[%s319 + $0xc8] sm:$0xff]
  %v346 = vld [vmem:[%s319 + $0xd0] sm:$0xff]
  %v347 = vld [vmem:[%s319 + $0xd8] sm:$0xff]
  %v348 = vld [vmem:[%s319 + $0xe0] sm:$0xff]
  %v349 = vld [vmem:[%s319 + $0xe8] sm:$0xff]
  %v350 = vld [vmem:[%s319 + $0xf0] sm:$0xff]
  %v351 = vld [vmem:[%s319 + $0xf8] sm:$0xff]
  %v352 = vld [vmem:[%s319 + $0x100] sm:$0xff]
  %v353 = vld [vmem:[%s319 + $0x108] sm:$0xff]
  %v354 = vld [vmem:[%s319 + $0x110] sm:$0xff]
  %v355 = vld [vmem:[%s319 + $0x118] sm:$0xff]
  %v356 = vld [vmem:[%s319 + $0x120] sm:$0xff]
  %v357 = vld [vmem:[%s319 + $0x128] sm:$0xff]
  %v358 = vld [vmem:[%s319 + $0x130] sm:$0xff]
  %v359 = vld [vmem:[%s319 + $0x138] sm:$0xff]
  %v360 = vld [vmem:[%s319 + $0x140] sm:$0xff]
  %v361 = vld [vmem:[%s319 + $0x148] sm:$0xff]
  %v362 = vld [vmem:[%s319 + $0x150] sm:$0xff]
  %v363 = vld [vmem:[%s319 + $0x158] sm:$0xff]
  %v364 = vld [vmem:[%s319 + $0x160] sm:$0xff]
  %v365 = vld [vmem:[%s319 + $0x168] sm:$0xff]
  %v366 = vld [vmem:[%s319 + $0x170] sm:$0xff]
  %v367 = vld [vmem:[%s319 + $0x178] sm:$0xff]
  %v368 = vld [vmem:[%s319 + $0x180] sm:$0xff]
  %v369 = vld [vmem:[%s319 + $0x188] sm:$0xff]
  %v370 = vld [vmem:[%s319 + $0x190] sm:$0xff]
  %v371 = vld [vmem:[%s319 + $0x198] sm:$0xff]
  %v372 = vld [vmem:[%s319 + $0x1a0] sm:$0xff]
  %v373 = vld [vmem:[%s319 + $0x1a8] sm:$0xff]
  %v374 = vld [vmem:[%s319 + $0x1b0] sm:$0xff]
  %v375 = vld [vmem:[%s319 + $0x1b8] sm:$0xff]
  %v376 = vld [vmem:[%s319 + $0x1c0] sm:$0xff]
  %v377 = vld [vmem:[%s319 + $0x1c8] sm:$0xff]
  %v378 = vld [vmem:[%s319 + $0x1d0] sm:$0xff]
  %v379 = vld [vmem:[%s319 + $0x1d8] sm:$0xff]
  %v380 = vld [vmem:[%s319 + $0x1e0] sm:$0xff]
  %v381 = vld [vmem:[%s319 + $0x1e8] sm:$0xff]
  %v382 = vld [vmem:[%s319 + $0x1f0] sm:$0xff]
  %v383 = vld [vmem:[%s319 + $0x1f8] sm:$0xff]
  %s384 = scalar_lea.vmem %s44, 2560
  %v385 = vld [vmem:[%s384] sm:$0xff]
  %v386 = vld [vmem:[%s384 + $0x8] sm:$0xff]
  %v387 = vld [vmem:[%s384 + $0x10] sm:$0xff]
  %v388 = vld [vmem:[%s384 + $0x18] sm:$0xff]
  %v389 = vld [vmem:[%s384 + $0x20] sm:$0xff]
  %v390 = vld [vmem:[%s384 + $0x28] sm:$0xff]
  %v391 = vld [vmem:[%s384 + $0x30] sm:$0xff]
  %v392 = vld [vmem:[%s384 + $0x38] sm:$0xff]
  %v393 = vld [vmem:[%s384 + $0x40] sm:$0xff]
  %v394 = vld [vmem:[%s384 + $0x48] sm:$0xff]
  %v395 = vld [vmem:[%s384 + $0x50] sm:$0xff]
  %v396 = vld [vmem:[%s384 + $0x58] sm:$0xff]
  %v397 = vld [vmem:[%s384 + $0x60] sm:$0xff]
  %v398 = vld [vmem:[%s384 + $0x68] sm:$0xff]
  %v399 = vld [vmem:[%s384 + $0x70] sm:$0xff]
  %v400 = vld [vmem:[%s384 + $0x78] sm:$0xff]
  %v401 = vld [vmem:[%s384 + $0x80] sm:$0xff]
  %v402 = vld [vmem:[%s384 + $0x88] sm:$0xff]
  %v403 = vld [vmem:[%s384 + $0x90] sm:$0xff]
  %v404 = vld [vmem:[%s384 + $0x98] sm:$0xff]
  %v405 = vld [vmem:[%s384 + $0xa0] sm:$0xff]
  %v406 = vld [vmem:[%s384 + $0xa8] sm:$0xff]
  %v407 = vld [vmem:[%s384 + $0xb0] sm:$0xff]
  %v408 = vld [vmem:[%s384 + $0xb8] sm:$0xff]
  %v409 = vld [vmem:[%s384 + $0xc0] sm:$0xff]
  %v410 = vld [vmem:[%s384 + $0xc8] sm:$0xff]
  %v411 = vld [vmem:[%s384 + $0xd0] sm:$0xff]
  %v412 = vld [vmem:[%s384 + $0xd8] sm:$0xff]
  %v413 = vld [vmem:[%s384 + $0xe0] sm:$0xff]
  %v414 = vld [vmem:[%s384 + $0xe8] sm:$0xff]
  %v415 = vld [vmem:[%s384 + $0xf0] sm:$0xff]
  %v416 = vld [vmem:[%s384 + $0xf8] sm:$0xff]
  %v417 = vld [vmem:[%s384 + $0x100] sm:$0xff]
  %v418 = vld [vmem:[%s384 + $0x108] sm:$0xff]
  %v419 = vld [vmem:[%s384 + $0x110] sm:$0xff]
  %v420 = vld [vmem:[%s384 + $0x118] sm:$0xff]
  %v421 = vld [vmem:[%s384 + $0x120] sm:$0xff]
  %v422 = vld [vmem:[%s384 + $0x128] sm:$0xff]
  %v423 = vld [vmem:[%s384 + $0x130] sm:$0xff]
  %v424 = vld [vmem:[%s384 + $0x138] sm:$0xff]
  %v425 = vld [vmem:[%s384 + $0x140] sm:$0xff]
  %v426 = vld [vmem:[%s384 + $0x148] sm:$0xff]
  %v427 = vld [vmem:[%s384 + $0x150] sm:$0xff]
  %v428 = vld [vmem:[%s384 + $0x158] sm:$0xff]
  %v429 = vld [vmem:[%s384 + $0x160] sm:$0xff]
  %v430 = vld [vmem:[%s384 + $0x168] sm:$0xff]
  %v431 = vld [vmem:[%s384 + $0x170] sm:$0xff]
  %v432 = vld [vmem:[%s384 + $0x178] sm:$0xff]
  %v433 = vld [vmem:[%s384 + $0x180] sm:$0xff]
  %v434 = vld [vmem:[%s384 + $0x188] sm:$0xff]
  %v435 = vld [vmem:[%s384 + $0x190] sm:$0xff]
  %v436 = vld [vmem:[%s384 + $0x198] sm:$0xff]
  %v437 = vld [vmem:[%s384 + $0x1a0] sm:$0xff]
  %v438 = vld [vmem:[%s384 + $0x1a8] sm:$0xff]
  %v439 = vld [vmem:[%s384 + $0x1b0] sm:$0xff]
  %v440 = vld [vmem:[%s384 + $0x1b8] sm:$0xff]
  %v441 = vld [vmem:[%s384 + $0x1c0] sm:$0xff]
  %v442 = vld [vmem:[%s384 + $0x1c8] sm:$0xff]
  %v443 = vld [vmem:[%s384 + $0x1d0] sm:$0xff]
  %v444 = vld [vmem:[%s384 + $0x1d8] sm:$0xff]
  %v445 = vld [vmem:[%s384 + $0x1e0] sm:$0xff]
  %v446 = vld [vmem:[%s384 + $0x1e8] sm:$0xff]
  %v447 = vld [vmem:[%s384 + $0x1f0] sm:$0xff]
  %v448 = vld [vmem:[%s384 + $0x1f8] sm:$0xff]
  %v449 = vmul.f32 %v60, %v60
  %v450 = vmul.f32 %v61, %v61
  %v451 = vmul.f32 %v62, %v62
  %v452 = vmul.f32 %v63, %v63
  %v453 = vmul.f32 %v64, %v64
  %v454 = vmul.f32 %v65, %v65
  %v455 = vmul.f32 %v66, %v66
  %v456 = vmul.f32 %v67, %v67
  %v457 = vmul.f32 %v68, %v68
  %v458 = vmul.f32 %v69, %v69
  %v459 = vmul.f32 %v70, %v70
  %v460 = vmul.f32 %v71, %v71
  %v461 = vmul.f32 %v72, %v72
  %v462 = vmul.f32 %v73, %v73
  %v463 = vmul.f32 %v74, %v74
  %v464 = vmul.f32 %v75, %v75
  %v465 = vmul.f32 %v76, %v76
  %v466 = vmul.f32 %v77, %v77
  %v467 = vmul.f32 %v78, %v78
  %v468 = vmul.f32 %v79, %v79
  %v469 = vmul.f32 %v80, %v80
  %v470 = vmul.f32 %v81, %v81
  %v471 = vmul.f32 %v82, %v82
  %v472 = vmul.f32 %v83, %v83
  %v473 = vmul.f32 %v84, %v84
  %v474 = vmul.f32 %v85, %v85
  %v475 = vmul.f32 %v86, %v86
  %v476 = vmul.f32 %v87, %v87
  %v477 = vmul.f32 %v88, %v88
  %v478 = vmul.f32 %v89, %v89
  %v479 = vmul.f32 %v90, %v90
  %v480 = vmul.f32 %v91, %v91
  %v481 = vmul.f32 %v92, %v92
  %v482 = vmul.f32 %v93, %v93
  %v483 = vmul.f32 %v94, %v94
  %v484 = vmul.f32 %v95, %v95
  %v485 = vmul.f32 %v96, %v96
  %v486 = vmul.f32 %v97, %v97
  %v487 = vmul.f32 %v98, %v98
  %v488 = vmul.f32 %v99, %v99
  %v489 = vmul.f32 %v100, %v100
  %v490 = vmul.f32 %v101, %v101
  %v491 = vmul.f32 %v102, %v102
  %v492 = vmul.f32 %v103, %v103
  %v493 = vmul.f32 %v104, %v104
  %v494 = vmul.f32 %v105, %v105
  %v495 = vmul.f32 %v106, %v106
  %v496 = vmul.f32 %v107, %v107
  %v497 = vmul.f32 %v108, %v108
  %v498 = vmul.f32 %v109, %v109
  %v499 = vmul.f32 %v110, %v110
  %v500 = vmul.f32 %v111, %v111
  %v501 = vmul.f32 %v112, %v112
  %v502 = vmul.f32 %v113, %v113
  %v503 = vmul.f32 %v114, %v114
  %v504 = vmul.f32 %v115, %v115
  %v505 = vmul.f32 %v116, %v116
  %v506 = vmul.f32 %v117, %v117
  %v507 = vmul.f32 %v118, %v118
  %v508 = vmul.f32 %v119, %v119
  %v509 = vmul.f32 %v120, %v120
  %v510 = vmul.f32 %v121, %v121
  %v511 = vmul.f32 %v122, %v122
  %v512 = vmul.f32 %v123, %v123
  %v513 = vmul.f32 %v125, %v125
  %v514 = vmul.f32 %v126, %v126
  %v515 = vmul.f32 %v127, %v127
  %v516 = vmul.f32 %v128, %v128
  %v517 = vmul.f32 %v129, %v129
  %v518 = vmul.f32 %v130, %v130
  %v519 = vmul.f32 %v131, %v131
  %v520 = vmul.f32 %v132, %v132
  %v521 = vmul.f32 %v133, %v133
  %v522 = vmul.f32 %v134, %v134
  %v523 = vmul.f32 %v135, %v135
  %v524 = vmul.f32 %v136, %v136
  %v525 = vmul.f32 %v137, %v137
  %v526 = vmul.f32 %v138, %v138
  %v527 = vmul.f32 %v139, %v139
  %v528 = vmul.f32 %v140, %v140
  %v529 = vmul.f32 %v141, %v141
  %v530 = vmul.f32 %v142, %v142
  %v531 = vmul.f32 %v143, %v143
  %v532 = vmul.f32 %v144, %v144
  %v533 = vmul.f32 %v145, %v145
  %v534 = vmul.f32 %v146, %v146
  %v535 = vmul.f32 %v147, %v147
  %v536 = vmul.f32 %v148, %v148
  %v537 = vmul.f32 %v149, %v149
  %v538 = vmul.f32 %v150, %v150
  %v539 = vmul.f32 %v151, %v151
  %v540 = vmul.f32 %v152, %v152
  %v541 = vmul.f32 %v153, %v153
  %v542 = vmul.f32 %v154, %v154
  %v543 = vmul.f32 %v155, %v155
  %v544 = vmul.f32 %v156, %v156
  %v545 = vmul.f32 %v157, %v157
  %v546 = vmul.f32 %v158, %v158
  %v547 = vmul.f32 %v159, %v159
  %v548 = vmul.f32 %v160, %v160
  %v549 = vmul.f32 %v161, %v161
  %v550 = vmul.f32 %v162, %v162
  %v551 = vmul.f32 %v163, %v163
  %v552 = vmul.f32 %v164, %v164
  %v553 = vmul.f32 %v165, %v165
  %v554 = vmul.f32 %v166, %v166
  %v555 = vmul.f32 %v167, %v167
  %v556 = vmul.f32 %v168, %v168
  %v557 = vmul.f32 %v169, %v169
  %v558 = vmul.f32 %v170, %v170
  %v559 = vmul.f32 %v171, %v171
  %v560 = vmul.f32 %v172, %v172
  %v561 = vmul.f32 %v173, %v173
  %v562 = vmul.f32 %v174, %v174
  %v563 = vmul.f32 %v175, %v175
  %v564 = vmul.f32 %v176, %v176
  %v565 = vmul.f32 %v177, %v177
  %v566 = vmul.f32 %v178, %v178
  %v567 = vmul.f32 %v179, %v179
  %v568 = vmul.f32 %v180, %v180
  %v569 = vmul.f32 %v181, %v181
  %v570 = vmul.f32 %v182, %v182
  %v571 = vmul.f32 %v183, %v183
  %v572 = vmul.f32 %v184, %v184
  %v573 = vmul.f32 %v185, %v185
  %v574 = vmul.f32 %v186, %v186
  %v575 = vmul.f32 %v187, %v187
  %v576 = vmul.f32 %v188, %v188
  %v577 = vadd.f32 %v449, %v513
  %v578 = vadd.f32 %v450, %v514
  %v579 = vadd.f32 %v451, %v515
  %v580 = vadd.f32 %v452, %v516
  %v581 = vadd.f32 %v453, %v517
  %v582 = vadd.f32 %v454, %v518
  %v583 = vadd.f32 %v455, %v519
  %v584 = vadd.f32 %v456, %v520
  %v585 = vadd.f32 %v457, %v521
  %v586 = vadd.f32 %v458, %v522
  %v587 = vadd.f32 %v459, %v523
  %v588 = vadd.f32 %v460, %v524
  %v589 = vadd.f32 %v461, %v525
  %v590 = vadd.f32 %v462, %v526
  %v591 = vadd.f32 %v463, %v527
  %v592 = vadd.f32 %v464, %v528
  %v593 = vadd.f32 %v465, %v529
  %v594 = vadd.f32 %v466, %v530
  %v595 = vadd.f32 %v467, %v531
  %v596 = vadd.f32 %v468, %v532
  %v597 = vadd.f32 %v469, %v533
  %v598 = vadd.f32 %v470, %v534
  %v599 = vadd.f32 %v471, %v535
  %v600 = vadd.f32 %v472, %v536
  %v601 = vadd.f32 %v473, %v537
  %v602 = vadd.f32 %v474, %v538
  %v603 = vadd.f32 %v475, %v539
  %v604 = vadd.f32 %v476, %v540
  %v605 = vadd.f32 %v477, %v541
  %v606 = vadd.f32 %v478, %v542
  %v607 = vadd.f32 %v479, %v543
  %v608 = vadd.f32 %v480, %v544
  %v609 = vadd.f32 %v481, %v545
  %v610 = vadd.f32 %v482, %v546
  %v611 = vadd.f32 %v483, %v547
  %v612 = vadd.f32 %v484, %v548
  %v613 = vadd.f32 %v485, %v549
  %v614 = vadd.f32 %v486, %v550
  %v615 = vadd.f32 %v487, %v551
  %v616 = vadd.f32 %v488, %v552
  %v617 = vadd.f32 %v489, %v553
  %v618 = vadd.f32 %v490, %v554
  %v619 = vadd.f32 %v491, %v555
  %v620 = vadd.f32 %v492, %v556
  %v621 = vadd.f32 %v493, %v557
  %v622 = vadd.f32 %v494, %v558
  %v623 = vadd.f32 %v495, %v559
  %v624 = vadd.f32 %v496, %v560
  %v625 = vadd.f32 %v497, %v561
  %v626 = vadd.f32 %v498, %v562
  %v627 = vadd.f32 %v499, %v563
  %v628 = vadd.f32 %v500, %v564
  %v629 = vadd.f32 %v501, %v565
  %v630 = vadd.f32 %v502, %v566
  %v631 = vadd.f32 %v503, %v567
  %v632 = vadd.f32 %v504, %v568
  %v633 = vadd.f32 %v505, %v569
  %v634 = vadd.f32 %v506, %v570
  %v635 = vadd.f32 %v507, %v571
  %v636 = vadd.f32 %v508, %v572
  %v637 = vadd.f32 %v509, %v573
  %v638 = vadd.f32 %v510, %v574
  %v639 = vadd.f32 %v511, %v575
  %v640 = vadd.f32 %v512, %v576
  %v641 = vmul.f32 %v190, %v190
  %v642 = vmul.f32 %v191, %v191
  %v643 = vmul.f32 %v192, %v192
  %v644 = vmul.f32 %v193, %v193
  %v645 = vmul.f32 %v194, %v194
  %v646 = vmul.f32 %v195, %v195
  %v647 = vmul.f32 %v196, %v196
  %v648 = vmul.f32 %v197, %v197
  %v649 = vmul.f32 %v198, %v198
  %v650 = vmul.f32 %v199, %v199
  %v651 = vmul.f32 %v200, %v200
  %v652 = vmul.f32 %v201, %v201
  %v653 = vmul.f32 %v202, %v202
  %v654 = vmul.f32 %v203, %v203
  %v655 = vmul.f32 %v204, %v204
  %v656 = vmul.f32 %v205, %v205
  %v657 = vmul.f32 %v206, %v206
  %v658 = vmul.f32 %v207, %v207
  %v659 = vmul.f32 %v208, %v208
  %v660 = vmul.f32 %v209, %v209
  %v661 = vmul.f32 %v210, %v210
  %v662 = vmul.f32 %v211, %v211
  %v663 = vmul.f32 %v212, %v212
  %v664 = vmul.f32 %v213, %v213
  %v665 = vmul.f32 %v214, %v214
  %v666 = vmul.f32 %v215, %v215
  %v667 = vmul.f32 %v216, %v216
  %v668 = vmul.f32 %v217, %v217
  %v669 = vmul.f32 %v218, %v218
  %v670 = vmul.f32 %v219, %v219
  %v671 = vmul.f32 %v220, %v220
  %v672 = vmul.f32 %v221, %v221
  %v673 = vmul.f32 %v222, %v222
  %v674 = vmul.f32 %v223, %v223
  %v675 = vmul.f32 %v224, %v224
  %v676 = vmul.f32 %v225, %v225
  %v677 = vmul.f32 %v226, %v226
  %v678 = vmul.f32 %v227, %v227
  %v679 = vmul.f32 %v228, %v228
  %v680 = vmul.f32 %v229, %v229
  %v681 = vmul.f32 %v230, %v230
  %v682 = vmul.f32 %v231, %v231
  %v683 = vmul.f32 %v232, %v232
  %v684 = vmul.f32 %v233, %v233
  %v685 = vmul.f32 %v234, %v234
  %v686 = vmul.f32 %v235, %v235
  %v687 = vmul.f32 %v236, %v236
  %v688 = vmul.f32 %v237, %v237
  %v689 = vmul.f32 %v238, %v238
  %v690 = vmul.f32 %v239, %v239
  %v691 = vmul.f32 %v240, %v240
  %v692 = vmul.f32 %v241, %v241
  %v693 = vmul.f32 %v242, %v242
  %v694 = vmul.f32 %v243, %v243
  %v695 = vmul.f32 %v244, %v244
  %v696 = vmul.f32 %v245, %v245
  %v697 = vmul.f32 %v246, %v246
  %v698 = vmul.f32 %v247, %v247
  %v699 = vmul.f32 %v248, %v248
  %v700 = vmul.f32 %v249, %v249
  %v701 = vmul.f32 %v250, %v250
  %v702 = vmul.f32 %v251, %v251
  %v703 = vmul.f32 %v252, %v252
  %v704 = vmul.f32 %v253, %v253
  %v705 = vadd.f32 %v577, %v641
  %v706 = vadd.f32 %v578, %v642
  %v707 = vadd.f32 %v579, %v643
  %v708 = vadd.f32 %v580, %v644
  %v709 = vadd.f32 %v581, %v645
  %v710 = vadd.f32 %v582, %v646
  %v711 = vadd.f32 %v583, %v647
  %v712 = vadd.f32 %v584, %v648
  %v713 = vadd.f32 %v585, %v649
  %v714 = vadd.f32 %v586, %v650
  %v715 = vadd.f32 %v587, %v651
  %v716 = vadd.f32 %v588, %v652
  %v717 = vadd.f32 %v589, %v653
  %v718 = vadd.f32 %v590, %v654
  %v719 = vadd.f32 %v591, %v655
  %v720 = vadd.f32 %v592, %v656
  %v721 = vadd.f32 %v593, %v657
  %v722 = vadd.f32 %v594, %v658
  %v723 = vadd.f32 %v595, %v659
  %v724 = vadd.f32 %v596, %v660
  %v725 = vadd.f32 %v597, %v661
  %v726 = vadd.f32 %v598, %v662
  %v727 = vadd.f32 %v599, %v663
  %v728 = vadd.f32 %v600, %v664
  %v729 = vadd.f32 %v601, %v665
  %v730 = vadd.f32 %v602, %v666
  %v731 = vadd.f32 %v603, %v667
  %v732 = vadd.f32 %v604, %v668
  %v733 = vadd.f32 %v605, %v669
  %v734 = vadd.f32 %v606, %v670
  %v735 = vadd.f32 %v607, %v671
  %v736 = vadd.f32 %v608, %v672
  %v737 = vadd.f32 %v609, %v673
  %v738 = vadd.f32 %v610, %v674
  %v739 = vadd.f32 %v611, %v675
  %v740 = vadd.f32 %v612, %v676
  %v741 = vadd.f32 %v613, %v677
  %v742 = vadd.f32 %v614, %v678
  %v743 = vadd.f32 %v615, %v679
  %v744 = vadd.f32 %v616, %v680
  %v745 = vadd.f32 %v617, %v681
  %v746 = vadd.f32 %v618, %v682
  %v747 = vadd.f32 %v619, %v683
  %v748 = vadd.f32 %v620, %v684
  %v749 = vadd.f32 %v621, %v685
  %v750 = vadd.f32 %v622, %v686
  %v751 = vadd.f32 %v623, %v687
  %v752 = vadd.f32 %v624, %v688
  %v753 = vadd.f32 %v625, %v689
  %v754 = vadd.f32 %v626, %v690
  %v755 = vadd.f32 %v627, %v691
  %v756 = vadd.f32 %v628, %v692
  %v757 = vadd.f32 %v629, %v693
  %v758 = vadd.f32 %v630, %v694
  %v759 = vadd.f32 %v631, %v695
  %v760 = vadd.f32 %v632, %v696
  %v761 = vadd.f32 %v633, %v697
  %v762 = vadd.f32 %v634, %v698
  %v763 = vadd.f32 %v635, %v699
  %v764 = vadd.f32 %v636, %v700
  %v765 = vadd.f32 %v637, %v701
  %v766 = vadd.f32 %v638, %v702
  %v767 = vadd.f32 %v639, %v703
  %v768 = vadd.f32 %v640, %v704
  %vm769 = vcmp.lt.f32.partialorder %v705, %v385
  %vm770 = vcmp.lt.f32.partialorder %v706, %v386
  %vm771 = vcmp.lt.f32.partialorder %v707, %v387
  %vm772 = vcmp.lt.f32.partialorder %v708, %v388
  %vm773 = vcmp.lt.f32.partialorder %v709, %v389
  %vm774 = vcmp.lt.f32.partialorder %v710, %v390
  %vm775 = vcmp.lt.f32.partialorder %v711, %v391
  %vm776 = vcmp.lt.f32.partialorder %v712, %v392
  %vm777 = vcmp.lt.f32.partialorder %v713, %v393
  %vm778 = vcmp.lt.f32.partialorder %v714, %v394
  %vm779 = vcmp.lt.f32.partialorder %v715, %v395
  %vm780 = vcmp.lt.f32.partialorder %v716, %v396
  %vm781 = vcmp.lt.f32.partialorder %v717, %v397
  %vm782 = vcmp.lt.f32.partialorder %v718, %v398
  %vm783 = vcmp.lt.f32.partialorder %v719, %v399
  %vm784 = vcmp.lt.f32.partialorder %v720, %v400
  %vm785 = vcmp.lt.f32.partialorder %v721, %v401
  %vm786 = vcmp.lt.f32.partialorder %v722, %v402
  %vm787 = vcmp.lt.f32.partialorder %v723, %v403
  %vm788 = vcmp.lt.f32.partialorder %v724, %v404
  %vm789 = vcmp.lt.f32.partialorder %v725, %v405
  %vm790 = vcmp.lt.f32.partialorder %v726, %v406
  %vm791 = vcmp.lt.f32.partialorder %v727, %v407
  %vm792 = vcmp.lt.f32.partialorder %v728, %v408
  %vm793 = vcmp.lt.f32.partialorder %v729, %v409
  %vm794 = vcmp.lt.f32.partialorder %v730, %v410
  %vm795 = vcmp.lt.f32.partialorder %v731, %v411
  %vm796 = vcmp.lt.f32.partialorder %v732, %v412
  %vm797 = vcmp.lt.f32.partialorder %v733, %v413
  %vm798 = vcmp.lt.f32.partialorder %v734, %v414
  %vm799 = vcmp.lt.f32.partialorder %v735, %v415
  %vm800 = vcmp.lt.f32.partialorder %v736, %v416
  %vm801 = vcmp.lt.f32.partialorder %v737, %v417
  %vm802 = vcmp.lt.f32.partialorder %v738, %v418
  %vm803 = vcmp.lt.f32.partialorder %v739, %v419
  %vm804 = vcmp.lt.f32.partialorder %v740, %v420
  %vm805 = vcmp.lt.f32.partialorder %v741, %v421
  %vm806 = vcmp.lt.f32.partialorder %v742, %v422
  %vm807 = vcmp.lt.f32.partialorder %v743, %v423
  %vm808 = vcmp.lt.f32.partialorder %v744, %v424
  %vm809 = vcmp.lt.f32.partialorder %v745, %v425
  %vm810 = vcmp.lt.f32.partialorder %v746, %v426
  %vm811 = vcmp.lt.f32.partialorder %v747, %v427
  %vm812 = vcmp.lt.f32.partialorder %v748, %v428
  %vm813 = vcmp.lt.f32.partialorder %v749, %v429
  %vm814 = vcmp.lt.f32.partialorder %v750, %v430
  %vm815 = vcmp.lt.f32.partialorder %v751, %v431
  %vm816 = vcmp.lt.f32.partialorder %v752, %v432
  %vm817 = vcmp.lt.f32.partialorder %v753, %v433
  %vm818 = vcmp.lt.f32.partialorder %v754, %v434
  %vm819 = vcmp.lt.f32.partialorder %v755, %v435
  %vm820 = vcmp.lt.f32.partialorder %v756, %v436
  %vm821 = vcmp.lt.f32.partialorder %v757, %v437
  %vm822 = vcmp.lt.f32.partialorder %v758, %v438
  %vm823 = vcmp.lt.f32.partialorder %v759, %v439
  %vm824 = vcmp.lt.f32.partialorder %v760, %v440
  %vm825 = vcmp.lt.f32.partialorder %v761, %v441
  %vm826 = vcmp.lt.f32.partialorder %v762, %v442
  %vm827 = vcmp.lt.f32.partialorder %v763, %v443
  %vm828 = vcmp.lt.f32.partialorder %v764, %v444
  %vm829 = vcmp.lt.f32.partialorder %v765, %v445
  %vm830 = vcmp.lt.f32.partialorder %v766, %v446
  %vm831 = vcmp.lt.f32.partialorder %v767, %v447
  %vm832 = vcmp.lt.f32.partialorder %v768, %v448
  %v833 = vsel %vm769, %v705, 1.0
  %v834 = vsel %vm770, %v706, 1.0
  %v835 = vsel %vm771, %v707, 1.0
  %v836 = vsel %vm772, %v708, 1.0
  %v837 = vsel %vm773, %v709, 1.0
  %v838 = vsel %vm774, %v710, 1.0
  %v839 = vsel %vm775, %v711, 1.0
  %v840 = vsel %vm776, %v712, 1.0
  %v841 = vsel %vm777, %v713, 1.0
  %v842 = vsel %vm778, %v714, 1.0
  %v843 = vsel %vm779, %v715, 1.0
  %v844 = vsel %vm780, %v716, 1.0
  %v845 = vsel %vm781, %v717, 1.0
  %v846 = vsel %vm782, %v718, 1.0
  %v847 = vsel %vm783, %v719, 1.0
  %v848 = vsel %vm784, %v720, 1.0
  %v849 = vsel %vm785, %v721, 1.0
  %v850 = vsel %vm786, %v722, 1.0
  %v851 = vsel %vm787, %v723, 1.0
  %v852 = vsel %vm788, %v724, 1.0
  %v853 = vsel %vm789, %v725, 1.0
  %v854 = vsel %vm790, %v726, 1.0
  %v855 = vsel %vm791, %v727, 1.0
  %v856 = vsel %vm792, %v728, 1.0
  %v857 = vsel %vm793, %v729, 1.0
  %v858 = vsel %vm794, %v730, 1.0
  %v859 = vsel %vm795, %v731, 1.0
  %v860 = vsel %vm796, %v732, 1.0
  %v861 = vsel %vm797, %v733, 1.0
  %v862 = vsel %vm798, %v734, 1.0
  %v863 = vsel %vm799, %v735, 1.0
  %v864 = vsel %vm800, %v736, 1.0
  %v865 = vsel %vm801, %v737, 1.0
  %v866 = vsel %vm802, %v738, 1.0
  %v867 = vsel %vm803, %v739, 1.0
  %v868 = vsel %vm804, %v740, 1.0
  %v869 = vsel %vm805, %v741, 1.0
  %v870 = vsel %vm806, %v742, 1.0
  %v871 = vsel %vm807, %v743, 1.0
  %v872 = vsel %vm808, %v744, 1.0
  %v873 = vsel %vm809, %v745, 1.0
  %v874 = vsel %vm810, %v746, 1.0
  %v875 = vsel %vm811, %v747, 1.0
  %v876 = vsel %vm812, %v748, 1.0
  %v877 = vsel %vm813, %v749, 1.0
  %v878 = vsel %vm814, %v750, 1.0
  %v879 = vsel %vm815, %v751, 1.0
  %v880 = vsel %vm816, %v752, 1.0
  %v881 = vsel %vm817, %v753, 1.0
  %v882 = vsel %vm818, %v754, 1.0
  %v883 = vsel %vm819, %v755, 1.0
  %v884 = vsel %vm820, %v756, 1.0
  %v885 = vsel %vm821, %v757, 1.0
  %v886 = vsel %vm822, %v758, 1.0
  %v887 = vsel %vm823, %v759, 1.0
  %v888 = vsel %vm824, %v760, 1.0
  %v889 = vsel %vm825, %v761, 1.0
  %v890 = vsel %vm826, %v762, 1.0
  %v891 = vsel %vm827, %v763, 1.0
  %v892 = vsel %vm828, %v764, 1.0
  %v893 = vsel %vm829, %v765, 1.0
  %v894 = vsel %vm830, %v766, 1.0
  %v895 = vsel %vm831, %v767, 1.0
  %v896 = vsel %vm832, %v768, 1.0
  %v897 = vrcp.pop %v833
  %v898 = vmul.f32 1.0, %v897
  %v899 = vrcp.pop %v834
  %v900 = vmul.f32 1.0, %v899
  %v901 = vrcp.pop %v835
  %v902 = vmul.f32 1.0, %v901
  %v903 = vrcp.pop %v836
  %v904 = vmul.f32 1.0, %v903
  %v905 = vrcp.pop %v837
  %v906 = vmul.f32 1.0, %v905
  %v907 = vrcp.pop %v838
  %v908 = vmul.f32 1.0, %v907
  %v909 = vrcp.pop %v839
  %v910 = vmul.f32 1.0, %v909
  %v911 = vrcp.pop %v840
  %v912 = vmul.f32 1.0, %v911
  %v913 = vrcp.pop %v841
  %v914 = vmul.f32 1.0, %v913
  %v915 = vrcp.pop %v842
  %v916 = vmul.f32 1.0, %v915
  %v917 = vrcp.pop %v843
  %v918 = vmul.f32 1.0, %v917
  %v919 = vrcp.pop %v844
  %v920 = vmul.f32 1.0, %v919
  %v921 = vrcp.pop %v845
  %v922 = vmul.f32 1.0, %v921
  %v923 = vrcp.pop %v846
  %v924 = vmul.f32 1.0, %v923
  %v925 = vrcp.pop %v847
  %v926 = vmul.f32 1.0, %v925
  %v927 = vrcp.pop %v848
  %v928 = vmul.f32 1.0, %v927
  %v929 = vrcp.pop %v849
  %v930 = vmul.f32 1.0, %v929
  %v931 = vrcp.pop %v850
  %v932 = vmul.f32 1.0, %v931
  %v933 = vrcp.pop %v851
  %v934 = vmul.f32 1.0, %v933
  %v935 = vrcp.pop %v852
  %v936 = vmul.f32 1.0, %v935
  %v937 = vrcp.pop %v853
  %v938 = vmul.f32 1.0, %v937
  %v939 = vrcp.pop %v854
  %v940 = vmul.f32 1.0, %v939
  %v941 = vrcp.pop %v855
  %v942 = vmul.f32 1.0, %v941
  %v943 = vrcp.pop %v856
  %v944 = vmul.f32 1.0, %v943
  %v945 = vrcp.pop %v857
  %v946 = vmul.f32 1.0, %v945
  %v947 = vrcp.pop %v858
  %v948 = vmul.f32 1.0, %v947
  %v949 = vrcp.pop %v859
  %v950 = vmul.f32 1.0, %v949
  %v951 = vrcp.pop %v860
  %v952 = vmul.f32 1.0, %v951
  %v953 = vrcp.pop %v861
  %v954 = vmul.f32 1.0, %v953
  %v955 = vrcp.pop %v862
  %v956 = vmul.f32 1.0, %v955
  %v957 = vrcp.pop %v863
  %v958 = vmul.f32 1.0, %v957
  %v959 = vrcp.pop %v864
  %v960 = vmul.f32 1.0, %v959
  %v961 = vrcp.pop %v865
  %v962 = vmul.f32 1.0, %v961
  %v963 = vrcp.pop %v866
  %v964 = vmul.f32 1.0, %v963
  %v965 = vrcp.pop %v867
  %v966 = vmul.f32 1.0, %v965
  %v967 = vrcp.pop %v868
  %v968 = vmul.f32 1.0, %v967
  %v969 = vrcp.pop %v869
  %v970 = vmul.f32 1.0, %v969
  %v971 = vrcp.pop %v870
  %v972 = vmul.f32 1.0, %v971
  %v973 = vrcp.pop %v871
  %v974 = vmul.f32 1.0, %v973
  %v975 = vrcp.pop %v872
  %v976 = vmul.f32 1.0, %v975
  %v977 = vrcp.pop %v873
  %v978 = vmul.f32 1.0, %v977
  %v979 = vrcp.pop %v874
  %v980 = vmul.f32 1.0, %v979
  %v981 = vrcp.pop %v875
  %v982 = vmul.f32 1.0, %v981
  %v983 = vrcp.pop %v876
  %v984 = vmul.f32 1.0, %v983
  %v985 = vrcp.pop %v877
  %v986 = vmul.f32 1.0, %v985
  %v987 = vrcp.pop %v878
  %v988 = vmul.f32 1.0, %v987
  %v989 = vrcp.pop %v879
  %v990 = vmul.f32 1.0, %v989
  %v991 = vrcp.pop %v880
  %v992 = vmul.f32 1.0, %v991
  %v993 = vrcp.pop %v881
  %v994 = vmul.f32 1.0, %v993
  %v995 = vrcp.pop %v882
  %v996 = vmul.f32 1.0, %v995
  %v997 = vrcp.pop %v883
  %v998 = vmul.f32 1.0, %v997
  %v999 = vrcp.pop %v884
  %v1000 = vmul.f32 1.0, %v999
  %v1001 = vrcp.pop %v885
  %v1002 = vmul.f32 1.0, %v1001
  %v1003 = vrcp.pop %v886
  %v1004 = vmul.f32 1.0, %v1003
  %v1005 = vrcp.pop %v887
  %v1006 = vmul.f32 1.0, %v1005
  %v1007 = vrcp.pop %v888
  %v1008 = vmul.f32 1.0, %v1007
  %v1009 = vrcp.pop %v889
  %v1010 = vmul.f32 1.0, %v1009
  %v1011 = vrcp.pop %v890
  %v1012 = vmul.f32 1.0, %v1011
  %v1013 = vrcp.pop %v891
  %v1014 = vmul.f32 1.0, %v1013
  %v1015 = vrcp.pop %v892
  %v1016 = vmul.f32 1.0, %v1015
  %v1017 = vrcp.pop %v893
  %v1018 = vmul.f32 1.0, %v1017
  %v1019 = vrcp.pop %v894
  %v1020 = vmul.f32 1.0, %v1019
  %v1021 = vrcp.pop %v895
  %v1022 = vmul.f32 1.0, %v1021
  %v1023 = vrcp.pop %v896
  %v1024 = vmul.f32 1.0, %v1023
  %v1025 = vmul.f32 %v898, %v898
  %v1026 = vmul.f32 %v900, %v900
  %v1027 = vmul.f32 %v902, %v902
  %v1028 = vmul.f32 %v904, %v904
  %v1029 = vmul.f32 %v906, %v906
  %v1030 = vmul.f32 %v908, %v908
  %v1031 = vmul.f32 %v910, %v910
  %v1032 = vmul.f32 %v912, %v912
  %v1033 = vmul.f32 %v914, %v914
  %v1034 = vmul.f32 %v916, %v916
  %v1035 = vmul.f32 %v918, %v918
  %v1036 = vmul.f32 %v920, %v920
  %v1037 = vmul.f32 %v922, %v922
  %v1038 = vmul.f32 %v924, %v924
  %v1039 = vmul.f32 %v926, %v926
  %v1040 = vmul.f32 %v928, %v928
  %v1041 = vmul.f32 %v930, %v930
  %v1042 = vmul.f32 %v932, %v932
  %v1043 = vmul.f32 %v934, %v934
  %v1044 = vmul.f32 %v936, %v936
  %v1045 = vmul.f32 %v938, %v938
  %v1046 = vmul.f32 %v940, %v940
  %v1047 = vmul.f32 %v942, %v942
  %v1048 = vmul.f32 %v944, %v944
  %v1049 = vmul.f32 %v946, %v946
  %v1050 = vmul.f32 %v948, %v948
  %v1051 = vmul.f32 %v950, %v950
  %v1052 = vmul.f32 %v952, %v952
  %v1053 = vmul.f32 %v954, %v954
  %v1054 = vmul.f32 %v956, %v956
  %v1055 = vmul.f32 %v958, %v958
  %v1056 = vmul.f32 %v960, %v960
  %v1057 = vmul.f32 %v962, %v962
  %v1058 = vmul.f32 %v964, %v964
  %v1059 = vmul.f32 %v966, %v966
  %v1060 = vmul.f32 %v968, %v968
  %v1061 = vmul.f32 %v970, %v970
  %v1062 = vmul.f32 %v972, %v972
  %v1063 = vmul.f32 %v974, %v974
  %v1064 = vmul.f32 %v976, %v976
  %v1065 = vmul.f32 %v978, %v978
  %v1066 = vmul.f32 %v980, %v980
  %v1067 = vmul.f32 %v982, %v982
  %v1068 = vmul.f32 %v984, %v984
  %v1069 = vmul.f32 %v986, %v986
  %v1070 = vmul.f32 %v988, %v988
  %v1071 = vmul.f32 %v990, %v990
  %v1072 = vmul.f32 %v992, %v992
  %v1073 = vmul.f32 %v994, %v994
  %v1074 = vmul.f32 %v996, %v996
  %v1075 = vmul.f32 %v998, %v998
  %v1076 = vmul.f32 %v1000, %v1000
  %v1077 = vmul.f32 %v1002, %v1002
  %v1078 = vmul.f32 %v1004, %v1004
  %v1079 = vmul.f32 %v1006, %v1006
  %v1080 = vmul.f32 %v1008, %v1008
  %v1081 = vmul.f32 %v1010, %v1010
  %v1082 = vmul.f32 %v1012, %v1012
  %v1083 = vmul.f32 %v1014, %v1014
  %v1084 = vmul.f32 %v1016, %v1016
  %v1085 = vmul.f32 %v1018, %v1018
  %v1086 = vmul.f32 %v1020, %v1020
  %v1087 = vmul.f32 %v1022, %v1022
  %v1088 = vmul.f32 %v1024, %v1024
  %v1089 = vmul.f32 %v1025, %v898
  %v1090 = vmul.f32 %v1026, %v900
  %v1091 = vmul.f32 %v1027, %v902
  %v1092 = vmul.f32 %v1028, %v904
  %v1093 = vmul.f32 %v1029, %v906
  %v1094 = vmul.f32 %v1030, %v908
  %v1095 = vmul.f32 %v1031, %v910
  %v1096 = vmul.f32 %v1032, %v912
  %v1097 = vmul.f32 %v1033, %v914
  %v1098 = vmul.f32 %v1034, %v916
  %v1099 = vmul.f32 %v1035, %v918
  %v1100 = vmul.f32 %v1036, %v920
  %v1101 = vmul.f32 %v1037, %v922
  %v1102 = vmul.f32 %v1038, %v924
  %v1103 = vmul.f32 %v1039, %v926
  %v1104 = vmul.f32 %v1040, %v928
  %v1105 = vmul.f32 %v1041, %v930
  %v1106 = vmul.f32 %v1042, %v932
  %v1107 = vmul.f32 %v1043, %v934
  %v1108 = vmul.f32 %v1044, %v936
  %v1109 = vmul.f32 %v1045, %v938
  %v1110 = vmul.f32 %v1046, %v940
  %v1111 = vmul.f32 %v1047, %v942
  %v1112 = vmul.f32 %v1048, %v944
  %v1113 = vmul.f32 %v1049, %v946
  %v1114 = vmul.f32 %v1050, %v948
  %v1115 = vmul.f32 %v1051, %v950
  %v1116 = vmul.f32 %v1052, %v952
  %v1117 = vmul.f32 %v1053, %v954
  %v1118 = vmul.f32 %v1054, %v956
  %v1119 = vmul.f32 %v1055, %v958
  %v1120 = vmul.f32 %v1056, %v960
  %v1121 = vmul.f32 %v1057, %v962
  %v1122 = vmul.f32 %v1058, %v964
  %v1123 = vmul.f32 %v1059, %v966
  %v1124 = vmul.f32 %v1060, %v968
  %v1125 = vmul.f32 %v1061, %v970
  %v1126 = vmul.f32 %v1062, %v972
  %v1127 = vmul.f32 %v1063, %v974
  %v1128 = vmul.f32 %v1064, %v976
  %v1129 = vmul.f32 %v1065, %v978
  %v1130 = vmul.f32 %v1066, %v980
  %v1131 = vmul.f32 %v1067, %v982
  %v1132 = vmul.f32 %v1068, %v984
  %v1133 = vmul.f32 %v1069, %v986
  %v1134 = vmul.f32 %v1070, %v988
  %v1135 = vmul.f32 %v1071, %v990
  %v1136 = vmul.f32 %v1072, %v992
  %v1137 = vmul.f32 %v1073, %v994
  %v1138 = vmul.f32 %v1074, %v996
  %v1139 = vmul.f32 %v1075, %v998
  %v1140 = vmul.f32 %v1076, %v1000
  %v1141 = vmul.f32 %v1077, %v1002
  %v1142 = vmul.f32 %v1078, %v1004
  %v1143 = vmul.f32 %v1079, %v1006
  %v1144 = vmul.f32 %v1080, %v1008
  %v1145 = vmul.f32 %v1081, %v1010
  %v1146 = vmul.f32 %v1082, %v1012
  %v1147 = vmul.f32 %v1083, %v1014
  %v1148 = vmul.f32 %v1084, %v1016
  %v1149 = vmul.f32 %v1085, %v1018
  %v1150 = vmul.f32 %v1086, %v1020
  %v1151 = vmul.f32 %v1087, %v1022
  %v1152 = vmul.f32 %v1088, %v1024
  %vm1153 = vcmp.gt.f32.partialorder %v385, 0.0
  %vm1154 = vcmp.gt.f32.partialorder %v386, 0.0
  %vm1155 = vcmp.gt.f32.partialorder %v387, 0.0
  %vm1156 = vcmp.gt.f32.partialorder %v388, 0.0
  %vm1157 = vcmp.gt.f32.partialorder %v389, 0.0
  %vm1158 = vcmp.gt.f32.partialorder %v390, 0.0
  %vm1159 = vcmp.gt.f32.partialorder %v391, 0.0
  %vm1160 = vcmp.gt.f32.partialorder %v392, 0.0
  %vm1161 = vcmp.gt.f32.partialorder %v393, 0.0
  %vm1162 = vcmp.gt.f32.partialorder %v394, 0.0
  %vm1163 = vcmp.gt.f32.partialorder %v395, 0.0
  %vm1164 = vcmp.gt.f32.partialorder %v396, 0.0
  %vm1165 = vcmp.gt.f32.partialorder %v397, 0.0
  %vm1166 = vcmp.gt.f32.partialorder %v398, 0.0
  %vm1167 = vcmp.gt.f32.partialorder %v399, 0.0
  %vm1168 = vcmp.gt.f32.partialorder %v400, 0.0
  %vm1169 = vcmp.gt.f32.partialorder %v401, 0.0
  %vm1170 = vcmp.gt.f32.partialorder %v402, 0.0
  %vm1171 = vcmp.gt.f32.partialorder %v403, 0.0
  %vm1172 = vcmp.gt.f32.partialorder %v404, 0.0
  %vm1173 = vcmp.gt.f32.partialorder %v405, 0.0
  %vm1174 = vcmp.gt.f32.partialorder %v406, 0.0
  %vm1175 = vcmp.gt.f32.partialorder %v407, 0.0
  %vm1176 = vcmp.gt.f32.partialorder %v408, 0.0
  %vm1177 = vcmp.gt.f32.partialorder %v409, 0.0
  %vm1178 = vcmp.gt.f32.partialorder %v410, 0.0
  %vm1179 = vcmp.gt.f32.partialorder %v411, 0.0
  %vm1180 = vcmp.gt.f32.partialorder %v412, 0.0
  %vm1181 = vcmp.gt.f32.partialorder %v413, 0.0
  %vm1182 = vcmp.gt.f32.partialorder %v414, 0.0
  %vm1183 = vcmp.gt.f32.partialorder %v415, 0.0
  %vm1184 = vcmp.gt.f32.partialorder %v416, 0.0
  %vm1185 = vcmp.gt.f32.partialorder %v417, 0.0
  %vm1186 = vcmp.gt.f32.partialorder %v418, 0.0
  %vm1187 = vcmp.gt.f32.partialorder %v419, 0.0
  %vm1188 = vcmp.gt.f32.partialorder %v420, 0.0
  %vm1189 = vcmp.gt.f32.partialorder %v421, 0.0
  %vm1190 = vcmp.gt.f32.partialorder %v422, 0.0
  %vm1191 = vcmp.gt.f32.partialorder %v423, 0.0
  %vm1192 = vcmp.gt.f32.partialorder %v424, 0.0
  %vm1193 = vcmp.gt.f32.partialorder %v425, 0.0
  %vm1194 = vcmp.gt.f32.partialorder %v426, 0.0
  %vm1195 = vcmp.gt.f32.partialorder %v427, 0.0
  %vm1196 = vcmp.gt.f32.partialorder %v428, 0.0
  %vm1197 = vcmp.gt.f32.partialorder %v429, 0.0
  %vm1198 = vcmp.gt.f32.partialorder %v430, 0.0
  %vm1199 = vcmp.gt.f32.partialorder %v431, 0.0
  %vm1200 = vcmp.gt.f32.partialorder %v432, 0.0
  %vm1201 = vcmp.gt.f32.partialorder %v433, 0.0
  %vm1202 = vcmp.gt.f32.partialorder %v434, 0.0
  %vm1203 = vcmp.gt.f32.partialorder %v435, 0.0
  %vm1204 = vcmp.gt.f32.partialorder %v436, 0.0
  %vm1205 = vcmp.gt.f32.partialorder %v437, 0.0
  %vm1206 = vcmp.gt.f32.partialorder %v438, 0.0
  %vm1207 = vcmp.gt.f32.partialorder %v439, 0.0
  %vm1208 = vcmp.gt.f32.partialorder %v440, 0.0
  %vm1209 = vcmp.gt.f32.partialorder %v441, 0.0
  %vm1210 = vcmp.gt.f32.partialorder %v442, 0.0
  %vm1211 = vcmp.gt.f32.partialorder %v443, 0.0
  %vm1212 = vcmp.gt.f32.partialorder %v444, 0.0
  %vm1213 = vcmp.gt.f32.partialorder %v445, 0.0
  %vm1214 = vcmp.gt.f32.partialorder %v446, 0.0
  %vm1215 = vcmp.gt.f32.partialorder %v447, 0.0
  %vm1216 = vcmp.gt.f32.partialorder %v448, 0.0
  %v1217 = vsel %vm1153, %v385, 1.0
  %v1218 = vsel %vm1154, %v386, 1.0
  %v1219 = vsel %vm1155, %v387, 1.0
  %v1220 = vsel %vm1156, %v388, 1.0
  %v1221 = vsel %vm1157, %v389, 1.0
  %v1222 = vsel %vm1158, %v390, 1.0
  %v1223 = vsel %vm1159, %v391, 1.0
  %v1224 = vsel %vm1160, %v392, 1.0
  %v1225 = vsel %vm1161, %v393, 1.0
  %v1226 = vsel %vm1162, %v394, 1.0
  %v1227 = vsel %vm1163, %v395, 1.0
  %v1228 = vsel %vm1164, %v396, 1.0
  %v1229 = vsel %vm1165, %v397, 1.0
  %v1230 = vsel %vm1166, %v398, 1.0
  %v1231 = vsel %vm1167, %v399, 1.0
  %v1232 = vsel %vm1168, %v400, 1.0
  %v1233 = vsel %vm1169, %v401, 1.0
  %v1234 = vsel %vm1170, %v402, 1.0
  %v1235 = vsel %vm1171, %v403, 1.0
  %v1236 = vsel %vm1172, %v404, 1.0
  %v1237 = vsel %vm1173, %v405, 1.0
  %v1238 = vsel %vm1174, %v406, 1.0
  %v1239 = vsel %vm1175, %v407, 1.0
  %v1240 = vsel %vm1176, %v408, 1.0
  %v1241 = vsel %vm1177, %v409, 1.0
  %v1242 = vsel %vm1178, %v410, 1.0
  %v1243 = vsel %vm1179, %v411, 1.0
  %v1244 = vsel %vm1180, %v412, 1.0
  %v1245 = vsel %vm1181, %v413, 1.0
  %v1246 = vsel %vm1182, %v414, 1.0
  %v1247 = vsel %vm1183, %v415, 1.0
  %v1248 = vsel %vm1184, %v416, 1.0
  %v1249 = vsel %vm1185, %v417, 1.0
  %v1250 = vsel %vm1186, %v418, 1.0
  %v1251 = vsel %vm1187, %v419, 1.0
  %v1252 = vsel %vm1188, %v420, 1.0
  %v1253 = vsel %vm1189, %v421, 1.0
  %v1254 = vsel %vm1190, %v422, 1.0
  %v1255 = vsel %vm1191, %v423, 1.0
  %v1256 = vsel %vm1192, %v424, 1.0
  %v1257 = vsel %vm1193, %v425, 1.0
  %v1258 = vsel %vm1194, %v426, 1.0
  %v1259 = vsel %vm1195, %v427, 1.0
  %v1260 = vsel %vm1196, %v428, 1.0
  %v1261 = vsel %vm1197, %v429, 1.0
  %v1262 = vsel %vm1198, %v430, 1.0
  %v1263 = vsel %vm1199, %v431, 1.0
  %v1264 = vsel %vm1200, %v432, 1.0
  %v1265 = vsel %vm1201, %v433, 1.0
  %v1266 = vsel %vm1202, %v434, 1.0
  %v1267 = vsel %vm1203, %v435, 1.0
  %v1268 = vsel %vm1204, %v436, 1.0
  %v1269 = vsel %vm1205, %v437, 1.0
  %v1270 = vsel %vm1206, %v438, 1.0
  %v1271 = vsel %vm1207, %v439, 1.0
  %v1272 = vsel %vm1208, %v440, 1.0
  %v1273 = vsel %vm1209, %v441, 1.0
  %v1274 = vsel %vm1210, %v442, 1.0
  %v1275 = vsel %vm1211, %v443, 1.0
  %v1276 = vsel %vm1212, %v444, 1.0
  %v1277 = vsel %vm1213, %v445, 1.0
  %v1278 = vsel %vm1214, %v446, 1.0
  %v1279 = vsel %vm1215, %v447, 1.0
  %v1280 = vsel %vm1216, %v448, 1.0
  %v1281 = vrcp.pop %v1217
  %v1282 = vrcp.pop %v1218
  %v1283 = vrcp.pop %v1219
  %v1284 = vrcp.pop %v1220
  %v1285 = vrcp.pop %v1221
  %v1286 = vrcp.pop %v1222
  %v1287 = vrcp.pop %v1223
  %v1288 = vrcp.pop %v1224
  %v1289 = vrcp.pop %v1225
  %v1290 = vrcp.pop %v1226
  %v1291 = vrcp.pop %v1227
  %v1292 = vrcp.pop %v1228
  %v1293 = vrcp.pop %v1229
  %v1294 = vrcp.pop %v1230
  %v1295 = vrcp.pop %v1231
  %v1296 = vrcp.pop %v1232
  %v1297 = vrcp.pop %v1233
  %v1298 = vrcp.pop %v1234
  %v1299 = vrcp.pop %v1235
  %v1300 = vrcp.pop %v1236
  %v1301 = vrcp.pop %v1237
  %v1302 = vrcp.pop %v1238
  %v1303 = vrcp.pop %v1239
  %v1304 = vrcp.pop %v1240
  %v1305 = vrcp.pop %v1241
  %v1306 = vrcp.pop %v1242
  %v1307 = vrcp.pop %v1243
  %v1308 = vrcp.pop %v1244
  %v1309 = vrcp.pop %v1245
  %v1310 = vrcp.pop %v1246
  %v1311 = vrcp.pop %v1247
  %v1312 = vrcp.pop %v1248
  %v1313 = vrcp.pop %v1249
  %v1314 = vrcp.pop %v1250
  %v1315 = vrcp.pop %v1251
  %v1316 = vrcp.pop %v1252
  %v1317 = vrcp.pop %v1253
  %v1318 = vrcp.pop %v1254
  %v1319 = vrcp.pop %v1255
  %v1320 = vrcp.pop %v1256
  %v1321 = vrcp.pop %v1257
  %v1322 = vrcp.pop %v1258
  %v1323 = vrcp.pop %v1259
  %v1324 = vrcp.pop %v1260
  %v1325 = vrcp.pop %v1261
  %v1326 = vrcp.pop %v1262
  %v1327 = vrcp.pop %v1263
  %v1328 = vrcp.pop %v1264
  %v1329 = vrcp.pop %v1265
  %v1330 = vrcp.pop %v1266
  %v1331 = vrcp.pop %v1267
  %v1332 = vrcp.pop %v1268
  %v1333 = vrcp.pop %v1269
  %v1334 = vrcp.pop %v1270
  %v1335 = vrcp.pop %v1271
  %v1336 = vrcp.pop %v1272
  %v1337 = vrcp.pop %v1273
  %v1338 = vrcp.pop %v1274
  %v1339 = vrcp.pop %v1275
  %v1340 = vrcp.pop %v1276
  %v1341 = vrcp.pop %v1277
  %v1342 = vrcp.pop %v1278
  %v1343 = vrcp.pop %v1279
  %v1344 = vrcp.pop %v1280
  %v1345 = vmul.f32 %v1281, %v1281
  %v1346 = vmul.f32 %v1282, %v1282
  %v1347 = vmul.f32 %v1283, %v1283
  %v1348 = vmul.f32 %v1284, %v1284
  %v1349 = vmul.f32 %v1285, %v1285
  %v1350 = vmul.f32 %v1286, %v1286
  %v1351 = vmul.f32 %v1287, %v1287
  %v1352 = vmul.f32 %v1288, %v1288
  %v1353 = vmul.f32 %v1289, %v1289
  %v1354 = vmul.f32 %v1290, %v1290
  %v1355 = vmul.f32 %v1291, %v1291
  %v1356 = vmul.f32 %v1292, %v1292
  %v1357 = vmul.f32 %v1293, %v1293
  %v1358 = vmul.f32 %v1294, %v1294
  %v1359 = vmul.f32 %v1295, %v1295
  %v1360 = vmul.f32 %v1296, %v1296
  %v1361 = vmul.f32 %v1297, %v1297
  %v1362 = vmul.f32 %v1298, %v1298
  %v1363 = vmul.f32 %v1299, %v1299
  %v1364 = vmul.f32 %v1300, %v1300
  %v1365 = vmul.f32 %v1301, %v1301
  %v1366 = vmul.f32 %v1302, %v1302
  %v1367 = vmul.f32 %v1303, %v1303
  %v1368 = vmul.f32 %v1304, %v1304
  %v1369 = vmul.f32 %v1305, %v1305
  %v1370 = vmul.f32 %v1306, %v1306
  %v1371 = vmul.f32 %v1307, %v1307
  %v1372 = vmul.f32 %v1308, %v1308
  %v1373 = vmul.f32 %v1309, %v1309
  %v1374 = vmul.f32 %v1310, %v1310
  %v1375 = vmul.f32 %v1311, %v1311
  %v1376 = vmul.f32 %v1312, %v1312
  %v1377 = vmul.f32 %v1313, %v1313
  %v1378 = vmul.f32 %v1314, %v1314
  %v1379 = vmul.f32 %v1315, %v1315
  %v1380 = vmul.f32 %v1316, %v1316
  %v1381 = vmul.f32 %v1317, %v1317
  %v1382 = vmul.f32 %v1318, %v1318
  %v1383 = vmul.f32 %v1319, %v1319
  %v1384 = vmul.f32 %v1320, %v1320
  %v1385 = vmul.f32 %v1321, %v1321
  %v1386 = vmul.f32 %v1322, %v1322
  %v1387 = vmul.f32 %v1323, %v1323
  %v1388 = vmul.f32 %v1324, %v1324
  %v1389 = vmul.f32 %v1325, %v1325
  %v1390 = vmul.f32 %v1326, %v1326
  %v1391 = vmul.f32 %v1327, %v1327
  %v1392 = vmul.f32 %v1328, %v1328
  %v1393 = vmul.f32 %v1329, %v1329
  %v1394 = vmul.f32 %v1330, %v1330
  %v1395 = vmul.f32 %v1331, %v1331
  %v1396 = vmul.f32 %v1332, %v1332
  %v1397 = vmul.f32 %v1333, %v1333
  %v1398 = vmul.f32 %v1334, %v1334
  %v1399 = vmul.f32 %v1335, %v1335
  %v1400 = vmul.f32 %v1336, %v1336
  %v1401 = vmul.f32 %v1337, %v1337
  %v1402 = vmul.f32 %v1338, %v1338
  %v1403 = vmul.f32 %v1339, %v1339
  %v1404 = vmul.f32 %v1340, %v1340
  %v1405 = vmul.f32 %v1341, %v1341
  %v1406 = vmul.f32 %v1342, %v1342
  %v1407 = vmul.f32 %v1343, %v1343
  %v1408 = vmul.f32 %v1344, %v1344
  %v1409 = vmul.f32 %v1345, %v1281
  %v1410 = vmul.f32 %v1346, %v1282
  %v1411 = vmul.f32 %v1347, %v1283
  %v1412 = vmul.f32 %v1348, %v1284
  %v1413 = vmul.f32 %v1349, %v1285
  %v1414 = vmul.f32 %v1350, %v1286
  %v1415 = vmul.f32 %v1351, %v1287
  %v1416 = vmul.f32 %v1352, %v1288
  %v1417 = vmul.f32 %v1353, %v1289
  %v1418 = vmul.f32 %v1354, %v1290
  %v1419 = vmul.f32 %v1355, %v1291
  %v1420 = vmul.f32 %v1356, %v1292
  %v1421 = vmul.f32 %v1357, %v1293
  %v1422 = vmul.f32 %v1358, %v1294
  %v1423 = vmul.f32 %v1359, %v1295
  %v1424 = vmul.f32 %v1360, %v1296
  %v1425 = vmul.f32 %v1361, %v1297
  %v1426 = vmul.f32 %v1362, %v1298
  %v1427 = vmul.f32 %v1363, %v1299
  %v1428 = vmul.f32 %v1364, %v1300
  %v1429 = vmul.f32 %v1365, %v1301
  %v1430 = vmul.f32 %v1366, %v1302
  %v1431 = vmul.f32 %v1367, %v1303
  %v1432 = vmul.f32 %v1368, %v1304
  %v1433 = vmul.f32 %v1369, %v1305
  %v1434 = vmul.f32 %v1370, %v1306
  %v1435 = vmul.f32 %v1371, %v1307
  %v1436 = vmul.f32 %v1372, %v1308
  %v1437 = vmul.f32 %v1373, %v1309
  %v1438 = vmul.f32 %v1374, %v1310
  %v1439 = vmul.f32 %v1375, %v1311
  %v1440 = vmul.f32 %v1376, %v1312
  %v1441 = vmul.f32 %v1377, %v1313
  %v1442 = vmul.f32 %v1378, %v1314
  %v1443 = vmul.f32 %v1379, %v1315
  %v1444 = vmul.f32 %v1380, %v1316
  %v1445 = vmul.f32 %v1381, %v1317
  %v1446 = vmul.f32 %v1382, %v1318
  %v1447 = vmul.f32 %v1383, %v1319
  %v1448 = vmul.f32 %v1384, %v1320
  %v1449 = vmul.f32 %v1385, %v1321
  %v1450 = vmul.f32 %v1386, %v1322
  %v1451 = vmul.f32 %v1387, %v1323
  %v1452 = vmul.f32 %v1388, %v1324
  %v1453 = vmul.f32 %v1389, %v1325
  %v1454 = vmul.f32 %v1390, %v1326
  %v1455 = vmul.f32 %v1391, %v1327
  %v1456 = vmul.f32 %v1392, %v1328
  %v1457 = vmul.f32 %v1393, %v1329
  %v1458 = vmul.f32 %v1394, %v1330
  %v1459 = vmul.f32 %v1395, %v1331
  %v1460 = vmul.f32 %v1396, %v1332
  %v1461 = vmul.f32 %v1397, %v1333
  %v1462 = vmul.f32 %v1398, %v1334
  %v1463 = vmul.f32 %v1399, %v1335
  %v1464 = vmul.f32 %v1400, %v1336
  %v1465 = vmul.f32 %v1401, %v1337
  %v1466 = vmul.f32 %v1402, %v1338
  %v1467 = vmul.f32 %v1403, %v1339
  %v1468 = vmul.f32 %v1404, %v1340
  %v1469 = vmul.f32 %v1405, %v1341
  %v1470 = vmul.f32 %v1406, %v1342
  %v1471 = vmul.f32 %v1407, %v1343
  %v1472 = vmul.f32 %v1408, %v1344
  %v1473 = vmul.f32 %v1409, %v1409
  %v1474 = vmul.f32 %v1410, %v1410
  %v1475 = vmul.f32 %v1411, %v1411
  %v1476 = vmul.f32 %v1412, %v1412
  %v1477 = vmul.f32 %v1413, %v1413
  %v1478 = vmul.f32 %v1414, %v1414
  %v1479 = vmul.f32 %v1415, %v1415
  %v1480 = vmul.f32 %v1416, %v1416
  %v1481 = vmul.f32 %v1417, %v1417
  %v1482 = vmul.f32 %v1418, %v1418
  %v1483 = vmul.f32 %v1419, %v1419
  %v1484 = vmul.f32 %v1420, %v1420
  %v1485 = vmul.f32 %v1421, %v1421
  %v1486 = vmul.f32 %v1422, %v1422
  %v1487 = vmul.f32 %v1423, %v1423
  %v1488 = vmul.f32 %v1424, %v1424
  %v1489 = vmul.f32 %v1425, %v1425
  %v1490 = vmul.f32 %v1426, %v1426
  %v1491 = vmul.f32 %v1427, %v1427
  %v1492 = vmul.f32 %v1428, %v1428
  %v1493 = vmul.f32 %v1429, %v1429
  %v1494 = vmul.f32 %v1430, %v1430
  %v1495 = vmul.f32 %v1431, %v1431
  %v1496 = vmul.f32 %v1432, %v1432
  %v1497 = vmul.f32 %v1433, %v1433
  %v1498 = vmul.f32 %v1434, %v1434
  %v1499 = vmul.f32 %v1435, %v1435
  %v1500 = vmul.f32 %v1436, %v1436
  %v1501 = vmul.f32 %v1437, %v1437
  %v1502 = vmul.f32 %v1438, %v1438
  %v1503 = vmul.f32 %v1439, %v1439
  %v1504 = vmul.f32 %v1440, %v1440
  %v1505 = vmul.f32 %v1441, %v1441
  %v1506 = vmul.f32 %v1442, %v1442
  %v1507 = vmul.f32 %v1443, %v1443
  %v1508 = vmul.f32 %v1444, %v1444
  %v1509 = vmul.f32 %v1445, %v1445
  %v1510 = vmul.f32 %v1446, %v1446
  %v1511 = vmul.f32 %v1447, %v1447
  %v1512 = vmul.f32 %v1448, %v1448
  %v1513 = vmul.f32 %v1449, %v1449
  %v1514 = vmul.f32 %v1450, %v1450
  %v1515 = vmul.f32 %v1451, %v1451
  %v1516 = vmul.f32 %v1452, %v1452
  %v1517 = vmul.f32 %v1453, %v1453
  %v1518 = vmul.f32 %v1454, %v1454
  %v1519 = vmul.f32 %v1455, %v1455
  %v1520 = vmul.f32 %v1456, %v1456
  %v1521 = vmul.f32 %v1457, %v1457
  %v1522 = vmul.f32 %v1458, %v1458
  %v1523 = vmul.f32 %v1459, %v1459
  %v1524 = vmul.f32 %v1460, %v1460
  %v1525 = vmul.f32 %v1461, %v1461
  %v1526 = vmul.f32 %v1462, %v1462
  %v1527 = vmul.f32 %v1463, %v1463
  %v1528 = vmul.f32 %v1464, %v1464
  %v1529 = vmul.f32 %v1465, %v1465
  %v1530 = vmul.f32 %v1466, %v1466
  %v1531 = vmul.f32 %v1467, %v1467
  %v1532 = vmul.f32 %v1468, %v1468
  %v1533 = vmul.f32 %v1469, %v1469
  %v1534 = vmul.f32 %v1470, %v1470
  %v1535 = vmul.f32 %v1471, %v1471
  %v1536 = vmul.f32 %v1472, %v1472
  %v1537 = vmul.f32 %v320, %v1473
  %v1538 = vmul.f32 %v321, %v1474
  %v1539 = vmul.f32 %v322, %v1475
  %v1540 = vmul.f32 %v323, %v1476
  %v1541 = vmul.f32 %v324, %v1477
  %v1542 = vmul.f32 %v325, %v1478
  %v1543 = vmul.f32 %v326, %v1479
  %v1544 = vmul.f32 %v327, %v1480
  %v1545 = vmul.f32 %v328, %v1481
  %v1546 = vmul.f32 %v329, %v1482
  %v1547 = vmul.f32 %v330, %v1483
  %v1548 = vmul.f32 %v331, %v1484
  %v1549 = vmul.f32 %v332, %v1485
  %v1550 = vmul.f32 %v333, %v1486
  %v1551 = vmul.f32 %v334, %v1487
  %v1552 = vmul.f32 %v335, %v1488
  %v1553 = vmul.f32 %v336, %v1489
  %v1554 = vmul.f32 %v337, %v1490
  %v1555 = vmul.f32 %v338, %v1491
  %v1556 = vmul.f32 %v339, %v1492
  %v1557 = vmul.f32 %v340, %v1493
  %v1558 = vmul.f32 %v341, %v1494
  %v1559 = vmul.f32 %v342, %v1495
  %v1560 = vmul.f32 %v343, %v1496
  %v1561 = vmul.f32 %v344, %v1497
  %v1562 = vmul.f32 %v345, %v1498
  %v1563 = vmul.f32 %v346, %v1499
  %v1564 = vmul.f32 %v347, %v1500
  %v1565 = vmul.f32 %v348, %v1501
  %v1566 = vmul.f32 %v349, %v1502
  %v1567 = vmul.f32 %v350, %v1503
  %v1568 = vmul.f32 %v351, %v1504
  %v1569 = vmul.f32 %v352, %v1505
  %v1570 = vmul.f32 %v353, %v1506
  %v1571 = vmul.f32 %v354, %v1507
  %v1572 = vmul.f32 %v355, %v1508
  %v1573 = vmul.f32 %v356, %v1509
  %v1574 = vmul.f32 %v357, %v1510
  %v1575 = vmul.f32 %v358, %v1511
  %v1576 = vmul.f32 %v359, %v1512
  %v1577 = vmul.f32 %v360, %v1513
  %v1578 = vmul.f32 %v361, %v1514
  %v1579 = vmul.f32 %v362, %v1515
  %v1580 = vmul.f32 %v363, %v1516
  %v1581 = vmul.f32 %v364, %v1517
  %v1582 = vmul.f32 %v365, %v1518
  %v1583 = vmul.f32 %v366, %v1519
  %v1584 = vmul.f32 %v367, %v1520
  %v1585 = vmul.f32 %v368, %v1521
  %v1586 = vmul.f32 %v369, %v1522
  %v1587 = vmul.f32 %v370, %v1523
  %v1588 = vmul.f32 %v371, %v1524
  %v1589 = vmul.f32 %v372, %v1525
  %v1590 = vmul.f32 %v373, %v1526
  %v1591 = vmul.f32 %v374, %v1527
  %v1592 = vmul.f32 %v375, %v1528
  %v1593 = vmul.f32 %v376, %v1529
  %v1594 = vmul.f32 %v377, %v1530
  %v1595 = vmul.f32 %v378, %v1531
  %v1596 = vmul.f32 %v379, %v1532
  %v1597 = vmul.f32 %v380, %v1533
  %v1598 = vmul.f32 %v381, %v1534
  %v1599 = vmul.f32 %v382, %v1535
  %v1600 = vmul.f32 %v383, %v1536
  %v1601 = vmul.f32 %v255, %v1409
  %v1602 = vmul.f32 %v256, %v1410
  %v1603 = vmul.f32 %v257, %v1411
  %v1604 = vmul.f32 %v258, %v1412
  %v1605 = vmul.f32 %v259, %v1413
  %v1606 = vmul.f32 %v260, %v1414
  %v1607 = vmul.f32 %v261, %v1415
  %v1608 = vmul.f32 %v262, %v1416
  %v1609 = vmul.f32 %v263, %v1417
  %v1610 = vmul.f32 %v264, %v1418
  %v1611 = vmul.f32 %v265, %v1419
  %v1612 = vmul.f32 %v266, %v1420
  %v1613 = vmul.f32 %v267, %v1421
  %v1614 = vmul.f32 %v268, %v1422
  %v1615 = vmul.f32 %v269, %v1423
  %v1616 = vmul.f32 %v270, %v1424
  %v1617 = vmul.f32 %v271, %v1425
  %v1618 = vmul.f32 %v272, %v1426
  %v1619 = vmul.f32 %v273, %v1427
  %v1620 = vmul.f32 %v274, %v1428
  %v1621 = vmul.f32 %v275, %v1429
  %v1622 = vmul.f32 %v276, %v1430
  %v1623 = vmul.f32 %v277, %v1431
  %v1624 = vmul.f32 %v278, %v1432
  %v1625 = vmul.f32 %v279, %v1433
  %v1626 = vmul.f32 %v280, %v1434
  %v1627 = vmul.f32 %v281, %v1435
  %v1628 = vmul.f32 %v282, %v1436
  %v1629 = vmul.f32 %v283, %v1437
  %v1630 = vmul.f32 %v284, %v1438
  %v1631 = vmul.f32 %v285, %v1439
  %v1632 = vmul.f32 %v286, %v1440
  %v1633 = vmul.f32 %v287, %v1441
  %v1634 = vmul.f32 %v288, %v1442
  %v1635 = vmul.f32 %v289, %v1443
  %v1636 = vmul.f32 %v290, %v1444
  %v1637 = vmul.f32 %v291, %v1445
  %v1638 = vmul.f32 %v292, %v1446
  %v1639 = vmul.f32 %v293, %v1447
  %v1640 = vmul.f32 %v294, %v1448
  %v1641 = vmul.f32 %v295, %v1449
  %v1642 = vmul.f32 %v296, %v1450
  %v1643 = vmul.f32 %v297, %v1451
  %v1644 = vmul.f32 %v298, %v1452
  %v1645 = vmul.f32 %v299, %v1453
  %v1646 = vmul.f32 %v300, %v1454
  %v1647 = vmul.f32 %v301, %v1455
  %v1648 = vmul.f32 %v302, %v1456
  %v1649 = vmul.f32 %v303, %v1457
  %v1650 = vmul.f32 %v304, %v1458
  %v1651 = vmul.f32 %v305, %v1459
  %v1652 = vmul.f32 %v306, %v1460
  %v1653 = vmul.f32 %v307, %v1461
  %v1654 = vmul.f32 %v308, %v1462
  %v1655 = vmul.f32 %v309, %v1463
  %v1656 = vmul.f32 %v310, %v1464
  %v1657 = vmul.f32 %v311, %v1465
  %v1658 = vmul.f32 %v312, %v1466
  %v1659 = vmul.f32 %v313, %v1467
  %v1660 = vmul.f32 %v314, %v1468
  %v1661 = vmul.f32 %v315, %v1469
  %v1662 = vmul.f32 %v316, %v1470
  %v1663 = vmul.f32 %v317, %v1471
  %v1664 = vmul.f32 %v318, %v1472
  %v1665 = vsub.f32 %v1537, %v1601
  %v1666 = vsub.f32 %v1538, %v1602
  %v1667 = vsub.f32 %v1539, %v1603
  %v1668 = vsub.f32 %v1540, %v1604
  %v1669 = vsub.f32 %v1541, %v1605
  %v1670 = vsub.f32 %v1542, %v1606
  %v1671 = vsub.f32 %v1543, %v1607
  %v1672 = vsub.f32 %v1544, %v1608
  %v1673 = vsub.f32 %v1545, %v1609
  %v1674 = vsub.f32 %v1546, %v1610
  %v1675 = vsub.f32 %v1547, %v1611
  %v1676 = vsub.f32 %v1548, %v1612
  %v1677 = vsub.f32 %v1549, %v1613
  %v1678 = vsub.f32 %v1550, %v1614
  %v1679 = vsub.f32 %v1551, %v1615
  %v1680 = vsub.f32 %v1552, %v1616
  %v1681 = vsub.f32 %v1553, %v1617
  %v1682 = vsub.f32 %v1554, %v1618
  %v1683 = vsub.f32 %v1555, %v1619
  %v1684 = vsub.f32 %v1556, %v1620
  %v1685 = vsub.f32 %v1557, %v1621
  %v1686 = vsub.f32 %v1558, %v1622
  %v1687 = vsub.f32 %v1559, %v1623
  %v1688 = vsub.f32 %v1560, %v1624
  %v1689 = vsub.f32 %v1561, %v1625
  %v1690 = vsub.f32 %v1562, %v1626
  %v1691 = vsub.f32 %v1563, %v1627
  %v1692 = vsub.f32 %v1564, %v1628
  %v1693 = vsub.f32 %v1565, %v1629
  %v1694 = vsub.f32 %v1566, %v1630
  %v1695 = vsub.f32 %v1567, %v1631
  %v1696 = vsub.f32 %v1568, %v1632
  %v1697 = vsub.f32 %v1569, %v1633
  %v1698 = vsub.f32 %v1570, %v1634
  %v1699 = vsub.f32 %v1571, %v1635
  %v1700 = vsub.f32 %v1572, %v1636
  %v1701 = vsub.f32 %v1573, %v1637
  %v1702 = vsub.f32 %v1574, %v1638
  %v1703 = vsub.f32 %v1575, %v1639
  %v1704 = vsub.f32 %v1576, %v1640
  %v1705 = vsub.f32 %v1577, %v1641
  %v1706 = vsub.f32 %v1578, %v1642
  %v1707 = vsub.f32 %v1579, %v1643
  %v1708 = vsub.f32 %v1580, %v1644
  %v1709 = vsub.f32 %v1581, %v1645
  %v1710 = vsub.f32 %v1582, %v1646
  %v1711 = vsub.f32 %v1583, %v1647
  %v1712 = vsub.f32 %v1584, %v1648
  %v1713 = vsub.f32 %v1585, %v1649
  %v1714 = vsub.f32 %v1586, %v1650
  %v1715 = vsub.f32 %v1587, %v1651
  %v1716 = vsub.f32 %v1588, %v1652
  %v1717 = vsub.f32 %v1589, %v1653
  %v1718 = vsub.f32 %v1590, %v1654
  %v1719 = vsub.f32 %v1591, %v1655
  %v1720 = vsub.f32 %v1592, %v1656
  %v1721 = vsub.f32 %v1593, %v1657
  %v1722 = vsub.f32 %v1594, %v1658
  %v1723 = vsub.f32 %v1595, %v1659
  %v1724 = vsub.f32 %v1596, %v1660
  %v1725 = vsub.f32 %v1597, %v1661
  %v1726 = vsub.f32 %v1598, %v1662
  %v1727 = vsub.f32 %v1599, %v1663
  %v1728 = vsub.f32 %v1600, %v1664
  %v1729 = vmul.f32 %v1089, %v1089
  %v1730 = vmul.f32 %v1090, %v1090
  %v1731 = vmul.f32 %v1091, %v1091
  %v1732 = vmul.f32 %v1092, %v1092
  %v1733 = vmul.f32 %v1093, %v1093
  %v1734 = vmul.f32 %v1094, %v1094
  %v1735 = vmul.f32 %v1095, %v1095
  %v1736 = vmul.f32 %v1096, %v1096
  %v1737 = vmul.f32 %v1097, %v1097
  %v1738 = vmul.f32 %v1098, %v1098
  %v1739 = vmul.f32 %v1099, %v1099
  %v1740 = vmul.f32 %v1100, %v1100
  %v1741 = vmul.f32 %v1101, %v1101
  %v1742 = vmul.f32 %v1102, %v1102
  %v1743 = vmul.f32 %v1103, %v1103
  %v1744 = vmul.f32 %v1104, %v1104
  %v1745 = vmul.f32 %v1105, %v1105
  %v1746 = vmul.f32 %v1106, %v1106
  %v1747 = vmul.f32 %v1107, %v1107
  %v1748 = vmul.f32 %v1108, %v1108
  %v1749 = vmul.f32 %v1109, %v1109
  %v1750 = vmul.f32 %v1110, %v1110
  %v1751 = vmul.f32 %v1111, %v1111
  %v1752 = vmul.f32 %v1112, %v1112
  %v1753 = vmul.f32 %v1113, %v1113
  %v1754 = vmul.f32 %v1114, %v1114
  %v1755 = vmul.f32 %v1115, %v1115
  %v1756 = vmul.f32 %v1116, %v1116
  %v1757 = vmul.f32 %v1117, %v1117
  %v1758 = vmul.f32 %v1118, %v1118
  %v1759 = vmul.f32 %v1119, %v1119
  %v1760 = vmul.f32 %v1120, %v1120
  %v1761 = vmul.f32 %v1121, %v1121
  %v1762 = vmul.f32 %v1122, %v1122
  %v1763 = vmul.f32 %v1123, %v1123
  %v1764 = vmul.f32 %v1124, %v1124
  %v1765 = vmul.f32 %v1125, %v1125
  %v1766 = vmul.f32 %v1126, %v1126
  %v1767 = vmul.f32 %v1127, %v1127
  %v1768 = vmul.f32 %v1128, %v1128
  %v1769 = vmul.f32 %v1129, %v1129
  %v1770 = vmul.f32 %v1130, %v1130
  %v1771 = vmul.f32 %v1131, %v1131
  %v1772 = vmul.f32 %v1132, %v1132
  %v1773 = vmul.f32 %v1133, %v1133
  %v1774 = vmul.f32 %v1134, %v1134
  %v1775 = vmul.f32 %v1135, %v1135
  %v1776 = vmul.f32 %v1136, %v1136
  %v1777 = vmul.f32 %v1137, %v1137
  %v1778 = vmul.f32 %v1138, %v1138
  %v1779 = vmul.f32 %v1139, %v1139
  %v1780 = vmul.f32 %v1140, %v1140
  %v1781 = vmul.f32 %v1141, %v1141
  %v1782 = vmul.f32 %v1142, %v1142
  %v1783 = vmul.f32 %v1143, %v1143
  %v1784 = vmul.f32 %v1144, %v1144
  %v1785 = vmul.f32 %v1145, %v1145
  %v1786 = vmul.f32 %v1146, %v1146
  %v1787 = vmul.f32 %v1147, %v1147
  %v1788 = vmul.f32 %v1148, %v1148
  %v1789 = vmul.f32 %v1149, %v1149
  %v1790 = vmul.f32 %v1150, %v1150
  %v1791 = vmul.f32 %v1151, %v1151
  %v1792 = vmul.f32 %v1152, %v1152
  %v1793 = vmul.f32 %v320, %v1729
  %v1794 = vmul.f32 %v321, %v1730
  %v1795 = vmul.f32 %v322, %v1731
  %v1796 = vmul.f32 %v323, %v1732
  %v1797 = vmul.f32 %v324, %v1733
  %v1798 = vmul.f32 %v325, %v1734
  %v1799 = vmul.f32 %v326, %v1735
  %v1800 = vmul.f32 %v327, %v1736
  %v1801 = vmul.f32 %v328, %v1737
  %v1802 = vmul.f32 %v329, %v1738
  %v1803 = vmul.f32 %v330, %v1739
  %v1804 = vmul.f32 %v331, %v1740
  %v1805 = vmul.f32 %v332, %v1741
  %v1806 = vmul.f32 %v333, %v1742
  %v1807 = vmul.f32 %v334, %v1743
  %v1808 = vmul.f32 %v335, %v1744
  %v1809 = vmul.f32 %v336, %v1745
  %v1810 = vmul.f32 %v337, %v1746
  %v1811 = vmul.f32 %v338, %v1747
  %v1812 = vmul.f32 %v339, %v1748
  %v1813 = vmul.f32 %v340, %v1749
  %v1814 = vmul.f32 %v341, %v1750
  %v1815 = vmul.f32 %v342, %v1751
  %v1816 = vmul.f32 %v343, %v1752
  %v1817 = vmul.f32 %v344, %v1753
  %v1818 = vmul.f32 %v345, %v1754
  %v1819 = vmul.f32 %v346, %v1755
  %v1820 = vmul.f32 %v347, %v1756
  %v1821 = vmul.f32 %v348, %v1757
  %v1822 = vmul.f32 %v349, %v1758
  %v1823 = vmul.f32 %v350, %v1759
  %v1824 = vmul.f32 %v351, %v1760
  %v1825 = vmul.f32 %v352, %v1761
  %v1826 = vmul.f32 %v353, %v1762
  %v1827 = vmul.f32 %v354, %v1763
  %v1828 = vmul.f32 %v355, %v1764
  %v1829 = vmul.f32 %v356, %v1765
  %v1830 = vmul.f32 %v357, %v1766
  %v1831 = vmul.f32 %v358, %v1767
  %v1832 = vmul.f32 %v359, %v1768
  %v1833 = vmul.f32 %v360, %v1769
  %v1834 = vmul.f32 %v361, %v1770
  %v1835 = vmul.f32 %v362, %v1771
  %v1836 = vmul.f32 %v363, %v1772
  %v1837 = vmul.f32 %v364, %v1773
  %v1838 = vmul.f32 %v365, %v1774
  %v1839 = vmul.f32 %v366, %v1775
  %v1840 = vmul.f32 %v367, %v1776
  %v1841 = vmul.f32 %v368, %v1777
  %v1842 = vmul.f32 %v369, %v1778
  %v1843 = vmul.f32 %v370, %v1779
  %v1844 = vmul.f32 %v371, %v1780
  %v1845 = vmul.f32 %v372, %v1781
  %v1846 = vmul.f32 %v373, %v1782
  %v1847 = vmul.f32 %v374, %v1783
  %v1848 = vmul.f32 %v375, %v1784
  %v1849 = vmul.f32 %v376, %v1785
  %v1850 = vmul.f32 %v377, %v1786
  %v1851 = vmul.f32 %v378, %v1787
  %v1852 = vmul.f32 %v379, %v1788
  %v1853 = vmul.f32 %v380, %v1789
  %v1854 = vmul.f32 %v381, %v1790
  %v1855 = vmul.f32 %v382, %v1791
  %v1856 = vmul.f32 %v383, %v1792
  %v1857 = vmul.f32 %v255, %v1089
  %v1858 = vmul.f32 %v256, %v1090
  %v1859 = vmul.f32 %v257, %v1091
  %v1860 = vmul.f32 %v258, %v1092
  %v1861 = vmul.f32 %v259, %v1093
  %v1862 = vmul.f32 %v260, %v1094
  %v1863 = vmul.f32 %v261, %v1095
  %v1864 = vmul.f32 %v262, %v1096
  %v1865 = vmul.f32 %v263, %v1097
  %v1866 = vmul.f32 %v264, %v1098
  %v1867 = vmul.f32 %v265, %v1099
  %v1868 = vmul.f32 %v266, %v1100
  %v1869 = vmul.f32 %v267, %v1101
  %v1870 = vmul.f32 %v268, %v1102
  %v1871 = vmul.f32 %v269, %v1103
  %v1872 = vmul.f32 %v270, %v1104
  %v1873 = vmul.f32 %v271, %v1105
  %v1874 = vmul.f32 %v272, %v1106
  %v1875 = vmul.f32 %v273, %v1107
  %v1876 = vmul.f32 %v274, %v1108
  %v1877 = vmul.f32 %v275, %v1109
  %v1878 = vmul.f32 %v276, %v1110
  %v1879 = vmul.f32 %v277, %v1111
  %v1880 = vmul.f32 %v278, %v1112
  %v1881 = vmul.f32 %v279, %v1113
  %v1882 = vmul.f32 %v280, %v1114
  %v1883 = vmul.f32 %v281, %v1115
  %v1884 = vmul.f32 %v282, %v1116
  %v1885 = vmul.f32 %v283, %v1117
  %v1886 = vmul.f32 %v284, %v1118
  %v1887 = vmul.f32 %v285, %v1119
  %v1888 = vmul.f32 %v286, %v1120
  %v1889 = vmul.f32 %v287, %v1121
  %v1890 = vmul.f32 %v288, %v1122
  %v1891 = vmul.f32 %v289, %v1123
  %v1892 = vmul.f32 %v290, %v1124
  %v1893 = vmul.f32 %v291, %v1125
  %v1894 = vmul.f32 %v292, %v1126
  %v1895 = vmul.f32 %v293, %v1127
  %v1896 = vmul.f32 %v294, %v1128
  %v1897 = vmul.f32 %v295, %v1129
  %v1898 = vmul.f32 %v296, %v1130
  %v1899 = vmul.f32 %v297, %v1131
  %v1900 = vmul.f32 %v298, %v1132
  %v1901 = vmul.f32 %v299, %v1133
  %v1902 = vmul.f32 %v300, %v1134
  %v1903 = vmul.f32 %v301, %v1135
  %v1904 = vmul.f32 %v302, %v1136
  %v1905 = vmul.f32 %v303, %v1137
  %v1906 = vmul.f32 %v304, %v1138
  %v1907 = vmul.f32 %v305, %v1139
  %v1908 = vmul.f32 %v306, %v1140
  %v1909 = vmul.f32 %v307, %v1141
  %v1910 = vmul.f32 %v308, %v1142
  %v1911 = vmul.f32 %v309, %v1143
  %v1912 = vmul.f32 %v310, %v1144
  %v1913 = vmul.f32 %v311, %v1145
  %v1914 = vmul.f32 %v312, %v1146
  %v1915 = vmul.f32 %v313, %v1147
  %v1916 = vmul.f32 %v314, %v1148
  %v1917 = vmul.f32 %v315, %v1149
  %v1918 = vmul.f32 %v316, %v1150
  %v1919 = vmul.f32 %v317, %v1151
  %v1920 = vmul.f32 %v318, %v1152
  %v1921 = vsub.f32 %v1793, %v1857
  %v1922 = vsub.f32 %v1794, %v1858
  %v1923 = vsub.f32 %v1795, %v1859
  %v1924 = vsub.f32 %v1796, %v1860
  %v1925 = vsub.f32 %v1797, %v1861
  %v1926 = vsub.f32 %v1798, %v1862
  %v1927 = vsub.f32 %v1799, %v1863
  %v1928 = vsub.f32 %v1800, %v1864
  %v1929 = vsub.f32 %v1801, %v1865
  %v1930 = vsub.f32 %v1802, %v1866
  %v1931 = vsub.f32 %v1803, %v1867
  %v1932 = vsub.f32 %v1804, %v1868
  %v1933 = vsub.f32 %v1805, %v1869
  %v1934 = vsub.f32 %v1806, %v1870
  %v1935 = vsub.f32 %v1807, %v1871
  %v1936 = vsub.f32 %v1808, %v1872
  %v1937 = vsub.f32 %v1809, %v1873
  %v1938 = vsub.f32 %v1810, %v1874
  %v1939 = vsub.f32 %v1811, %v1875
  %v1940 = vsub.f32 %v1812, %v1876
  %v1941 = vsub.f32 %v1813, %v1877
  %v1942 = vsub.f32 %v1814, %v1878
  %v1943 = vsub.f32 %v1815, %v1879
  %v1944 = vsub.f32 %v1816, %v1880
  %v1945 = vsub.f32 %v1817, %v1881
  %v1946 = vsub.f32 %v1818, %v1882
  %v1947 = vsub.f32 %v1819, %v1883
  %v1948 = vsub.f32 %v1820, %v1884
  %v1949 = vsub.f32 %v1821, %v1885
  %v1950 = vsub.f32 %v1822, %v1886
  %v1951 = vsub.f32 %v1823, %v1887
  %v1952 = vsub.f32 %v1824, %v1888
  %v1953 = vsub.f32 %v1825, %v1889
  %v1954 = vsub.f32 %v1826, %v1890
  %v1955 = vsub.f32 %v1827, %v1891
  %v1956 = vsub.f32 %v1828, %v1892
  %v1957 = vsub.f32 %v1829, %v1893
  %v1958 = vsub.f32 %v1830, %v1894
  %v1959 = vsub.f32 %v1831, %v1895
  %v1960 = vsub.f32 %v1832, %v1896
  %v1961 = vsub.f32 %v1833, %v1897
  %v1962 = vsub.f32 %v1834, %v1898
  %v1963 = vsub.f32 %v1835, %v1899
  %v1964 = vsub.f32 %v1836, %v1900
  %v1965 = vsub.f32 %v1837, %v1901
  %v1966 = vsub.f32 %v1838, %v1902
  %v1967 = vsub.f32 %v1839, %v1903
  %v1968 = vsub.f32 %v1840, %v1904
  %v1969 = vsub.f32 %v1841, %v1905
  %v1970 = vsub.f32 %v1842, %v1906
  %v1971 = vsub.f32 %v1843, %v1907
  %v1972 = vsub.f32 %v1844, %v1908
  %v1973 = vsub.f32 %v1845, %v1909
  %v1974 = vsub.f32 %v1846, %v1910
  %v1975 = vsub.f32 %v1847, %v1911
  %v1976 = vsub.f32 %v1848, %v1912
  %v1977 = vsub.f32 %v1849, %v1913
  %v1978 = vsub.f32 %v1850, %v1914
  %v1979 = vsub.f32 %v1851, %v1915
  %v1980 = vsub.f32 %v1852, %v1916
  %v1981 = vsub.f32 %v1853, %v1917
  %v1982 = vsub.f32 %v1854, %v1918
  %v1983 = vsub.f32 %v1855, %v1919
  %v1984 = vsub.f32 %v1856, %v1920
  %v1985 = vsub.f32 %v1921, %v1665
  %v1986 = vsub.f32 %v1922, %v1666
  %v1987 = vsub.f32 %v1923, %v1667
  %v1988 = vsub.f32 %v1924, %v1668
  %v1989 = vsub.f32 %v1925, %v1669
  %v1990 = vsub.f32 %v1926, %v1670
  %v1991 = vsub.f32 %v1927, %v1671
  %v1992 = vsub.f32 %v1928, %v1672
  %v1993 = vsub.f32 %v1929, %v1673
  %v1994 = vsub.f32 %v1930, %v1674
  %v1995 = vsub.f32 %v1931, %v1675
  %v1996 = vsub.f32 %v1932, %v1676
  %v1997 = vsub.f32 %v1933, %v1677
  %v1998 = vsub.f32 %v1934, %v1678
  %v1999 = vsub.f32 %v1935, %v1679
  %v2000 = vsub.f32 %v1936, %v1680
  %v2001 = vsub.f32 %v1937, %v1681
  %v2002 = vsub.f32 %v1938, %v1682
  %v2003 = vsub.f32 %v1939, %v1683
  %v2004 = vsub.f32 %v1940, %v1684
  %v2005 = vsub.f32 %v1941, %v1685
  %v2006 = vsub.f32 %v1942, %v1686
  %v2007 = vsub.f32 %v1943, %v1687
  %v2008 = vsub.f32 %v1944, %v1688
  %v2009 = vsub.f32 %v1945, %v1689
  %v2010 = vsub.f32 %v1946, %v1690
  %v2011 = vsub.f32 %v1947, %v1691
  %v2012 = vsub.f32 %v1948, %v1692
  %v2013 = vsub.f32 %v1949, %v1693
  %v2014 = vsub.f32 %v1950, %v1694
  %v2015 = vsub.f32 %v1951, %v1695
  %v2016 = vsub.f32 %v1952, %v1696
  %v2017 = vsub.f32 %v1953, %v1697
  %v2018 = vsub.f32 %v1954, %v1698
  %v2019 = vsub.f32 %v1955, %v1699
  %v2020 = vsub.f32 %v1956, %v1700
  %v2021 = vsub.f32 %v1957, %v1701
  %v2022 = vsub.f32 %v1958, %v1702
  %v2023 = vsub.f32 %v1959, %v1703
  %v2024 = vsub.f32 %v1960, %v1704
  %v2025 = vsub.f32 %v1961, %v1705
  %v2026 = vsub.f32 %v1962, %v1706
  %v2027 = vsub.f32 %v1963, %v1707
  %v2028 = vsub.f32 %v1964, %v1708
  %v2029 = vsub.f32 %v1965, %v1709
  %v2030 = vsub.f32 %v1966, %v1710
  %v2031 = vsub.f32 %v1967, %v1711
  %v2032 = vsub.f32 %v1968, %v1712
  %v2033 = vsub.f32 %v1969, %v1713
  %v2034 = vsub.f32 %v1970, %v1714
  %v2035 = vsub.f32 %v1971, %v1715
  %v2036 = vsub.f32 %v1972, %v1716
  %v2037 = vsub.f32 %v1973, %v1717
  %v2038 = vsub.f32 %v1974, %v1718
  %v2039 = vsub.f32 %v1975, %v1719
  %v2040 = vsub.f32 %v1976, %v1720
  %v2041 = vsub.f32 %v1977, %v1721
  %v2042 = vsub.f32 %v1978, %v1722
  %v2043 = vsub.f32 %v1979, %v1723
  %v2044 = vsub.f32 %v1980, %v1724
  %v2045 = vsub.f32 %v1981, %v1725
  %v2046 = vsub.f32 %v1982, %v1726
  %v2047 = vsub.f32 %v1983, %v1727
  %v2048 = vsub.f32 %v1984, %v1728
  %v2049 = vsel %vm769, %v1985, 0.0
  %v2050 = vsel %vm770, %v1986, 0.0
  %v2051 = vsel %vm771, %v1987, 0.0
  %v2052 = vsel %vm772, %v1988, 0.0
  %v2053 = vsel %vm773, %v1989, 0.0
  %v2054 = vsel %vm774, %v1990, 0.0
  %v2055 = vsel %vm775, %v1991, 0.0
  %v2056 = vsel %vm776, %v1992, 0.0
  %v2057 = vsel %vm777, %v1993, 0.0
  %v2058 = vsel %vm778, %v1994, 0.0
  %v2059 = vsel %vm779, %v1995, 0.0
  %v2060 = vsel %vm780, %v1996, 0.0
  %v2061 = vsel %vm781, %v1997, 0.0
  %v2062 = vsel %vm782, %v1998, 0.0
  %v2063 = vsel %vm783, %v1999, 0.0
  %v2064 = vsel %vm784, %v2000, 0.0
  %v2065 = vsel %vm785, %v2001, 0.0
  %v2066 = vsel %vm786, %v2002, 0.0
  %v2067 = vsel %vm787, %v2003, 0.0
  %v2068 = vsel %vm788, %v2004, 0.0
  %v2069 = vsel %vm789, %v2005, 0.0
  %v2070 = vsel %vm790, %v2006, 0.0
  %v2071 = vsel %vm791, %v2007, 0.0
  %v2072 = vsel %vm792, %v2008, 0.0
  %v2073 = vsel %vm793, %v2009, 0.0
  %v2074 = vsel %vm794, %v2010, 0.0
  %v2075 = vsel %vm795, %v2011, 0.0
  %v2076 = vsel %vm796, %v2012, 0.0
  %v2077 = vsel %vm797, %v2013, 0.0
  %v2078 = vsel %vm798, %v2014, 0.0
  %v2079 = vsel %vm799, %v2015, 0.0
  %v2080 = vsel %vm800, %v2016, 0.0
  %v2081 = vsel %vm801, %v2017, 0.0
  %v2082 = vsel %vm802, %v2018, 0.0
  %v2083 = vsel %vm803, %v2019, 0.0
  %v2084 = vsel %vm804, %v2020, 0.0
  %v2085 = vsel %vm805, %v2021, 0.0
  %v2086 = vsel %vm806, %v2022, 0.0
  %v2087 = vsel %vm807, %v2023, 0.0
  %v2088 = vsel %vm808, %v2024, 0.0
  %v2089 = vsel %vm809, %v2025, 0.0
  %v2090 = vsel %vm810, %v2026, 0.0
  %v2091 = vsel %vm811, %v2027, 0.0
  %v2092 = vsel %vm812, %v2028, 0.0
  %v2093 = vsel %vm813, %v2029, 0.0
  %v2094 = vsel %vm814, %v2030, 0.0
  %v2095 = vsel %vm815, %v2031, 0.0
  %v2096 = vsel %vm816, %v2032, 0.0
  %v2097 = vsel %vm817, %v2033, 0.0
  %v2098 = vsel %vm818, %v2034, 0.0
  %v2099 = vsel %vm819, %v2035, 0.0
  %v2100 = vsel %vm820, %v2036, 0.0
  %v2101 = vsel %vm821, %v2037, 0.0
  %v2102 = vsel %vm822, %v2038, 0.0
  %v2103 = vsel %vm823, %v2039, 0.0
  %v2104 = vsel %vm824, %v2040, 0.0
  %v2105 = vsel %vm825, %v2041, 0.0
  %v2106 = vsel %vm826, %v2042, 0.0
  %v2107 = vsel %vm827, %v2043, 0.0
  %v2108 = vsel %vm828, %v2044, 0.0
  %v2109 = vsel %vm829, %v2045, 0.0
  %v2110 = vsel %vm830, %v2046, 0.0
  %v2111 = vsel %vm831, %v2047, 0.0
  %v2112 = vsel %vm832, %v2048, 0.0
  %v2113 = vld [vmem:[%s52] sm:$0xff]
  %v2114 = vld [vmem:[%s52 + $0x8] sm:$0xff]
  %v2115 = vld [vmem:[%s52 + $0x10] sm:$0xff]
  %v2116 = vld [vmem:[%s52 + $0x18] sm:$0xff]
  %v2117 = vld [vmem:[%s52 + $0x20] sm:$0xff]
  %v2118 = vld [vmem:[%s52 + $0x28] sm:$0xff]
  %v2119 = vld [vmem:[%s52 + $0x30] sm:$0xff]
  %v2120 = vld [vmem:[%s52 + $0x38] sm:$0xff]
  %v2121 = vld [vmem:[%s52 + $0x40] sm:$0xff]
  %v2122 = vld [vmem:[%s52 + $0x48] sm:$0xff]
  %v2123 = vld [vmem:[%s52 + $0x50] sm:$0xff]
  %v2124 = vld [vmem:[%s52 + $0x58] sm:$0xff]
  %v2125 = vld [vmem:[%s52 + $0x60] sm:$0xff]
  %v2126 = vld [vmem:[%s52 + $0x68] sm:$0xff]
  %v2127 = vld [vmem:[%s52 + $0x70] sm:$0xff]
  %v2128 = vld [vmem:[%s52 + $0x78] sm:$0xff]
  %v2129 = vld [vmem:[%s52 + $0x80] sm:$0xff]
  %v2130 = vld [vmem:[%s52 + $0x88] sm:$0xff]
  %v2131 = vld [vmem:[%s52 + $0x90] sm:$0xff]
  %v2132 = vld [vmem:[%s52 + $0x98] sm:$0xff]
  %v2133 = vld [vmem:[%s52 + $0xa0] sm:$0xff]
  %v2134 = vld [vmem:[%s52 + $0xa8] sm:$0xff]
  %v2135 = vld [vmem:[%s52 + $0xb0] sm:$0xff]
  %v2136 = vld [vmem:[%s52 + $0xb8] sm:$0xff]
  %v2137 = vld [vmem:[%s52 + $0xc0] sm:$0xff]
  %v2138 = vld [vmem:[%s52 + $0xc8] sm:$0xff]
  %v2139 = vld [vmem:[%s52 + $0xd0] sm:$0xff]
  %v2140 = vld [vmem:[%s52 + $0xd8] sm:$0xff]
  %v2141 = vld [vmem:[%s52 + $0xe0] sm:$0xff]
  %v2142 = vld [vmem:[%s52 + $0xe8] sm:$0xff]
  %v2143 = vld [vmem:[%s52 + $0xf0] sm:$0xff]
  %v2144 = vld [vmem:[%s52 + $0xf8] sm:$0xff]
  %v2145 = vld [vmem:[%s52 + $0x100] sm:$0xff]
  %v2146 = vld [vmem:[%s52 + $0x108] sm:$0xff]
  %v2147 = vld [vmem:[%s52 + $0x110] sm:$0xff]
  %v2148 = vld [vmem:[%s52 + $0x118] sm:$0xff]
  %v2149 = vld [vmem:[%s52 + $0x120] sm:$0xff]
  %v2150 = vld [vmem:[%s52 + $0x128] sm:$0xff]
  %v2151 = vld [vmem:[%s52 + $0x130] sm:$0xff]
  %v2152 = vld [vmem:[%s52 + $0x138] sm:$0xff]
  %v2153 = vld [vmem:[%s52 + $0x140] sm:$0xff]
  %v2154 = vld [vmem:[%s52 + $0x148] sm:$0xff]
  %v2155 = vld [vmem:[%s52 + $0x150] sm:$0xff]
  %v2156 = vld [vmem:[%s52 + $0x158] sm:$0xff]
  %v2157 = vld [vmem:[%s52 + $0x160] sm:$0xff]
  %v2158 = vld [vmem:[%s52 + $0x168] sm:$0xff]
  %v2159 = vld [vmem:[%s52 + $0x170] sm:$0xff]
  %v2160 = vld [vmem:[%s52 + $0x178] sm:$0xff]
  %v2161 = vld [vmem:[%s52 + $0x180] sm:$0xff]
  %v2162 = vld [vmem:[%s52 + $0x188] sm:$0xff]
  %v2163 = vld [vmem:[%s52 + $0x190] sm:$0xff]
  %v2164 = vld [vmem:[%s52 + $0x198] sm:$0xff]
  %v2165 = vld [vmem:[%s52 + $0x1a0] sm:$0xff]
  %v2166 = vld [vmem:[%s52 + $0x1a8] sm:$0xff]
  %v2167 = vld [vmem:[%s52 + $0x1b0] sm:$0xff]
  %v2168 = vld [vmem:[%s52 + $0x1b8] sm:$0xff]
  %v2169 = vld [vmem:[%s52 + $0x1c0] sm:$0xff]
  %v2170 = vld [vmem:[%s52 + $0x1c8] sm:$0xff]
  %v2171 = vld [vmem:[%s52 + $0x1d0] sm:$0xff]
  %v2172 = vld [vmem:[%s52 + $0x1d8] sm:$0xff]
  %v2173 = vld [vmem:[%s52 + $0x1e0] sm:$0xff]
  %v2174 = vld [vmem:[%s52 + $0x1e8] sm:$0xff]
  %v2175 = vld [vmem:[%s52 + $0x1f0] sm:$0xff]
  %v2176 = vld [vmem:[%s52 + $0x1f8] sm:$0xff]
  %vm2177 = vcmp.eq.s32.totalorder %v2113, 0
  %vm2178 = vcmp.eq.s32.totalorder %v2114, 0
  %vm2179 = vcmp.eq.s32.totalorder %v2115, 0
  %vm2180 = vcmp.eq.s32.totalorder %v2116, 0
  %vm2181 = vcmp.eq.s32.totalorder %v2117, 0
  %vm2182 = vcmp.eq.s32.totalorder %v2118, 0
  %vm2183 = vcmp.eq.s32.totalorder %v2119, 0
  %vm2184 = vcmp.eq.s32.totalorder %v2120, 0
  %vm2185 = vcmp.eq.s32.totalorder %v2121, 0
  %vm2186 = vcmp.eq.s32.totalorder %v2122, 0
  %vm2187 = vcmp.eq.s32.totalorder %v2123, 0
  %vm2188 = vcmp.eq.s32.totalorder %v2124, 0
  %vm2189 = vcmp.eq.s32.totalorder %v2125, 0
  %vm2190 = vcmp.eq.s32.totalorder %v2126, 0
  %vm2191 = vcmp.eq.s32.totalorder %v2127, 0
  %vm2192 = vcmp.eq.s32.totalorder %v2128, 0
  %vm2193 = vcmp.eq.s32.totalorder %v2129, 0
  %vm2194 = vcmp.eq.s32.totalorder %v2130, 0
  %vm2195 = vcmp.eq.s32.totalorder %v2131, 0
  %vm2196 = vcmp.eq.s32.totalorder %v2132, 0
  %vm2197 = vcmp.eq.s32.totalorder %v2133, 0
  %vm2198 = vcmp.eq.s32.totalorder %v2134, 0
  %vm2199 = vcmp.eq.s32.totalorder %v2135, 0
  %vm2200 = vcmp.eq.s32.totalorder %v2136, 0
  %vm2201 = vcmp.eq.s32.totalorder %v2137, 0
  %vm2202 = vcmp.eq.s32.totalorder %v2138, 0
  %vm2203 = vcmp.eq.s32.totalorder %v2139, 0
  %vm2204 = vcmp.eq.s32.totalorder %v2140, 0
  %vm2205 = vcmp.eq.s32.totalorder %v2141, 0
  %vm2206 = vcmp.eq.s32.totalorder %v2142, 0
  %vm2207 = vcmp.eq.s32.totalorder %v2143, 0
  %vm2208 = vcmp.eq.s32.totalorder %v2144, 0
  %vm2209 = vcmp.eq.s32.totalorder %v2145, 0
  %vm2210 = vcmp.eq.s32.totalorder %v2146, 0
  %vm2211 = vcmp.eq.s32.totalorder %v2147, 0
  %vm2212 = vcmp.eq.s32.totalorder %v2148, 0
  %vm2213 = vcmp.eq.s32.totalorder %v2149, 0
  %vm2214 = vcmp.eq.s32.totalorder %v2150, 0
  %vm2215 = vcmp.eq.s32.totalorder %v2151, 0
  %vm2216 = vcmp.eq.s32.totalorder %v2152, 0
  %vm2217 = vcmp.eq.s32.totalorder %v2153, 0
  %vm2218 = vcmp.eq.s32.totalorder %v2154, 0
  %vm2219 = vcmp.eq.s32.totalorder %v2155, 0
  %vm2220 = vcmp.eq.s32.totalorder %v2156, 0
  %vm2221 = vcmp.eq.s32.totalorder %v2157, 0
  %vm2222 = vcmp.eq.s32.totalorder %v2158, 0
  %vm2223 = vcmp.eq.s32.totalorder %v2159, 0
  %vm2224 = vcmp.eq.s32.totalorder %v2160, 0
  %vm2225 = vcmp.eq.s32.totalorder %v2161, 0
  %vm2226 = vcmp.eq.s32.totalorder %v2162, 0
  %vm2227 = vcmp.eq.s32.totalorder %v2163, 0
  %vm2228 = vcmp.eq.s32.totalorder %v2164, 0
  %vm2229 = vcmp.eq.s32.totalorder %v2165, 0
  %vm2230 = vcmp.eq.s32.totalorder %v2166, 0
  %vm2231 = vcmp.eq.s32.totalorder %v2167, 0
  %vm2232 = vcmp.eq.s32.totalorder %v2168, 0
  %vm2233 = vcmp.eq.s32.totalorder %v2169, 0
  %vm2234 = vcmp.eq.s32.totalorder %v2170, 0
  %vm2235 = vcmp.eq.s32.totalorder %v2171, 0
  %vm2236 = vcmp.eq.s32.totalorder %v2172, 0
  %vm2237 = vcmp.eq.s32.totalorder %v2173, 0
  %vm2238 = vcmp.eq.s32.totalorder %v2174, 0
  %vm2239 = vcmp.eq.s32.totalorder %v2175, 0
  %vm2240 = vcmp.eq.s32.totalorder %v2176, 0
  %vm2241 = vcmp.eq.s32.totalorder %v2113, 1
  %vm2242 = vcmp.eq.s32.totalorder %v2114, 1
  %vm2243 = vcmp.eq.s32.totalorder %v2115, 1
  %vm2244 = vcmp.eq.s32.totalorder %v2116, 1
  %vm2245 = vcmp.eq.s32.totalorder %v2117, 1
  %vm2246 = vcmp.eq.s32.totalorder %v2118, 1
  %vm2247 = vcmp.eq.s32.totalorder %v2119, 1
  %vm2248 = vcmp.eq.s32.totalorder %v2120, 1
  %vm2249 = vcmp.eq.s32.totalorder %v2121, 1
  %vm2250 = vcmp.eq.s32.totalorder %v2122, 1
  %vm2251 = vcmp.eq.s32.totalorder %v2123, 1
  %vm2252 = vcmp.eq.s32.totalorder %v2124, 1
  %vm2253 = vcmp.eq.s32.totalorder %v2125, 1
  %vm2254 = vcmp.eq.s32.totalorder %v2126, 1
  %vm2255 = vcmp.eq.s32.totalorder %v2127, 1
  %vm2256 = vcmp.eq.s32.totalorder %v2128, 1
  %vm2257 = vcmp.eq.s32.totalorder %v2129, 1
  %vm2258 = vcmp.eq.s32.totalorder %v2130, 1
  %vm2259 = vcmp.eq.s32.totalorder %v2131, 1
  %vm2260 = vcmp.eq.s32.totalorder %v2132, 1
  %vm2261 = vcmp.eq.s32.totalorder %v2133, 1
  %vm2262 = vcmp.eq.s32.totalorder %v2134, 1
  %vm2263 = vcmp.eq.s32.totalorder %v2135, 1
  %vm2264 = vcmp.eq.s32.totalorder %v2136, 1
  %vm2265 = vcmp.eq.s32.totalorder %v2137, 1
  %vm2266 = vcmp.eq.s32.totalorder %v2138, 1
  %vm2267 = vcmp.eq.s32.totalorder %v2139, 1
  %vm2268 = vcmp.eq.s32.totalorder %v2140, 1
  %vm2269 = vcmp.eq.s32.totalorder %v2141, 1
  %vm2270 = vcmp.eq.s32.totalorder %v2142, 1
  %vm2271 = vcmp.eq.s32.totalorder %v2143, 1
  %vm2272 = vcmp.eq.s32.totalorder %v2144, 1
  %vm2273 = vcmp.eq.s32.totalorder %v2145, 1
  %vm2274 = vcmp.eq.s32.totalorder %v2146, 1
  %vm2275 = vcmp.eq.s32.totalorder %v2147, 1
  %vm2276 = vcmp.eq.s32.totalorder %v2148, 1
  %vm2277 = vcmp.eq.s32.totalorder %v2149, 1
  %vm2278 = vcmp.eq.s32.totalorder %v2150, 1
  %vm2279 = vcmp.eq.s32.totalorder %v2151, 1
  %vm2280 = vcmp.eq.s32.totalorder %v2152, 1
  %vm2281 = vcmp.eq.s32.totalorder %v2153, 1
  %vm2282 = vcmp.eq.s32.totalorder %v2154, 1
  %vm2283 = vcmp.eq.s32.totalorder %v2155, 1
  %vm2284 = vcmp.eq.s32.totalorder %v2156, 1
  %vm2285 = vcmp.eq.s32.totalorder %v2157, 1
  %vm2286 = vcmp.eq.s32.totalorder %v2158, 1
  %vm2287 = vcmp.eq.s32.totalorder %v2159, 1
  %vm2288 = vcmp.eq.s32.totalorder %v2160, 1
  %vm2289 = vcmp.eq.s32.totalorder %v2161, 1
  %vm2290 = vcmp.eq.s32.totalorder %v2162, 1
  %vm2291 = vcmp.eq.s32.totalorder %v2163, 1
  %vm2292 = vcmp.eq.s32.totalorder %v2164, 1
  %vm2293 = vcmp.eq.s32.totalorder %v2165, 1
  %vm2294 = vcmp.eq.s32.totalorder %v2166, 1
  %vm2295 = vcmp.eq.s32.totalorder %v2167, 1
  %vm2296 = vcmp.eq.s32.totalorder %v2168, 1
  %vm2297 = vcmp.eq.s32.totalorder %v2169, 1
  %vm2298 = vcmp.eq.s32.totalorder %v2170, 1
  %vm2299 = vcmp.eq.s32.totalorder %v2171, 1
  %vm2300 = vcmp.eq.s32.totalorder %v2172, 1
  %vm2301 = vcmp.eq.s32.totalorder %v2173, 1
  %vm2302 = vcmp.eq.s32.totalorder %v2174, 1
  %vm2303 = vcmp.eq.s32.totalorder %v2175, 1
  %vm2304 = vcmp.eq.s32.totalorder %v2176, 1
  %vm2305 = vcmp.eq.s32.totalorder %v2113, 2
  %vm2306 = vcmp.eq.s32.totalorder %v2114, 2
  %vm2307 = vcmp.eq.s32.totalorder %v2115, 2
  %vm2308 = vcmp.eq.s32.totalorder %v2116, 2
  %vm2309 = vcmp.eq.s32.totalorder %v2117, 2
  %vm2310 = vcmp.eq.s32.totalorder %v2118, 2
  %vm2311 = vcmp.eq.s32.totalorder %v2119, 2
  %vm2312 = vcmp.eq.s32.totalorder %v2120, 2
  %vm2313 = vcmp.eq.s32.totalorder %v2121, 2
  %vm2314 = vcmp.eq.s32.totalorder %v2122, 2
  %vm2315 = vcmp.eq.s32.totalorder %v2123, 2
  %vm2316 = vcmp.eq.s32.totalorder %v2124, 2
  %vm2317 = vcmp.eq.s32.totalorder %v2125, 2
  %vm2318 = vcmp.eq.s32.totalorder %v2126, 2
  %vm2319 = vcmp.eq.s32.totalorder %v2127, 2
  %vm2320 = vcmp.eq.s32.totalorder %v2128, 2
  %vm2321 = vcmp.eq.s32.totalorder %v2129, 2
  %vm2322 = vcmp.eq.s32.totalorder %v2130, 2
  %vm2323 = vcmp.eq.s32.totalorder %v2131, 2
  %vm2324 = vcmp.eq.s32.totalorder %v2132, 2
  %vm2325 = vcmp.eq.s32.totalorder %v2133, 2
  %vm2326 = vcmp.eq.s32.totalorder %v2134, 2
  %vm2327 = vcmp.eq.s32.totalorder %v2135, 2
  %vm2328 = vcmp.eq.s32.totalorder %v2136, 2
  %vm2329 = vcmp.eq.s32.totalorder %v2137, 2
  %vm2330 = vcmp.eq.s32.totalorder %v2138, 2
  %vm2331 = vcmp.eq.s32.totalorder %v2139, 2
  %vm2332 = vcmp.eq.s32.totalorder %v2140, 2
  %vm2333 = vcmp.eq.s32.totalorder %v2141, 2
  %vm2334 = vcmp.eq.s32.totalorder %v2142, 2
  %vm2335 = vcmp.eq.s32.totalorder %v2143, 2
  %vm2336 = vcmp.eq.s32.totalorder %v2144, 2
  %vm2337 = vcmp.eq.s32.totalorder %v2145, 2
  %vm2338 = vcmp.eq.s32.totalorder %v2146, 2
  %vm2339 = vcmp.eq.s32.totalorder %v2147, 2
  %vm2340 = vcmp.eq.s32.totalorder %v2148, 2
  %vm2341 = vcmp.eq.s32.totalorder %v2149, 2
  %vm2342 = vcmp.eq.s32.totalorder %v2150, 2
  %vm2343 = vcmp.eq.s32.totalorder %v2151, 2
  %vm2344 = vcmp.eq.s32.totalorder %v2152, 2
  %vm2345 = vcmp.eq.s32.totalorder %v2153, 2
  %vm2346 = vcmp.eq.s32.totalorder %v2154, 2
  %vm2347 = vcmp.eq.s32.totalorder %v2155, 2
  %vm2348 = vcmp.eq.s32.totalorder %v2156, 2
  %vm2349 = vcmp.eq.s32.totalorder %v2157, 2
  %vm2350 = vcmp.eq.s32.totalorder %v2158, 2
  %vm2351 = vcmp.eq.s32.totalorder %v2159, 2
  %vm2352 = vcmp.eq.s32.totalorder %v2160, 2
  %vm2353 = vcmp.eq.s32.totalorder %v2161, 2
  %vm2354 = vcmp.eq.s32.totalorder %v2162, 2
  %vm2355 = vcmp.eq.s32.totalorder %v2163, 2
  %vm2356 = vcmp.eq.s32.totalorder %v2164, 2
  %vm2357 = vcmp.eq.s32.totalorder %v2165, 2
  %vm2358 = vcmp.eq.s32.totalorder %v2166, 2
  %vm2359 = vcmp.eq.s32.totalorder %v2167, 2
  %vm2360 = vcmp.eq.s32.totalorder %v2168, 2
  %vm2361 = vcmp.eq.s32.totalorder %v2169, 2
  %vm2362 = vcmp.eq.s32.totalorder %v2170, 2
  %vm2363 = vcmp.eq.s32.totalorder %v2171, 2
  %vm2364 = vcmp.eq.s32.totalorder %v2172, 2
  %vm2365 = vcmp.eq.s32.totalorder %v2173, 2
  %vm2366 = vcmp.eq.s32.totalorder %v2174, 2
  %vm2367 = vcmp.eq.s32.totalorder %v2175, 2
  %vm2368 = vcmp.eq.s32.totalorder %v2176, 2
  %vm2369 = vcmp.eq.s32.totalorder %v2113, 3
  %vm2370 = vcmp.eq.s32.totalorder %v2114, 3
  %vm2371 = vcmp.eq.s32.totalorder %v2115, 3
  %vm2372 = vcmp.eq.s32.totalorder %v2116, 3
  %vm2373 = vcmp.eq.s32.totalorder %v2117, 3
  %vm2374 = vcmp.eq.s32.totalorder %v2118, 3
  %vm2375 = vcmp.eq.s32.totalorder %v2119, 3
  %vm2376 = vcmp.eq.s32.totalorder %v2120, 3
  %vm2377 = vcmp.eq.s32.totalorder %v2121, 3
  %vm2378 = vcmp.eq.s32.totalorder %v2122, 3
  %vm2379 = vcmp.eq.s32.totalorder %v2123, 3
  %vm2380 = vcmp.eq.s32.totalorder %v2124, 3
  %vm2381 = vcmp.eq.s32.totalorder %v2125, 3
  %vm2382 = vcmp.eq.s32.totalorder %v2126, 3
  %vm2383 = vcmp.eq.s32.totalorder %v2127, 3
  %vm2384 = vcmp.eq.s32.totalorder %v2128, 3
  %vm2385 = vcmp.eq.s32.totalorder %v2129, 3
  %vm2386 = vcmp.eq.s32.totalorder %v2130, 3
  %vm2387 = vcmp.eq.s32.totalorder %v2131, 3
  %vm2388 = vcmp.eq.s32.totalorder %v2132, 3
  %vm2389 = vcmp.eq.s32.totalorder %v2133, 3
  %vm2390 = vcmp.eq.s32.totalorder %v2134, 3
  %vm2391 = vcmp.eq.s32.totalorder %v2135, 3
  %vm2392 = vcmp.eq.s32.totalorder %v2136, 3
  %vm2393 = vcmp.eq.s32.totalorder %v2137, 3
  %vm2394 = vcmp.eq.s32.totalorder %v2138, 3
  %vm2395 = vcmp.eq.s32.totalorder %v2139, 3
  %vm2396 = vcmp.eq.s32.totalorder %v2140, 3
  %vm2397 = vcmp.eq.s32.totalorder %v2141, 3
  %vm2398 = vcmp.eq.s32.totalorder %v2142, 3
  %vm2399 = vcmp.eq.s32.totalorder %v2143, 3
  %vm2400 = vcmp.eq.s32.totalorder %v2144, 3
  %vm2401 = vcmp.eq.s32.totalorder %v2145, 3
  %vm2402 = vcmp.eq.s32.totalorder %v2146, 3
  %vm2403 = vcmp.eq.s32.totalorder %v2147, 3
  %vm2404 = vcmp.eq.s32.totalorder %v2148, 3
  %vm2405 = vcmp.eq.s32.totalorder %v2149, 3
  %vm2406 = vcmp.eq.s32.totalorder %v2150, 3
  %vm2407 = vcmp.eq.s32.totalorder %v2151, 3
  %vm2408 = vcmp.eq.s32.totalorder %v2152, 3
  %vm2409 = vcmp.eq.s32.totalorder %v2153, 3
  %vm2410 = vcmp.eq.s32.totalorder %v2154, 3
  %vm2411 = vcmp.eq.s32.totalorder %v2155, 3
  %vm2412 = vcmp.eq.s32.totalorder %v2156, 3
  %vm2413 = vcmp.eq.s32.totalorder %v2157, 3
  %vm2414 = vcmp.eq.s32.totalorder %v2158, 3
  %vm2415 = vcmp.eq.s32.totalorder %v2159, 3
  %vm2416 = vcmp.eq.s32.totalorder %v2160, 3
  %vm2417 = vcmp.eq.s32.totalorder %v2161, 3
  %vm2418 = vcmp.eq.s32.totalorder %v2162, 3
  %vm2419 = vcmp.eq.s32.totalorder %v2163, 3
  %vm2420 = vcmp.eq.s32.totalorder %v2164, 3
  %vm2421 = vcmp.eq.s32.totalorder %v2165, 3
  %vm2422 = vcmp.eq.s32.totalorder %v2166, 3
  %vm2423 = vcmp.eq.s32.totalorder %v2167, 3
  %vm2424 = vcmp.eq.s32.totalorder %v2168, 3
  %vm2425 = vcmp.eq.s32.totalorder %v2169, 3
  %vm2426 = vcmp.eq.s32.totalorder %v2170, 3
  %vm2427 = vcmp.eq.s32.totalorder %v2171, 3
  %vm2428 = vcmp.eq.s32.totalorder %v2172, 3
  %vm2429 = vcmp.eq.s32.totalorder %v2173, 3
  %vm2430 = vcmp.eq.s32.totalorder %v2174, 3
  %vm2431 = vcmp.eq.s32.totalorder %v2175, 3
  %vm2432 = vcmp.eq.s32.totalorder %v2176, 3
  %vm2433 = vcmp.eq.s32.totalorder %v2113, 4
  %vm2434 = vcmp.eq.s32.totalorder %v2114, 4
  %vm2435 = vcmp.eq.s32.totalorder %v2115, 4
  %vm2436 = vcmp.eq.s32.totalorder %v2116, 4
  %vm2437 = vcmp.eq.s32.totalorder %v2117, 4
  %vm2438 = vcmp.eq.s32.totalorder %v2118, 4
  %vm2439 = vcmp.eq.s32.totalorder %v2119, 4
  %vm2440 = vcmp.eq.s32.totalorder %v2120, 4
  %vm2441 = vcmp.eq.s32.totalorder %v2121, 4
  %vm2442 = vcmp.eq.s32.totalorder %v2122, 4
  %vm2443 = vcmp.eq.s32.totalorder %v2123, 4
  %vm2444 = vcmp.eq.s32.totalorder %v2124, 4
  %vm2445 = vcmp.eq.s32.totalorder %v2125, 4
  %vm2446 = vcmp.eq.s32.totalorder %v2126, 4
  %vm2447 = vcmp.eq.s32.totalorder %v2127, 4
  %vm2448 = vcmp.eq.s32.totalorder %v2128, 4
  %vm2449 = vcmp.eq.s32.totalorder %v2129, 4
  %vm2450 = vcmp.eq.s32.totalorder %v2130, 4
  %vm2451 = vcmp.eq.s32.totalorder %v2131, 4
  %vm2452 = vcmp.eq.s32.totalorder %v2132, 4
  %vm2453 = vcmp.eq.s32.totalorder %v2133, 4
  %vm2454 = vcmp.eq.s32.totalorder %v2134, 4
  %vm2455 = vcmp.eq.s32.totalorder %v2135, 4
  %vm2456 = vcmp.eq.s32.totalorder %v2136, 4
  %vm2457 = vcmp.eq.s32.totalorder %v2137, 4
  %vm2458 = vcmp.eq.s32.totalorder %v2138, 4
  %vm2459 = vcmp.eq.s32.totalorder %v2139, 4
  %vm2460 = vcmp.eq.s32.totalorder %v2140, 4
  %vm2461 = vcmp.eq.s32.totalorder %v2141, 4
  %vm2462 = vcmp.eq.s32.totalorder %v2142, 4
  %vm2463 = vcmp.eq.s32.totalorder %v2143, 4
  %vm2464 = vcmp.eq.s32.totalorder %v2144, 4
  %vm2465 = vcmp.eq.s32.totalorder %v2145, 4
  %vm2466 = vcmp.eq.s32.totalorder %v2146, 4
  %vm2467 = vcmp.eq.s32.totalorder %v2147, 4
  %vm2468 = vcmp.eq.s32.totalorder %v2148, 4
  %vm2469 = vcmp.eq.s32.totalorder %v2149, 4
  %vm2470 = vcmp.eq.s32.totalorder %v2150, 4
  %vm2471 = vcmp.eq.s32.totalorder %v2151, 4
  %vm2472 = vcmp.eq.s32.totalorder %v2152, 4
  %vm2473 = vcmp.eq.s32.totalorder %v2153, 4
  %vm2474 = vcmp.eq.s32.totalorder %v2154, 4
  %vm2475 = vcmp.eq.s32.totalorder %v2155, 4
  %vm2476 = vcmp.eq.s32.totalorder %v2156, 4
  %vm2477 = vcmp.eq.s32.totalorder %v2157, 4
  %vm2478 = vcmp.eq.s32.totalorder %v2158, 4
  %vm2479 = vcmp.eq.s32.totalorder %v2159, 4
  %vm2480 = vcmp.eq.s32.totalorder %v2160, 4
  %vm2481 = vcmp.eq.s32.totalorder %v2161, 4
  %vm2482 = vcmp.eq.s32.totalorder %v2162, 4
  %vm2483 = vcmp.eq.s32.totalorder %v2163, 4
  %vm2484 = vcmp.eq.s32.totalorder %v2164, 4
  %vm2485 = vcmp.eq.s32.totalorder %v2165, 4
  %vm2486 = vcmp.eq.s32.totalorder %v2166, 4
  %vm2487 = vcmp.eq.s32.totalorder %v2167, 4
  %vm2488 = vcmp.eq.s32.totalorder %v2168, 4
  %vm2489 = vcmp.eq.s32.totalorder %v2169, 4
  %vm2490 = vcmp.eq.s32.totalorder %v2170, 4
  %vm2491 = vcmp.eq.s32.totalorder %v2171, 4
  %vm2492 = vcmp.eq.s32.totalorder %v2172, 4
  %vm2493 = vcmp.eq.s32.totalorder %v2173, 4
  %vm2494 = vcmp.eq.s32.totalorder %v2174, 4
  %vm2495 = vcmp.eq.s32.totalorder %v2175, 4
  %vm2496 = vcmp.eq.s32.totalorder %v2176, 4
  %vm2497 = vcmp.eq.s32.totalorder %v2113, 5
  %vm2498 = vcmp.eq.s32.totalorder %v2114, 5
  %vm2499 = vcmp.eq.s32.totalorder %v2115, 5
  %vm2500 = vcmp.eq.s32.totalorder %v2116, 5
  %vm2501 = vcmp.eq.s32.totalorder %v2117, 5
  %vm2502 = vcmp.eq.s32.totalorder %v2118, 5
  %vm2503 = vcmp.eq.s32.totalorder %v2119, 5
  %vm2504 = vcmp.eq.s32.totalorder %v2120, 5
  %vm2505 = vcmp.eq.s32.totalorder %v2121, 5
  %vm2506 = vcmp.eq.s32.totalorder %v2122, 5
  %vm2507 = vcmp.eq.s32.totalorder %v2123, 5
  %vm2508 = vcmp.eq.s32.totalorder %v2124, 5
  %vm2509 = vcmp.eq.s32.totalorder %v2125, 5
  %vm2510 = vcmp.eq.s32.totalorder %v2126, 5
  %vm2511 = vcmp.eq.s32.totalorder %v2127, 5
  %vm2512 = vcmp.eq.s32.totalorder %v2128, 5
  %vm2513 = vcmp.eq.s32.totalorder %v2129, 5
  %vm2514 = vcmp.eq.s32.totalorder %v2130, 5
  %vm2515 = vcmp.eq.s32.totalorder %v2131, 5
  %vm2516 = vcmp.eq.s32.totalorder %v2132, 5
  %vm2517 = vcmp.eq.s32.totalorder %v2133, 5
  %vm2518 = vcmp.eq.s32.totalorder %v2134, 5
  %vm2519 = vcmp.eq.s32.totalorder %v2135, 5
  %vm2520 = vcmp.eq.s32.totalorder %v2136, 5
  %vm2521 = vcmp.eq.s32.totalorder %v2137, 5
  %vm2522 = vcmp.eq.s32.totalorder %v2138, 5
  %vm2523 = vcmp.eq.s32.totalorder %v2139, 5
  %vm2524 = vcmp.eq.s32.totalorder %v2140, 5
  %vm2525 = vcmp.eq.s32.totalorder %v2141, 5
  %vm2526 = vcmp.eq.s32.totalorder %v2142, 5
  %vm2527 = vcmp.eq.s32.totalorder %v2143, 5
  %vm2528 = vcmp.eq.s32.totalorder %v2144, 5
  %vm2529 = vcmp.eq.s32.totalorder %v2145, 5
  %vm2530 = vcmp.eq.s32.totalorder %v2146, 5
  %vm2531 = vcmp.eq.s32.totalorder %v2147, 5
  %vm2532 = vcmp.eq.s32.totalorder %v2148, 5
  %vm2533 = vcmp.eq.s32.totalorder %v2149, 5
  %vm2534 = vcmp.eq.s32.totalorder %v2150, 5
  %vm2535 = vcmp.eq.s32.totalorder %v2151, 5
  %vm2536 = vcmp.eq.s32.totalorder %v2152, 5
  %vm2537 = vcmp.eq.s32.totalorder %v2153, 5
  %vm2538 = vcmp.eq.s32.totalorder %v2154, 5
  %vm2539 = vcmp.eq.s32.totalorder %v2155, 5
  %vm2540 = vcmp.eq.s32.totalorder %v2156, 5
  %vm2541 = vcmp.eq.s32.totalorder %v2157, 5
  %vm2542 = vcmp.eq.s32.totalorder %v2158, 5
  %vm2543 = vcmp.eq.s32.totalorder %v2159, 5
  %vm2544 = vcmp.eq.s32.totalorder %v2160, 5
  %vm2545 = vcmp.eq.s32.totalorder %v2161, 5
  %vm2546 = vcmp.eq.s32.totalorder %v2162, 5
  %vm2547 = vcmp.eq.s32.totalorder %v2163, 5
  %vm2548 = vcmp.eq.s32.totalorder %v2164, 5
  %vm2549 = vcmp.eq.s32.totalorder %v2165, 5
  %vm2550 = vcmp.eq.s32.totalorder %v2166, 5
  %vm2551 = vcmp.eq.s32.totalorder %v2167, 5
  %vm2552 = vcmp.eq.s32.totalorder %v2168, 5
  %vm2553 = vcmp.eq.s32.totalorder %v2169, 5
  %vm2554 = vcmp.eq.s32.totalorder %v2170, 5
  %vm2555 = vcmp.eq.s32.totalorder %v2171, 5
  %vm2556 = vcmp.eq.s32.totalorder %v2172, 5
  %vm2557 = vcmp.eq.s32.totalorder %v2173, 5
  %vm2558 = vcmp.eq.s32.totalorder %v2174, 5
  %vm2559 = vcmp.eq.s32.totalorder %v2175, 5
  %vm2560 = vcmp.eq.s32.totalorder %v2176, 5
  %vm2561 = vcmp.eq.s32.totalorder %v2113, 6
  %vm2562 = vcmp.eq.s32.totalorder %v2114, 6
  %vm2563 = vcmp.eq.s32.totalorder %v2115, 6
  %vm2564 = vcmp.eq.s32.totalorder %v2116, 6
  %vm2565 = vcmp.eq.s32.totalorder %v2117, 6
  %vm2566 = vcmp.eq.s32.totalorder %v2118, 6
  %vm2567 = vcmp.eq.s32.totalorder %v2119, 6
  %vm2568 = vcmp.eq.s32.totalorder %v2120, 6
  %vm2569 = vcmp.eq.s32.totalorder %v2121, 6
  %vm2570 = vcmp.eq.s32.totalorder %v2122, 6
  %vm2571 = vcmp.eq.s32.totalorder %v2123, 6
  %vm2572 = vcmp.eq.s32.totalorder %v2124, 6
  %vm2573 = vcmp.eq.s32.totalorder %v2125, 6
  %vm2574 = vcmp.eq.s32.totalorder %v2126, 6
  %vm2575 = vcmp.eq.s32.totalorder %v2127, 6
  %vm2576 = vcmp.eq.s32.totalorder %v2128, 6
  %vm2577 = vcmp.eq.s32.totalorder %v2129, 6
  %vm2578 = vcmp.eq.s32.totalorder %v2130, 6
  %vm2579 = vcmp.eq.s32.totalorder %v2131, 6
  %vm2580 = vcmp.eq.s32.totalorder %v2132, 6
  %vm2581 = vcmp.eq.s32.totalorder %v2133, 6
  %vm2582 = vcmp.eq.s32.totalorder %v2134, 6
  %vm2583 = vcmp.eq.s32.totalorder %v2135, 6
  %vm2584 = vcmp.eq.s32.totalorder %v2136, 6
  %vm2585 = vcmp.eq.s32.totalorder %v2137, 6
  %vm2586 = vcmp.eq.s32.totalorder %v2138, 6
  %vm2587 = vcmp.eq.s32.totalorder %v2139, 6
  %vm2588 = vcmp.eq.s32.totalorder %v2140, 6
  %vm2589 = vcmp.eq.s32.totalorder %v2141, 6
  %vm2590 = vcmp.eq.s32.totalorder %v2142, 6
  %vm2591 = vcmp.eq.s32.totalorder %v2143, 6
  %vm2592 = vcmp.eq.s32.totalorder %v2144, 6
  %vm2593 = vcmp.eq.s32.totalorder %v2145, 6
  %vm2594 = vcmp.eq.s32.totalorder %v2146, 6
  %vm2595 = vcmp.eq.s32.totalorder %v2147, 6
  %vm2596 = vcmp.eq.s32.totalorder %v2148, 6
  %vm2597 = vcmp.eq.s32.totalorder %v2149, 6
  %vm2598 = vcmp.eq.s32.totalorder %v2150, 6
  %vm2599 = vcmp.eq.s32.totalorder %v2151, 6
  %vm2600 = vcmp.eq.s32.totalorder %v2152, 6
  %vm2601 = vcmp.eq.s32.totalorder %v2153, 6
  %vm2602 = vcmp.eq.s32.totalorder %v2154, 6
  %vm2603 = vcmp.eq.s32.totalorder %v2155, 6
  %vm2604 = vcmp.eq.s32.totalorder %v2156, 6
  %vm2605 = vcmp.eq.s32.totalorder %v2157, 6
  %vm2606 = vcmp.eq.s32.totalorder %v2158, 6
  %vm2607 = vcmp.eq.s32.totalorder %v2159, 6
  %vm2608 = vcmp.eq.s32.totalorder %v2160, 6
  %vm2609 = vcmp.eq.s32.totalorder %v2161, 6
  %vm2610 = vcmp.eq.s32.totalorder %v2162, 6
  %vm2611 = vcmp.eq.s32.totalorder %v2163, 6
  %vm2612 = vcmp.eq.s32.totalorder %v2164, 6
  %vm2613 = vcmp.eq.s32.totalorder %v2165, 6
  %vm2614 = vcmp.eq.s32.totalorder %v2166, 6
  %vm2615 = vcmp.eq.s32.totalorder %v2167, 6
  %vm2616 = vcmp.eq.s32.totalorder %v2168, 6
  %vm2617 = vcmp.eq.s32.totalorder %v2169, 6
  %vm2618 = vcmp.eq.s32.totalorder %v2170, 6
  %vm2619 = vcmp.eq.s32.totalorder %v2171, 6
  %vm2620 = vcmp.eq.s32.totalorder %v2172, 6
  %vm2621 = vcmp.eq.s32.totalorder %v2173, 6
  %vm2622 = vcmp.eq.s32.totalorder %v2174, 6
  %vm2623 = vcmp.eq.s32.totalorder %v2175, 6
  %vm2624 = vcmp.eq.s32.totalorder %v2176, 6
  %vm2625 = vcmp.eq.s32.totalorder %v2113, 7
  %vm2626 = vcmp.eq.s32.totalorder %v2114, 7
  %vm2627 = vcmp.eq.s32.totalorder %v2115, 7
  %vm2628 = vcmp.eq.s32.totalorder %v2116, 7
  %vm2629 = vcmp.eq.s32.totalorder %v2117, 7
  %vm2630 = vcmp.eq.s32.totalorder %v2118, 7
  %vm2631 = vcmp.eq.s32.totalorder %v2119, 7
  %vm2632 = vcmp.eq.s32.totalorder %v2120, 7
  %vm2633 = vcmp.eq.s32.totalorder %v2121, 7
  %vm2634 = vcmp.eq.s32.totalorder %v2122, 7
  %vm2635 = vcmp.eq.s32.totalorder %v2123, 7
  %vm2636 = vcmp.eq.s32.totalorder %v2124, 7
  %vm2637 = vcmp.eq.s32.totalorder %v2125, 7
  %vm2638 = vcmp.eq.s32.totalorder %v2126, 7
  %vm2639 = vcmp.eq.s32.totalorder %v2127, 7
  %vm2640 = vcmp.eq.s32.totalorder %v2128, 7
  %vm2641 = vcmp.eq.s32.totalorder %v2129, 7
  %vm2642 = vcmp.eq.s32.totalorder %v2130, 7
  %vm2643 = vcmp.eq.s32.totalorder %v2131, 7
  %vm2644 = vcmp.eq.s32.totalorder %v2132, 7
  %vm2645 = vcmp.eq.s32.totalorder %v2133, 7
  %vm2646 = vcmp.eq.s32.totalorder %v2134, 7
  %vm2647 = vcmp.eq.s32.totalorder %v2135, 7
  %vm2648 = vcmp.eq.s32.totalorder %v2136, 7
  %vm2649 = vcmp.eq.s32.totalorder %v2137, 7
  %vm2650 = vcmp.eq.s32.totalorder %v2138, 7
  %vm2651 = vcmp.eq.s32.totalorder %v2139, 7
  %vm2652 = vcmp.eq.s32.totalorder %v2140, 7
  %vm2653 = vcmp.eq.s32.totalorder %v2141, 7
  %vm2654 = vcmp.eq.s32.totalorder %v2142, 7
  %vm2655 = vcmp.eq.s32.totalorder %v2143, 7
  %vm2656 = vcmp.eq.s32.totalorder %v2144, 7
  %vm2657 = vcmp.eq.s32.totalorder %v2145, 7
  %vm2658 = vcmp.eq.s32.totalorder %v2146, 7
  %vm2659 = vcmp.eq.s32.totalorder %v2147, 7
  %vm2660 = vcmp.eq.s32.totalorder %v2148, 7
  %vm2661 = vcmp.eq.s32.totalorder %v2149, 7
  %vm2662 = vcmp.eq.s32.totalorder %v2150, 7
  %vm2663 = vcmp.eq.s32.totalorder %v2151, 7
  %vm2664 = vcmp.eq.s32.totalorder %v2152, 7
  %vm2665 = vcmp.eq.s32.totalorder %v2153, 7
  %vm2666 = vcmp.eq.s32.totalorder %v2154, 7
  %vm2667 = vcmp.eq.s32.totalorder %v2155, 7
  %vm2668 = vcmp.eq.s32.totalorder %v2156, 7
  %vm2669 = vcmp.eq.s32.totalorder %v2157, 7
  %vm2670 = vcmp.eq.s32.totalorder %v2158, 7
  %vm2671 = vcmp.eq.s32.totalorder %v2159, 7
  %vm2672 = vcmp.eq.s32.totalorder %v2160, 7
  %vm2673 = vcmp.eq.s32.totalorder %v2161, 7
  %vm2674 = vcmp.eq.s32.totalorder %v2162, 7
  %vm2675 = vcmp.eq.s32.totalorder %v2163, 7
  %vm2676 = vcmp.eq.s32.totalorder %v2164, 7
  %vm2677 = vcmp.eq.s32.totalorder %v2165, 7
  %vm2678 = vcmp.eq.s32.totalorder %v2166, 7
  %vm2679 = vcmp.eq.s32.totalorder %v2167, 7
  %vm2680 = vcmp.eq.s32.totalorder %v2168, 7
  %vm2681 = vcmp.eq.s32.totalorder %v2169, 7
  %vm2682 = vcmp.eq.s32.totalorder %v2170, 7
  %vm2683 = vcmp.eq.s32.totalorder %v2171, 7
  %vm2684 = vcmp.eq.s32.totalorder %v2172, 7
  %vm2685 = vcmp.eq.s32.totalorder %v2173, 7
  %vm2686 = vcmp.eq.s32.totalorder %v2174, 7
  %vm2687 = vcmp.eq.s32.totalorder %v2175, 7
  %vm2688 = vcmp.eq.s32.totalorder %v2176, 7
  %v2689 = vld [vmem:[%s2] sm:$0xff]
  %v2690 = vsel %vm2177, %v2049, 0.0
  %v2691 = vsel %vm2178, %v2050, 0.0
  %v2692 = vsel %vm2179, %v2051, 0.0
  %v2693 = vsel %vm2180, %v2052, 0.0
  %v2694 = vsel %vm2181, %v2053, 0.0
  %v2695 = vsel %vm2182, %v2054, 0.0
  %v2696 = vsel %vm2183, %v2055, 0.0
  %v2697 = vsel %vm2184, %v2056, 0.0
  %v2698 = vsel %vm2185, %v2057, 0.0
  %v2699 = vsel %vm2186, %v2058, 0.0
  %v2700 = vsel %vm2187, %v2059, 0.0
  %v2701 = vsel %vm2188, %v2060, 0.0
  %v2702 = vsel %vm2189, %v2061, 0.0
  %v2703 = vsel %vm2190, %v2062, 0.0
  %v2704 = vsel %vm2191, %v2063, 0.0
  %v2705 = vsel %vm2192, %v2064, 0.0
  %v2706 = vsel %vm2193, %v2065, 0.0
  %v2707 = vsel %vm2194, %v2066, 0.0
  %v2708 = vsel %vm2195, %v2067, 0.0
  %v2709 = vsel %vm2196, %v2068, 0.0
  %v2710 = vsel %vm2197, %v2069, 0.0
  %v2711 = vsel %vm2198, %v2070, 0.0
  %v2712 = vsel %vm2199, %v2071, 0.0
  %v2713 = vsel %vm2200, %v2072, 0.0
  %v2714 = vsel %vm2201, %v2073, 0.0
  %v2715 = vsel %vm2202, %v2074, 0.0
  %v2716 = vsel %vm2203, %v2075, 0.0
  %v2717 = vsel %vm2204, %v2076, 0.0
  %v2718 = vsel %vm2205, %v2077, 0.0
  %v2719 = vsel %vm2206, %v2078, 0.0
  %v2720 = vsel %vm2207, %v2079, 0.0
  %v2721 = vsel %vm2208, %v2080, 0.0
  %v2722 = vsel %vm2209, %v2081, 0.0
  %v2723 = vsel %vm2210, %v2082, 0.0
  %v2724 = vsel %vm2211, %v2083, 0.0
  %v2725 = vsel %vm2212, %v2084, 0.0
  %v2726 = vsel %vm2213, %v2085, 0.0
  %v2727 = vsel %vm2214, %v2086, 0.0
  %v2728 = vsel %vm2215, %v2087, 0.0
  %v2729 = vsel %vm2216, %v2088, 0.0
  %v2730 = vsel %vm2217, %v2089, 0.0
  %v2731 = vsel %vm2218, %v2090, 0.0
  %v2732 = vsel %vm2219, %v2091, 0.0
  %v2733 = vsel %vm2220, %v2092, 0.0
  %v2734 = vsel %vm2221, %v2093, 0.0
  %v2735 = vsel %vm2222, %v2094, 0.0
  %v2736 = vsel %vm2223, %v2095, 0.0
  %v2737 = vsel %vm2224, %v2096, 0.0
  %v2738 = vsel %vm2225, %v2097, 0.0
  %v2739 = vsel %vm2226, %v2098, 0.0
  %v2740 = vsel %vm2227, %v2099, 0.0
  %v2741 = vsel %vm2228, %v2100, 0.0
  %v2742 = vsel %vm2229, %v2101, 0.0
  %v2743 = vsel %vm2230, %v2102, 0.0
  %v2744 = vsel %vm2231, %v2103, 0.0
  %v2745 = vsel %vm2232, %v2104, 0.0
  %v2746 = vsel %vm2233, %v2105, 0.0
  %v2747 = vsel %vm2234, %v2106, 0.0
  %v2748 = vsel %vm2235, %v2107, 0.0
  %v2749 = vsel %vm2236, %v2108, 0.0
  %v2750 = vsel %vm2237, %v2109, 0.0
  %v2751 = vsel %vm2238, %v2110, 0.0
  %v2752 = vsel %vm2239, %v2111, 0.0
  %v2753 = vsel %vm2240, %v2112, 0.0
  %v2754 = vsel %vm2241, %v2049, 0.0
  %v2755 = vsel %vm2242, %v2050, 0.0
  %v2756 = vsel %vm2243, %v2051, 0.0
  %v2757 = vsel %vm2244, %v2052, 0.0
  %v2758 = vsel %vm2245, %v2053, 0.0
  %v2759 = vsel %vm2246, %v2054, 0.0
  %v2760 = vsel %vm2247, %v2055, 0.0
  %v2761 = vsel %vm2248, %v2056, 0.0
  %v2762 = vsel %vm2249, %v2057, 0.0
  %v2763 = vsel %vm2250, %v2058, 0.0
  %v2764 = vsel %vm2251, %v2059, 0.0
  %v2765 = vsel %vm2252, %v2060, 0.0
  %v2766 = vsel %vm2253, %v2061, 0.0
  %v2767 = vsel %vm2254, %v2062, 0.0
  %v2768 = vsel %vm2255, %v2063, 0.0
  %v2769 = vsel %vm2256, %v2064, 0.0
  %v2770 = vsel %vm2257, %v2065, 0.0
  %v2771 = vsel %vm2258, %v2066, 0.0
  %v2772 = vsel %vm2259, %v2067, 0.0
  %v2773 = vsel %vm2260, %v2068, 0.0
  %v2774 = vsel %vm2261, %v2069, 0.0
  %v2775 = vsel %vm2262, %v2070, 0.0
  %v2776 = vsel %vm2263, %v2071, 0.0
  %v2777 = vsel %vm2264, %v2072, 0.0
  %v2778 = vsel %vm2265, %v2073, 0.0
  %v2779 = vsel %vm2266, %v2074, 0.0
  %v2780 = vsel %vm2267, %v2075, 0.0
  %v2781 = vsel %vm2268, %v2076, 0.0
  %v2782 = vsel %vm2269, %v2077, 0.0
  %v2783 = vsel %vm2270, %v2078, 0.0
  %v2784 = vsel %vm2271, %v2079, 0.0
  %v2785 = vsel %vm2272, %v2080, 0.0
  %v2786 = vsel %vm2273, %v2081, 0.0
  %v2787 = vsel %vm2274, %v2082, 0.0
  %v2788 = vsel %vm2275, %v2083, 0.0
  %v2789 = vsel %vm2276, %v2084, 0.0
  %v2790 = vsel %vm2277, %v2085, 0.0
  %v2791 = vsel %vm2278, %v2086, 0.0
  %v2792 = vsel %vm2279, %v2087, 0.0
  %v2793 = vsel %vm2280, %v2088, 0.0
  %v2794 = vsel %vm2281, %v2089, 0.0
  %v2795 = vsel %vm2282, %v2090, 0.0
  %v2796 = vsel %vm2283, %v2091, 0.0
  %v2797 = vsel %vm2284, %v2092, 0.0
  %v2798 = vsel %vm2285, %v2093, 0.0
  %v2799 = vsel %vm2286, %v2094, 0.0
  %v2800 = vsel %vm2287, %v2095, 0.0
  %v2801 = vsel %vm2288, %v2096, 0.0
  %v2802 = vsel %vm2289, %v2097, 0.0
  %v2803 = vsel %vm2290, %v2098, 0.0
  %v2804 = vsel %vm2291, %v2099, 0.0
  %v2805 = vsel %vm2292, %v2100, 0.0
  %v2806 = vsel %vm2293, %v2101, 0.0
  %v2807 = vsel %vm2294, %v2102, 0.0
  %v2808 = vsel %vm2295, %v2103, 0.0
  %v2809 = vsel %vm2296, %v2104, 0.0
  %v2810 = vsel %vm2297, %v2105, 0.0
  %v2811 = vsel %vm2298, %v2106, 0.0
  %v2812 = vsel %vm2299, %v2107, 0.0
  %v2813 = vsel %vm2300, %v2108, 0.0
  %v2814 = vsel %vm2301, %v2109, 0.0
  %v2815 = vsel %vm2302, %v2110, 0.0
  %v2816 = vsel %vm2303, %v2111, 0.0
  %v2817 = vsel %vm2304, %v2112, 0.0
  %v2818 = vsel %vm2305, %v2049, 0.0
  %v2819 = vsel %vm2306, %v2050, 0.0
  %v2820 = vsel %vm2307, %v2051, 0.0
  %v2821 = vsel %vm2308, %v2052, 0.0
  %v2822 = vsel %vm2309, %v2053, 0.0
  %v2823 = vsel %vm2310, %v2054, 0.0
  %v2824 = vsel %vm2311, %v2055, 0.0
  %v2825 = vsel %vm2312, %v2056, 0.0
  %v2826 = vsel %vm2313, %v2057, 0.0
  %v2827 = vsel %vm2314, %v2058, 0.0
  %v2828 = vsel %vm2315, %v2059, 0.0
  %v2829 = vsel %vm2316, %v2060, 0.0
  %v2830 = vsel %vm2317, %v2061, 0.0
  %v2831 = vsel %vm2318, %v2062, 0.0
  %v2832 = vsel %vm2319, %v2063, 0.0
  %v2833 = vsel %vm2320, %v2064, 0.0
  %v2834 = vsel %vm2321, %v2065, 0.0
  %v2835 = vsel %vm2322, %v2066, 0.0
  %v2836 = vsel %vm2323, %v2067, 0.0
  %v2837 = vsel %vm2324, %v2068, 0.0
  %v2838 = vsel %vm2325, %v2069, 0.0
  %v2839 = vsel %vm2326, %v2070, 0.0
  %v2840 = vsel %vm2327, %v2071, 0.0
  %v2841 = vsel %vm2328, %v2072, 0.0
  %v2842 = vsel %vm2329, %v2073, 0.0
  %v2843 = vsel %vm2330, %v2074, 0.0
  %v2844 = vsel %vm2331, %v2075, 0.0
  %v2845 = vsel %vm2332, %v2076, 0.0
  %v2846 = vsel %vm2333, %v2077, 0.0
  %v2847 = vsel %vm2334, %v2078, 0.0
  %v2848 = vsel %vm2335, %v2079, 0.0
  %v2849 = vsel %vm2336, %v2080, 0.0
  %v2850 = vsel %vm2337, %v2081, 0.0
  %v2851 = vsel %vm2338, %v2082, 0.0
  %v2852 = vsel %vm2339, %v2083, 0.0
  %v2853 = vsel %vm2340, %v2084, 0.0
  %v2854 = vsel %vm2341, %v2085, 0.0
  %v2855 = vsel %vm2342, %v2086, 0.0
  %v2856 = vsel %vm2343, %v2087, 0.0
  %v2857 = vsel %vm2344, %v2088, 0.0
  %v2858 = vsel %vm2345, %v2089, 0.0
  %v2859 = vsel %vm2346, %v2090, 0.0
  %v2860 = vsel %vm2347, %v2091, 0.0
  %v2861 = vsel %vm2348, %v2092, 0.0
  %v2862 = vsel %vm2349, %v2093, 0.0
  %v2863 = vsel %vm2350, %v2094, 0.0
  %v2864 = vsel %vm2351, %v2095, 0.0
  %v2865 = vsel %vm2352, %v2096, 0.0
  %v2866 = vsel %vm2353, %v2097, 0.0
  %v2867 = vsel %vm2354, %v2098, 0.0
  %v2868 = vsel %vm2355, %v2099, 0.0
  %v2869 = vsel %vm2356, %v2100, 0.0
  %v2870 = vsel %vm2357, %v2101, 0.0
  %v2871 = vsel %vm2358, %v2102, 0.0
  %v2872 = vsel %vm2359, %v2103, 0.0
  %v2873 = vsel %vm2360, %v2104, 0.0
  %v2874 = vsel %vm2361, %v2105, 0.0
  %v2875 = vsel %vm2362, %v2106, 0.0
  %v2876 = vsel %vm2363, %v2107, 0.0
  %v2877 = vsel %vm2364, %v2108, 0.0
  %v2878 = vsel %vm2365, %v2109, 0.0
  %v2879 = vsel %vm2366, %v2110, 0.0
  %v2880 = vsel %vm2367, %v2111, 0.0
  %v2881 = vsel %vm2368, %v2112, 0.0
  %v2882 = vsel %vm2369, %v2049, 0.0
  %v2883 = vsel %vm2370, %v2050, 0.0
  %v2884 = vsel %vm2371, %v2051, 0.0
  %v2885 = vsel %vm2372, %v2052, 0.0
  %v2886 = vsel %vm2373, %v2053, 0.0
  %v2887 = vsel %vm2374, %v2054, 0.0
  %v2888 = vsel %vm2375, %v2055, 0.0
  %v2889 = vsel %vm2376, %v2056, 0.0
  %v2890 = vsel %vm2377, %v2057, 0.0
  %v2891 = vsel %vm2378, %v2058, 0.0
  %v2892 = vsel %vm2379, %v2059, 0.0
  %v2893 = vsel %vm2380, %v2060, 0.0
  %v2894 = vsel %vm2381, %v2061, 0.0
  %v2895 = vsel %vm2382, %v2062, 0.0
  %v2896 = vsel %vm2383, %v2063, 0.0
  %v2897 = vsel %vm2384, %v2064, 0.0
  %v2898 = vsel %vm2385, %v2065, 0.0
  %v2899 = vsel %vm2386, %v2066, 0.0
  %v2900 = vsel %vm2387, %v2067, 0.0
  %v2901 = vsel %vm2388, %v2068, 0.0
  %v2902 = vsel %vm2389, %v2069, 0.0
  %v2903 = vsel %vm2390, %v2070, 0.0
  %v2904 = vsel %vm2391, %v2071, 0.0
  %v2905 = vsel %vm2392, %v2072, 0.0
  %v2906 = vsel %vm2393, %v2073, 0.0
  %v2907 = vsel %vm2394, %v2074, 0.0
  %v2908 = vsel %vm2395, %v2075, 0.0
  %v2909 = vsel %vm2396, %v2076, 0.0
  %v2910 = vsel %vm2397, %v2077, 0.0
  %v2911 = vsel %vm2398, %v2078, 0.0
  %v2912 = vsel %vm2399, %v2079, 0.0
  %v2913 = vsel %vm2400, %v2080, 0.0
  %v2914 = vsel %vm2401, %v2081, 0.0
  %v2915 = vsel %vm2402, %v2082, 0.0
  %v2916 = vsel %vm2403, %v2083, 0.0
  %v2917 = vsel %vm2404, %v2084, 0.0
  %v2918 = vsel %vm2405, %v2085, 0.0
  %v2919 = vsel %vm2406, %v2086, 0.0
  %v2920 = vsel %vm2407, %v2087, 0.0
  %v2921 = vsel %vm2408, %v2088, 0.0
  %v2922 = vsel %vm2409, %v2089, 0.0
  %v2923 = vsel %vm2410, %v2090, 0.0
  %v2924 = vsel %vm2411, %v2091, 0.0
  %v2925 = vsel %vm2412, %v2092, 0.0
  %v2926 = vsel %vm2413, %v2093, 0.0
  %v2927 = vsel %vm2414, %v2094, 0.0
  %v2928 = vsel %vm2415, %v2095, 0.0
  %v2929 = vsel %vm2416, %v2096, 0.0
  %v2930 = vsel %vm2417, %v2097, 0.0
  %v2931 = vsel %vm2418, %v2098, 0.0
  %v2932 = vsel %vm2419, %v2099, 0.0
  %v2933 = vsel %vm2420, %v2100, 0.0
  %v2934 = vsel %vm2421, %v2101, 0.0
  %v2935 = vsel %vm2422, %v2102, 0.0
  %v2936 = vsel %vm2423, %v2103, 0.0
  %v2937 = vsel %vm2424, %v2104, 0.0
  %v2938 = vsel %vm2425, %v2105, 0.0
  %v2939 = vsel %vm2426, %v2106, 0.0
  %v2940 = vsel %vm2427, %v2107, 0.0
  %v2941 = vsel %vm2428, %v2108, 0.0
  %v2942 = vsel %vm2429, %v2109, 0.0
  %v2943 = vsel %vm2430, %v2110, 0.0
  %v2944 = vsel %vm2431, %v2111, 0.0
  %v2945 = vsel %vm2432, %v2112, 0.0
  %v2946 = vsel %vm2433, %v2049, 0.0
  %v2947 = vsel %vm2434, %v2050, 0.0
  %v2948 = vsel %vm2435, %v2051, 0.0
  %v2949 = vsel %vm2436, %v2052, 0.0
  %v2950 = vsel %vm2437, %v2053, 0.0
  %v2951 = vsel %vm2438, %v2054, 0.0
  %v2952 = vsel %vm2439, %v2055, 0.0
  %v2953 = vsel %vm2440, %v2056, 0.0
  %v2954 = vsel %vm2441, %v2057, 0.0
  %v2955 = vsel %vm2442, %v2058, 0.0
  %v2956 = vsel %vm2443, %v2059, 0.0
  %v2957 = vsel %vm2444, %v2060, 0.0
  %v2958 = vsel %vm2445, %v2061, 0.0
  %v2959 = vsel %vm2446, %v2062, 0.0
  %v2960 = vsel %vm2447, %v2063, 0.0
  %v2961 = vsel %vm2448, %v2064, 0.0
  %v2962 = vsel %vm2449, %v2065, 0.0
  %v2963 = vsel %vm2450, %v2066, 0.0
  %v2964 = vsel %vm2451, %v2067, 0.0
  %v2965 = vsel %vm2452, %v2068, 0.0
  %v2966 = vsel %vm2453, %v2069, 0.0
  %v2967 = vsel %vm2454, %v2070, 0.0
  %v2968 = vsel %vm2455, %v2071, 0.0
  %v2969 = vsel %vm2456, %v2072, 0.0
  %v2970 = vsel %vm2457, %v2073, 0.0
  %v2971 = vsel %vm2458, %v2074, 0.0
  %v2972 = vsel %vm2459, %v2075, 0.0
  %v2973 = vsel %vm2460, %v2076, 0.0
  %v2974 = vsel %vm2461, %v2077, 0.0
  %v2975 = vsel %vm2462, %v2078, 0.0
  %v2976 = vsel %vm2463, %v2079, 0.0
  %v2977 = vsel %vm2464, %v2080, 0.0
  %v2978 = vsel %vm2465, %v2081, 0.0
  %v2979 = vsel %vm2466, %v2082, 0.0
  %v2980 = vsel %vm2467, %v2083, 0.0
  %v2981 = vsel %vm2468, %v2084, 0.0
  %v2982 = vsel %vm2469, %v2085, 0.0
  %v2983 = vsel %vm2470, %v2086, 0.0
  %v2984 = vsel %vm2471, %v2087, 0.0
  %v2985 = vsel %vm2472, %v2088, 0.0
  %v2986 = vsel %vm2473, %v2089, 0.0
  %v2987 = vsel %vm2474, %v2090, 0.0
  %v2988 = vsel %vm2475, %v2091, 0.0
  %v2989 = vsel %vm2476, %v2092, 0.0
  %v2990 = vsel %vm2477, %v2093, 0.0
  %v2991 = vsel %vm2478, %v2094, 0.0
  %v2992 = vsel %vm2479, %v2095, 0.0
  %v2993 = vsel %vm2480, %v2096, 0.0
  %v2994 = vsel %vm2481, %v2097, 0.0
  %v2995 = vsel %vm2482, %v2098, 0.0
  %v2996 = vsel %vm2483, %v2099, 0.0
  %v2997 = vsel %vm2484, %v2100, 0.0
  %v2998 = vsel %vm2485, %v2101, 0.0
  %v2999 = vsel %vm2486, %v2102, 0.0
  %v3000 = vsel %vm2487, %v2103, 0.0
  %v3001 = vsel %vm2488, %v2104, 0.0
  %v3002 = vsel %vm2489, %v2105, 0.0
  %v3003 = vsel %vm2490, %v2106, 0.0
  %v3004 = vsel %vm2491, %v2107, 0.0
  %v3005 = vsel %vm2492, %v2108, 0.0
  %v3006 = vsel %vm2493, %v2109, 0.0
  %v3007 = vsel %vm2494, %v2110, 0.0
  %v3008 = vsel %vm2495, %v2111, 0.0
  %v3009 = vsel %vm2496, %v2112, 0.0
  %v3010 = vsel %vm2497, %v2049, 0.0
  %v3011 = vsel %vm2498, %v2050, 0.0
  %v3012 = vsel %vm2499, %v2051, 0.0
  %v3013 = vsel %vm2500, %v2052, 0.0
  %v3014 = vsel %vm2501, %v2053, 0.0
  %v3015 = vsel %vm2502, %v2054, 0.0
  %v3016 = vsel %vm2503, %v2055, 0.0
  %v3017 = vsel %vm2504, %v2056, 0.0
  %v3018 = vsel %vm2505, %v2057, 0.0
  %v3019 = vsel %vm2506, %v2058, 0.0
  %v3020 = vsel %vm2507, %v2059, 0.0
  %v3021 = vsel %vm2508, %v2060, 0.0
  %v3022 = vsel %vm2509, %v2061, 0.0
  %v3023 = vsel %vm2510, %v2062, 0.0
  %v3024 = vsel %vm2511, %v2063, 0.0
  %v3025 = vsel %vm2512, %v2064, 0.0
  %v3026 = vsel %vm2513, %v2065, 0.0
  %v3027 = vsel %vm2514, %v2066, 0.0
  %v3028 = vsel %vm2515, %v2067, 0.0
  %v3029 = vsel %vm2516, %v2068, 0.0
  %v3030 = vsel %vm2517, %v2069, 0.0
  %v3031 = vsel %vm2518, %v2070, 0.0
  %v3032 = vsel %vm2519, %v2071, 0.0
  %v3033 = vsel %vm2520, %v2072, 0.0
  %v3034 = vsel %vm2521, %v2073, 0.0
  %v3035 = vsel %vm2522, %v2074, 0.0
  %v3036 = vsel %vm2523, %v2075, 0.0
  %v3037 = vsel %vm2524, %v2076, 0.0
  %v3038 = vsel %vm2525, %v2077, 0.0
  %v3039 = vsel %vm2526, %v2078, 0.0
  %v3040 = vsel %vm2527, %v2079, 0.0
  %v3041 = vsel %vm2528, %v2080, 0.0
  %v3042 = vsel %vm2529, %v2081, 0.0
  %v3043 = vsel %vm2530, %v2082, 0.0
  %v3044 = vsel %vm2531, %v2083, 0.0
  %v3045 = vsel %vm2532, %v2084, 0.0
  %v3046 = vsel %vm2533, %v2085, 0.0
  %v3047 = vsel %vm2534, %v2086, 0.0
  %v3048 = vsel %vm2535, %v2087, 0.0
  %v3049 = vsel %vm2536, %v2088, 0.0
  %v3050 = vsel %vm2537, %v2089, 0.0
  %v3051 = vsel %vm2538, %v2090, 0.0
  %v3052 = vsel %vm2539, %v2091, 0.0
  %v3053 = vsel %vm2540, %v2092, 0.0
  %v3054 = vsel %vm2541, %v2093, 0.0
  %v3055 = vsel %vm2542, %v2094, 0.0
  %v3056 = vsel %vm2543, %v2095, 0.0
  %v3057 = vsel %vm2544, %v2096, 0.0
  %v3058 = vsel %vm2545, %v2097, 0.0
  %v3059 = vsel %vm2546, %v2098, 0.0
  %v3060 = vsel %vm2547, %v2099, 0.0
  %v3061 = vsel %vm2548, %v2100, 0.0
  %v3062 = vsel %vm2549, %v2101, 0.0
  %v3063 = vsel %vm2550, %v2102, 0.0
  %v3064 = vsel %vm2551, %v2103, 0.0
  %v3065 = vsel %vm2552, %v2104, 0.0
  %v3066 = vsel %vm2553, %v2105, 0.0
  %v3067 = vsel %vm2554, %v2106, 0.0
  %v3068 = vsel %vm2555, %v2107, 0.0
  %v3069 = vsel %vm2556, %v2108, 0.0
  %v3070 = vsel %vm2557, %v2109, 0.0
  %v3071 = vsel %vm2558, %v2110, 0.0
  %v3072 = vsel %vm2559, %v2111, 0.0
  %v3073 = vsel %vm2560, %v2112, 0.0
  %v3074 = vsel %vm2561, %v2049, 0.0
  %v3075 = vsel %vm2562, %v2050, 0.0
  %v3076 = vsel %vm2563, %v2051, 0.0
  %v3077 = vsel %vm2564, %v2052, 0.0
  %v3078 = vsel %vm2565, %v2053, 0.0
  %v3079 = vsel %vm2566, %v2054, 0.0
  %v3080 = vsel %vm2567, %v2055, 0.0
  %v3081 = vsel %vm2568, %v2056, 0.0
  %v3082 = vsel %vm2569, %v2057, 0.0
  %v3083 = vsel %vm2570, %v2058, 0.0
  %v3084 = vsel %vm2571, %v2059, 0.0
  %v3085 = vsel %vm2572, %v2060, 0.0
  %v3086 = vsel %vm2573, %v2061, 0.0
  %v3087 = vsel %vm2574, %v2062, 0.0
  %v3088 = vsel %vm2575, %v2063, 0.0
  %v3089 = vsel %vm2576, %v2064, 0.0
  %v3090 = vsel %vm2577, %v2065, 0.0
  %v3091 = vsel %vm2578, %v2066, 0.0
  %v3092 = vsel %vm2579, %v2067, 0.0
  %v3093 = vsel %vm2580, %v2068, 0.0
  %v3094 = vsel %vm2581, %v2069, 0.0
  %v3095 = vsel %vm2582, %v2070, 0.0
  %v3096 = vsel %vm2583, %v2071, 0.0
  %v3097 = vsel %vm2584, %v2072, 0.0
  %v3098 = vsel %vm2585, %v2073, 0.0
  %v3099 = vsel %vm2586, %v2074, 0.0
  %v3100 = vsel %vm2587, %v2075, 0.0
  %v3101 = vsel %vm2588, %v2076, 0.0
  %v3102 = vsel %vm2589, %v2077, 0.0
  %v3103 = vsel %vm2590, %v2078, 0.0
  %v3104 = vsel %vm2591, %v2079, 0.0
  %v3105 = vsel %vm2592, %v2080, 0.0
  %v3106 = vsel %vm2593, %v2081, 0.0
  %v3107 = vsel %vm2594, %v2082, 0.0
  %v3108 = vsel %vm2595, %v2083, 0.0
  %v3109 = vsel %vm2596, %v2084, 0.0
  %v3110 = vsel %vm2597, %v2085, 0.0
  %v3111 = vsel %vm2598, %v2086, 0.0
  %v3112 = vsel %vm2599, %v2087, 0.0
  %v3113 = vsel %vm2600, %v2088, 0.0
  %v3114 = vsel %vm2601, %v2089, 0.0
  %v3115 = vsel %vm2602, %v2090, 0.0
  %v3116 = vsel %vm2603, %v2091, 0.0
  %v3117 = vsel %vm2604, %v2092, 0.0
  %v3118 = vsel %vm2605, %v2093, 0.0
  %v3119 = vsel %vm2606, %v2094, 0.0
  %v3120 = vsel %vm2607, %v2095, 0.0
  %v3121 = vsel %vm2608, %v2096, 0.0
  %v3122 = vsel %vm2609, %v2097, 0.0
  %v3123 = vsel %vm2610, %v2098, 0.0
  %v3124 = vsel %vm2611, %v2099, 0.0
  %v3125 = vsel %vm2612, %v2100, 0.0
  %v3126 = vsel %vm2613, %v2101, 0.0
  %v3127 = vsel %vm2614, %v2102, 0.0
  %v3128 = vsel %vm2615, %v2103, 0.0
  %v3129 = vsel %vm2616, %v2104, 0.0
  %v3130 = vsel %vm2617, %v2105, 0.0
  %v3131 = vsel %vm2618, %v2106, 0.0
  %v3132 = vsel %vm2619, %v2107, 0.0
  %v3133 = vsel %vm2620, %v2108, 0.0
  %v3134 = vsel %vm2621, %v2109, 0.0
  %v3135 = vsel %vm2622, %v2110, 0.0
  %v3136 = vsel %vm2623, %v2111, 0.0
  %v3137 = vsel %vm2624, %v2112, 0.0
  %v3138 = vsel %vm2625, %v2049, 0.0
  %v3139 = vsel %vm2626, %v2050, 0.0
  %v3140 = vsel %vm2627, %v2051, 0.0
  %v3141 = vsel %vm2628, %v2052, 0.0
  %v3142 = vsel %vm2629, %v2053, 0.0
  %v3143 = vsel %vm2630, %v2054, 0.0
  %v3144 = vsel %vm2631, %v2055, 0.0
  %v3145 = vsel %vm2632, %v2056, 0.0
  %v3146 = vsel %vm2633, %v2057, 0.0
  %v3147 = vsel %vm2634, %v2058, 0.0
  %v3148 = vsel %vm2635, %v2059, 0.0
  %v3149 = vsel %vm2636, %v2060, 0.0
  %v3150 = vsel %vm2637, %v2061, 0.0
  %v3151 = vsel %vm2638, %v2062, 0.0
  %v3152 = vsel %vm2639, %v2063, 0.0
  %v3153 = vsel %vm2640, %v2064, 0.0
  %v3154 = vsel %vm2641, %v2065, 0.0
  %v3155 = vsel %vm2642, %v2066, 0.0
  %v3156 = vsel %vm2643, %v2067, 0.0
  %v3157 = vsel %vm2644, %v2068, 0.0
  %v3158 = vsel %vm2645, %v2069, 0.0
  %v3159 = vsel %vm2646, %v2070, 0.0
  %v3160 = vsel %vm2647, %v2071, 0.0
  %v3161 = vsel %vm2648, %v2072, 0.0
  %v3162 = vsel %vm2649, %v2073, 0.0
  %v3163 = vsel %vm2650, %v2074, 0.0
  %v3164 = vsel %vm2651, %v2075, 0.0
  %v3165 = vsel %vm2652, %v2076, 0.0
  %v3166 = vsel %vm2653, %v2077, 0.0
  %v3167 = vsel %vm2654, %v2078, 0.0
  %v3168 = vsel %vm2655, %v2079, 0.0
  %v3169 = vsel %vm2656, %v2080, 0.0
  %v3170 = vsel %vm2657, %v2081, 0.0
  %v3171 = vsel %vm2658, %v2082, 0.0
  %v3172 = vsel %vm2659, %v2083, 0.0
  %v3173 = vsel %vm2660, %v2084, 0.0
  %v3174 = vsel %vm2661, %v2085, 0.0
  %v3175 = vsel %vm2662, %v2086, 0.0
  %v3176 = vsel %vm2663, %v2087, 0.0
  %v3177 = vsel %vm2664, %v2088, 0.0
  %v3178 = vsel %vm2665, %v2089, 0.0
  %v3179 = vsel %vm2666, %v2090, 0.0
  %v3180 = vsel %vm2667, %v2091, 0.0
  %v3181 = vsel %vm2668, %v2092, 0.0
  %v3182 = vsel %vm2669, %v2093, 0.0
  %v3183 = vsel %vm2670, %v2094, 0.0
  %v3184 = vsel %vm2671, %v2095, 0.0
  %v3185 = vsel %vm2672, %v2096, 0.0
  %v3186 = vsel %vm2673, %v2097, 0.0
  %v3187 = vsel %vm2674, %v2098, 0.0
  %v3188 = vsel %vm2675, %v2099, 0.0
  %v3189 = vsel %vm2676, %v2100, 0.0
  %v3190 = vsel %vm2677, %v2101, 0.0
  %v3191 = vsel %vm2678, %v2102, 0.0
  %v3192 = vsel %vm2679, %v2103, 0.0
  %v3193 = vsel %vm2680, %v2104, 0.0
  %v3194 = vsel %vm2681, %v2105, 0.0
  %v3195 = vsel %vm2682, %v2106, 0.0
  %v3196 = vsel %vm2683, %v2107, 0.0
  %v3197 = vsel %vm2684, %v2108, 0.0
  %v3198 = vsel %vm2685, %v2109, 0.0
  %v3199 = vsel %vm2686, %v2110, 0.0
  %v3200 = vsel %vm2687, %v2111, 0.0
  %v3201 = vsel %vm2688, %v2112, 0.0
  %v3202 = vadd.f32 %v2690, %v2691
  %v3203 = vadd.f32 %v3202, %v2692
  %v3204 = vadd.f32 %v3203, %v2693
  %v3205 = vadd.f32 %v3204, %v2694
  %v3206 = vadd.f32 %v3205, %v2695
  %v3207 = vadd.f32 %v3206, %v2696
  %v3208 = vadd.f32 %v3207, %v2697
  %v3209 = vadd.f32 %v3208, %v2698
  %v3210 = vadd.f32 %v3209, %v2699
  %v3211 = vadd.f32 %v3210, %v2700
  %v3212 = vadd.f32 %v3211, %v2701
  %v3213 = vadd.f32 %v3212, %v2702
  %v3214 = vadd.f32 %v3213, %v2703
  %v3215 = vadd.f32 %v3214, %v2704
  %v3216 = vadd.f32 %v3215, %v2705
  %v3217 = vadd.f32 %v3216, %v2706
  %v3218 = vadd.f32 %v3217, %v2707
  %v3219 = vadd.f32 %v3218, %v2708
  %v3220 = vadd.f32 %v3219, %v2709
  %v3221 = vadd.f32 %v3220, %v2710
  %v3222 = vadd.f32 %v3221, %v2711
  %v3223 = vadd.f32 %v3222, %v2712
  %v3224 = vadd.f32 %v3223, %v2713
  %v3225 = vadd.f32 %v3224, %v2714
  %v3226 = vadd.f32 %v3225, %v2715
  %v3227 = vadd.f32 %v3226, %v2716
  %v3228 = vadd.f32 %v3227, %v2717
  %v3229 = vadd.f32 %v3228, %v2718
  %v3230 = vadd.f32 %v3229, %v2719
  %v3231 = vadd.f32 %v3230, %v2720
  %v3232 = vadd.f32 %v3231, %v2721
  %v3233 = vadd.f32 %v3232, %v2722
  %v3234 = vadd.f32 %v3233, %v2723
  %v3235 = vadd.f32 %v3234, %v2724
  %v3236 = vadd.f32 %v3235, %v2725
  %v3237 = vadd.f32 %v3236, %v2726
  %v3238 = vadd.f32 %v3237, %v2727
  %v3239 = vadd.f32 %v3238, %v2728
  %v3240 = vadd.f32 %v3239, %v2729
  %v3241 = vadd.f32 %v3240, %v2730
  %v3242 = vadd.f32 %v3241, %v2731
  %v3243 = vadd.f32 %v3242, %v2732
  %v3244 = vadd.f32 %v3243, %v2733
  %v3245 = vadd.f32 %v3244, %v2734
  %v3246 = vadd.f32 %v3245, %v2735
  %v3247 = vadd.f32 %v3246, %v2736
  %v3248 = vadd.f32 %v3247, %v2737
  %v3249 = vadd.f32 %v3248, %v2738
  %v3250 = vadd.f32 %v3249, %v2739
  %v3251 = vadd.f32 %v3250, %v2740
  %v3252 = vadd.f32 %v3251, %v2741
  %v3253 = vadd.f32 %v3252, %v2742
  %v3254 = vadd.f32 %v3253, %v2743
  %v3255 = vadd.f32 %v3254, %v2744
  %v3256 = vadd.f32 %v3255, %v2745
  %v3257 = vadd.f32 %v3256, %v2746
  %v3258 = vadd.f32 %v3257, %v2747
  %v3259 = vadd.f32 %v3258, %v2748
  %v3260 = vadd.f32 %v3259, %v2749
  %v3261 = vadd.f32 %v3260, %v2750
  %v3262 = vadd.f32 %v3261, %v2751
  %v3263 = vadd.f32 %v3262, %v2752
  %v3264 = vadd.f32 %v3263, %v2753
  %v3265 = vrot.slane %v3264, 4
  %v3266 = vadd.f32 %v3264, %v3265
  %v3267 = vrot.slane %v3266, 2
  %v3268 = vadd.f32 %v3266, %v3267
  %v3269 = vrot.slane %v3268, 1
  %v3270 = vadd.f32 %v3268, %v3269
  %v3271 = vadd.f32 %v2754, %v2755
  %v3272 = vadd.f32 %v3271, %v2756
  %v3273 = vadd.f32 %v3272, %v2757
  %v3274 = vadd.f32 %v3273, %v2758
  %v3275 = vadd.f32 %v3274, %v2759
  %v3276 = vadd.f32 %v3275, %v2760
  %v3277 = vadd.f32 %v3276, %v2761
  %v3278 = vadd.f32 %v3277, %v2762
  %v3279 = vadd.f32 %v3278, %v2763
  %v3280 = vadd.f32 %v3279, %v2764
  %v3281 = vadd.f32 %v3280, %v2765
  %v3282 = vadd.f32 %v3281, %v2766
  %v3283 = vadd.f32 %v3282, %v2767
  %v3284 = vadd.f32 %v3283, %v2768
  %v3285 = vadd.f32 %v3284, %v2769
  %v3286 = vadd.f32 %v3285, %v2770
  %v3287 = vadd.f32 %v3286, %v2771
  %v3288 = vadd.f32 %v3287, %v2772
  %v3289 = vadd.f32 %v3288, %v2773
  %v3290 = vadd.f32 %v3289, %v2774
  %v3291 = vadd.f32 %v3290, %v2775
  %v3292 = vadd.f32 %v3291, %v2776
  %v3293 = vadd.f32 %v3292, %v2777
  %v3294 = vadd.f32 %v3293, %v2778
  %v3295 = vadd.f32 %v3294, %v2779
  %v3296 = vadd.f32 %v3295, %v2780
  %v3297 = vadd.f32 %v3296, %v2781
  %v3298 = vadd.f32 %v3297, %v2782
  %v3299 = vadd.f32 %v3298, %v2783
  %v3300 = vadd.f32 %v3299, %v2784
  %v3301 = vadd.f32 %v3300, %v2785
  %v3302 = vadd.f32 %v3301, %v2786
  %v3303 = vadd.f32 %v3302, %v2787
  %v3304 = vadd.f32 %v3303, %v2788
  %v3305 = vadd.f32 %v3304, %v2789
  %v3306 = vadd.f32 %v3305, %v2790
  %v3307 = vadd.f32 %v3306, %v2791
  %v3308 = vadd.f32 %v3307, %v2792
  %v3309 = vadd.f32 %v3308, %v2793
  %v3310 = vadd.f32 %v3309, %v2794
  %v3311 = vadd.f32 %v3310, %v2795
  %v3312 = vadd.f32 %v3311, %v2796
  %v3313 = vadd.f32 %v3312, %v2797
  %v3314 = vadd.f32 %v3313, %v2798
  %v3315 = vadd.f32 %v3314, %v2799
  %v3316 = vadd.f32 %v3315, %v2800
  %v3317 = vadd.f32 %v3316, %v2801
  %v3318 = vadd.f32 %v3317, %v2802
  %v3319 = vadd.f32 %v3318, %v2803
  %v3320 = vadd.f32 %v3319, %v2804
  %v3321 = vadd.f32 %v3320, %v2805
  %v3322 = vadd.f32 %v3321, %v2806
  %v3323 = vadd.f32 %v3322, %v2807
  %v3324 = vadd.f32 %v3323, %v2808
  %v3325 = vadd.f32 %v3324, %v2809
  %v3326 = vadd.f32 %v3325, %v2810
  %v3327 = vadd.f32 %v3326, %v2811
  %v3328 = vadd.f32 %v3327, %v2812
  %v3329 = vadd.f32 %v3328, %v2813
  %v3330 = vadd.f32 %v3329, %v2814
  %v3331 = vadd.f32 %v3330, %v2815
  %v3332 = vadd.f32 %v3331, %v2816
  %v3333 = vadd.f32 %v3332, %v2817
  %v3334 = vrot.slane %v3333, 4
  %v3335 = vadd.f32 %v3333, %v3334
  %v3336 = vrot.slane %v3335, 2
  %v3337 = vadd.f32 %v3335, %v3336
  %v3338 = vrot.slane %v3337, 1
  %v3339 = vadd.f32 %v3337, %v3338
  %v3340 = vadd.f32 %v2818, %v2819
  %v3341 = vadd.f32 %v3340, %v2820
  %v3342 = vadd.f32 %v3341, %v2821
  %v3343 = vadd.f32 %v3342, %v2822
  %v3344 = vadd.f32 %v3343, %v2823
  %v3345 = vadd.f32 %v3344, %v2824
  %v3346 = vadd.f32 %v3345, %v2825
  %v3347 = vadd.f32 %v3346, %v2826
  %v3348 = vadd.f32 %v3347, %v2827
  %v3349 = vadd.f32 %v3348, %v2828
  %v3350 = vadd.f32 %v3349, %v2829
  %v3351 = vadd.f32 %v3350, %v2830
  %v3352 = vadd.f32 %v3351, %v2831
  %v3353 = vadd.f32 %v3352, %v2832
  %v3354 = vadd.f32 %v3353, %v2833
  %v3355 = vadd.f32 %v3354, %v2834
  %v3356 = vadd.f32 %v3355, %v2835
  %v3357 = vadd.f32 %v3356, %v2836
  %v3358 = vadd.f32 %v3357, %v2837
  %v3359 = vadd.f32 %v3358, %v2838
  %v3360 = vadd.f32 %v3359, %v2839
  %v3361 = vadd.f32 %v3360, %v2840
  %v3362 = vadd.f32 %v3361, %v2841
  %v3363 = vadd.f32 %v3362, %v2842
  %v3364 = vadd.f32 %v3363, %v2843
  %v3365 = vadd.f32 %v3364, %v2844
  %v3366 = vadd.f32 %v3365, %v2845
  %v3367 = vadd.f32 %v3366, %v2846
  %v3368 = vadd.f32 %v3367, %v2847
  %v3369 = vadd.f32 %v3368, %v2848
  %v3370 = vadd.f32 %v3369, %v2849
  %v3371 = vadd.f32 %v3370, %v2850
  %v3372 = vadd.f32 %v3371, %v2851
  %v3373 = vadd.f32 %v3372, %v2852
  %v3374 = vadd.f32 %v3373, %v2853
  %v3375 = vadd.f32 %v3374, %v2854
  %v3376 = vadd.f32 %v3375, %v2855
  %v3377 = vadd.f32 %v3376, %v2856
  %v3378 = vadd.f32 %v3377, %v2857
  %v3379 = vadd.f32 %v3378, %v2858
  %v3380 = vadd.f32 %v3379, %v2859
  %v3381 = vadd.f32 %v3380, %v2860
  %v3382 = vadd.f32 %v3381, %v2861
  %v3383 = vadd.f32 %v3382, %v2862
  %v3384 = vadd.f32 %v3383, %v2863
  %v3385 = vadd.f32 %v3384, %v2864
  %v3386 = vadd.f32 %v3385, %v2865
  %v3387 = vadd.f32 %v3386, %v2866
  %v3388 = vadd.f32 %v3387, %v2867
  %v3389 = vadd.f32 %v3388, %v2868
  %v3390 = vadd.f32 %v3389, %v2869
  %v3391 = vadd.f32 %v3390, %v2870
  %v3392 = vadd.f32 %v3391, %v2871
  %v3393 = vadd.f32 %v3392, %v2872
  %v3394 = vadd.f32 %v3393, %v2873
  %v3395 = vadd.f32 %v3394, %v2874
  %v3396 = vadd.f32 %v3395, %v2875
  %v3397 = vadd.f32 %v3396, %v2876
  %v3398 = vadd.f32 %v3397, %v2877
  %v3399 = vadd.f32 %v3398, %v2878
  %v3400 = vadd.f32 %v3399, %v2879
  %v3401 = vadd.f32 %v3400, %v2880
  %v3402 = vadd.f32 %v3401, %v2881
  %v3403 = vrot.slane %v3402, 4
  %v3404 = vadd.f32 %v3402, %v3403
  %v3405 = vrot.slane %v3404, 2
  %v3406 = vadd.f32 %v3404, %v3405
  %v3407 = vrot.slane %v3406, 1
  %v3408 = vadd.f32 %v3406, %v3407
  %v3409 = vadd.f32 %v2882, %v2883
  %v3410 = vadd.f32 %v3409, %v2884
  %v3411 = vadd.f32 %v3410, %v2885
  %v3412 = vadd.f32 %v3411, %v2886
  %v3413 = vadd.f32 %v3412, %v2887
  %v3414 = vadd.f32 %v3413, %v2888
  %v3415 = vadd.f32 %v3414, %v2889
  %v3416 = vadd.f32 %v3415, %v2890
  %v3417 = vadd.f32 %v3416, %v2891
  %v3418 = vadd.f32 %v3417, %v2892
  %v3419 = vadd.f32 %v3418, %v2893
  %v3420 = vadd.f32 %v3419, %v2894
  %v3421 = vadd.f32 %v3420, %v2895
  %v3422 = vadd.f32 %v3421, %v2896
  %v3423 = vadd.f32 %v3422, %v2897
  %v3424 = vadd.f32 %v3423, %v2898
  %v3425 = vadd.f32 %v3424, %v2899
  %v3426 = vadd.f32 %v3425, %v2900
  %v3427 = vadd.f32 %v3426, %v2901
  %v3428 = vadd.f32 %v3427, %v2902
  %v3429 = vadd.f32 %v3428, %v2903
  %v3430 = vadd.f32 %v3429, %v2904
  %v3431 = vadd.f32 %v3430, %v2905
  %v3432 = vadd.f32 %v3431, %v2906
  %v3433 = vadd.f32 %v3432, %v2907
  %v3434 = vadd.f32 %v3433, %v2908
  %v3435 = vadd.f32 %v3434, %v2909
  %v3436 = vadd.f32 %v3435, %v2910
  %v3437 = vadd.f32 %v3436, %v2911
  %v3438 = vadd.f32 %v3437, %v2912
  %v3439 = vadd.f32 %v3438, %v2913
  %v3440 = vadd.f32 %v3439, %v2914
  %v3441 = vadd.f32 %v3440, %v2915
  %v3442 = vadd.f32 %v3441, %v2916
  %v3443 = vadd.f32 %v3442, %v2917
  %v3444 = vadd.f32 %v3443, %v2918
  %v3445 = vadd.f32 %v3444, %v2919
  %v3446 = vadd.f32 %v3445, %v2920
  %v3447 = vadd.f32 %v3446, %v2921
  %v3448 = vadd.f32 %v3447, %v2922
  %v3449 = vadd.f32 %v3448, %v2923
  %v3450 = vadd.f32 %v3449, %v2924
  %v3451 = vadd.f32 %v3450, %v2925
  %v3452 = vadd.f32 %v3451, %v2926
  %v3453 = vadd.f32 %v3452, %v2927
  %v3454 = vadd.f32 %v3453, %v2928
  %v3455 = vadd.f32 %v3454, %v2929
  %v3456 = vadd.f32 %v3455, %v2930
  %v3457 = vadd.f32 %v3456, %v2931
  %v3458 = vadd.f32 %v3457, %v2932
  %v3459 = vadd.f32 %v3458, %v2933
  %v3460 = vadd.f32 %v3459, %v2934
  %v3461 = vadd.f32 %v3460, %v2935
  %v3462 = vadd.f32 %v3461, %v2936
  %v3463 = vadd.f32 %v3462, %v2937
  %v3464 = vadd.f32 %v3463, %v2938
  %v3465 = vadd.f32 %v3464, %v2939
  %v3466 = vadd.f32 %v3465, %v2940
  %v3467 = vadd.f32 %v3466, %v2941
  %v3468 = vadd.f32 %v3467, %v2942
  %v3469 = vadd.f32 %v3468, %v2943
  %v3470 = vadd.f32 %v3469, %v2944
  %v3471 = vadd.f32 %v3470, %v2945
  %v3472 = vrot.slane %v3471, 4
  %v3473 = vadd.f32 %v3471, %v3472
  %v3474 = vrot.slane %v3473, 2
  %v3475 = vadd.f32 %v3473, %v3474
  %v3476 = vrot.slane %v3475, 1
  %v3477 = vadd.f32 %v3475, %v3476
  %v3478 = vadd.f32 %v2946, %v2947
  %v3479 = vadd.f32 %v3478, %v2948
  %v3480 = vadd.f32 %v3479, %v2949
  %v3481 = vadd.f32 %v3480, %v2950
  %v3482 = vadd.f32 %v3481, %v2951
  %v3483 = vadd.f32 %v3482, %v2952
  %v3484 = vadd.f32 %v3483, %v2953
  %v3485 = vadd.f32 %v3484, %v2954
  %v3486 = vadd.f32 %v3485, %v2955
  %v3487 = vadd.f32 %v3486, %v2956
  %v3488 = vadd.f32 %v3487, %v2957
  %v3489 = vadd.f32 %v3488, %v2958
  %v3490 = vadd.f32 %v3489, %v2959
  %v3491 = vadd.f32 %v3490, %v2960
  %v3492 = vadd.f32 %v3491, %v2961
  %v3493 = vadd.f32 %v3492, %v2962
  %v3494 = vadd.f32 %v3493, %v2963
  %v3495 = vadd.f32 %v3494, %v2964
  %v3496 = vadd.f32 %v3495, %v2965
  %v3497 = vadd.f32 %v3496, %v2966
  %v3498 = vadd.f32 %v3497, %v2967
  %v3499 = vadd.f32 %v3498, %v2968
  %v3500 = vadd.f32 %v3499, %v2969
  %v3501 = vadd.f32 %v3500, %v2970
  %v3502 = vadd.f32 %v3501, %v2971
  %v3503 = vadd.f32 %v3502, %v2972
  %v3504 = vadd.f32 %v3503, %v2973
  %v3505 = vadd.f32 %v3504, %v2974
  %v3506 = vadd.f32 %v3505, %v2975
  %v3507 = vadd.f32 %v3506, %v2976
  %v3508 = vadd.f32 %v3507, %v2977
  %v3509 = vadd.f32 %v3508, %v2978
  %v3510 = vadd.f32 %v3509, %v2979
  %v3511 = vadd.f32 %v3510, %v2980
  %v3512 = vadd.f32 %v3511, %v2981
  %v3513 = vadd.f32 %v3512, %v2982
  %v3514 = vadd.f32 %v3513, %v2983
  %v3515 = vadd.f32 %v3514, %v2984
  %v3516 = vadd.f32 %v3515, %v2985
  %v3517 = vadd.f32 %v3516, %v2986
  %v3518 = vadd.f32 %v3517, %v2987
  %v3519 = vadd.f32 %v3518, %v2988
  %v3520 = vadd.f32 %v3519, %v2989
  %v3521 = vadd.f32 %v3520, %v2990
  %v3522 = vadd.f32 %v3521, %v2991
  %v3523 = vadd.f32 %v3522, %v2992
  %v3524 = vadd.f32 %v3523, %v2993
  %v3525 = vadd.f32 %v3524, %v2994
  %v3526 = vadd.f32 %v3525, %v2995
  %v3527 = vadd.f32 %v3526, %v2996
  %v3528 = vadd.f32 %v3527, %v2997
  %v3529 = vadd.f32 %v3528, %v2998
  %v3530 = vadd.f32 %v3529, %v2999
  %v3531 = vadd.f32 %v3530, %v3000
  %v3532 = vadd.f32 %v3531, %v3001
  %v3533 = vadd.f32 %v3532, %v3002
  %v3534 = vadd.f32 %v3533, %v3003
  %v3535 = vadd.f32 %v3534, %v3004
  %v3536 = vadd.f32 %v3535, %v3005
  %v3537 = vadd.f32 %v3536, %v3006
  %v3538 = vadd.f32 %v3537, %v3007
  %v3539 = vadd.f32 %v3538, %v3008
  %v3540 = vadd.f32 %v3539, %v3009
  %v3541 = vrot.slane %v3540, 4
  %v3542 = vadd.f32 %v3540, %v3541
  %v3543 = vrot.slane %v3542, 2
  %v3544 = vadd.f32 %v3542, %v3543
  %v3545 = vrot.slane %v3544, 1
  %v3546 = vadd.f32 %v3544, %v3545
  %v3547 = vadd.f32 %v3010, %v3011
  %v3548 = vadd.f32 %v3547, %v3012
  %v3549 = vadd.f32 %v3548, %v3013
  %v3550 = vadd.f32 %v3549, %v3014
  %v3551 = vadd.f32 %v3550, %v3015
  %v3552 = vadd.f32 %v3551, %v3016
  %v3553 = vadd.f32 %v3552, %v3017
  %v3554 = vadd.f32 %v3553, %v3018
  %v3555 = vadd.f32 %v3554, %v3019
  %v3556 = vadd.f32 %v3555, %v3020
  %v3557 = vadd.f32 %v3556, %v3021
  %v3558 = vadd.f32 %v3557, %v3022
  %v3559 = vadd.f32 %v3558, %v3023
  %v3560 = vadd.f32 %v3559, %v3024
  %v3561 = vadd.f32 %v3560, %v3025
  %v3562 = vadd.f32 %v3561, %v3026
  %v3563 = vadd.f32 %v3562, %v3027
  %v3564 = vadd.f32 %v3563, %v3028
  %v3565 = vadd.f32 %v3564, %v3029
  %v3566 = vadd.f32 %v3565, %v3030
  %v3567 = vadd.f32 %v3566, %v3031
  %v3568 = vadd.f32 %v3567, %v3032
  %v3569 = vadd.f32 %v3568, %v3033
  %v3570 = vadd.f32 %v3569, %v3034
  %v3571 = vadd.f32 %v3570, %v3035
  %v3572 = vadd.f32 %v3571, %v3036
  %v3573 = vadd.f32 %v3572, %v3037
  %v3574 = vadd.f32 %v3573, %v3038
  %v3575 = vadd.f32 %v3574, %v3039
  %v3576 = vadd.f32 %v3575, %v3040
  %v3577 = vadd.f32 %v3576, %v3041
  %v3578 = vadd.f32 %v3577, %v3042
  %v3579 = vadd.f32 %v3578, %v3043
  %v3580 = vadd.f32 %v3579, %v3044
  %v3581 = vadd.f32 %v3580, %v3045
  %v3582 = vadd.f32 %v3581, %v3046
  %v3583 = vadd.f32 %v3582, %v3047
  %v3584 = vadd.f32 %v3583, %v3048
  %v3585 = vadd.f32 %v3584, %v3049
  %v3586 = vadd.f32 %v3585, %v3050
  %v3587 = vadd.f32 %v3586, %v3051
  %v3588 = vadd.f32 %v3587, %v3052
  %v3589 = vadd.f32 %v3588, %v3053
  %v3590 = vadd.f32 %v3589, %v3054
  %v3591 = vadd.f32 %v3590, %v3055
  %v3592 = vadd.f32 %v3591, %v3056
  %v3593 = vadd.f32 %v3592, %v3057
  %v3594 = vadd.f32 %v3593, %v3058
  %v3595 = vadd.f32 %v3594, %v3059
  %v3596 = vadd.f32 %v3595, %v3060
  %v3597 = vadd.f32 %v3596, %v3061
  %v3598 = vadd.f32 %v3597, %v3062
  %v3599 = vadd.f32 %v3598, %v3063
  %v3600 = vadd.f32 %v3599, %v3064
  %v3601 = vadd.f32 %v3600, %v3065
  %v3602 = vadd.f32 %v3601, %v3066
  %v3603 = vadd.f32 %v3602, %v3067
  %v3604 = vadd.f32 %v3603, %v3068
  %v3605 = vadd.f32 %v3604, %v3069
  %v3606 = vadd.f32 %v3605, %v3070
  %v3607 = vadd.f32 %v3606, %v3071
  %v3608 = vadd.f32 %v3607, %v3072
  %v3609 = vadd.f32 %v3608, %v3073
  %v3610 = vrot.slane %v3609, 4
  %v3611 = vadd.f32 %v3609, %v3610
  %v3612 = vrot.slane %v3611, 2
  %v3613 = vadd.f32 %v3611, %v3612
  %v3614 = vrot.slane %v3613, 1
  %v3615 = vadd.f32 %v3613, %v3614
  %v3616 = vadd.f32 %v3074, %v3075
  %v3617 = vadd.f32 %v3616, %v3076
  %v3618 = vadd.f32 %v3617, %v3077
  %v3619 = vadd.f32 %v3618, %v3078
  %v3620 = vadd.f32 %v3619, %v3079
  %v3621 = vadd.f32 %v3620, %v3080
  %v3622 = vadd.f32 %v3621, %v3081
  %v3623 = vadd.f32 %v3622, %v3082
  %v3624 = vadd.f32 %v3623, %v3083
  %v3625 = vadd.f32 %v3624, %v3084
  %v3626 = vadd.f32 %v3625, %v3085
  %v3627 = vadd.f32 %v3626, %v3086
  %v3628 = vadd.f32 %v3627, %v3087
  %v3629 = vadd.f32 %v3628, %v3088
  %v3630 = vadd.f32 %v3629, %v3089
  %v3631 = vadd.f32 %v3630, %v3090
  %v3632 = vadd.f32 %v3631, %v3091
  %v3633 = vadd.f32 %v3632, %v3092
  %v3634 = vadd.f32 %v3633, %v3093
  %v3635 = vadd.f32 %v3634, %v3094
  %v3636 = vadd.f32 %v3635, %v3095
  %v3637 = vadd.f32 %v3636, %v3096
  %v3638 = vadd.f32 %v3637, %v3097
  %v3639 = vadd.f32 %v3638, %v3098
  %v3640 = vadd.f32 %v3639, %v3099
  %v3641 = vadd.f32 %v3640, %v3100
  %v3642 = vadd.f32 %v3641, %v3101
  %v3643 = vadd.f32 %v3642, %v3102
  %v3644 = vadd.f32 %v3643, %v3103
  %v3645 = vadd.f32 %v3644, %v3104
  %v3646 = vadd.f32 %v3645, %v3105
  %v3647 = vadd.f32 %v3646, %v3106
  %v3648 = vadd.f32 %v3647, %v3107
  %v3649 = vadd.f32 %v3648, %v3108
  %v3650 = vadd.f32 %v3649, %v3109
  %v3651 = vadd.f32 %v3650, %v3110
  %v3652 = vadd.f32 %v3651, %v3111
  %v3653 = vadd.f32 %v3652, %v3112
  %v3654 = vadd.f32 %v3653, %v3113
  %v3655 = vadd.f32 %v3654, %v3114
  %v3656 = vadd.f32 %v3655, %v3115
  %v3657 = vadd.f32 %v3656, %v3116
  %v3658 = vadd.f32 %v3657, %v3117
  %v3659 = vadd.f32 %v3658, %v3118
  %v3660 = vadd.f32 %v3659, %v3119
  %v3661 = vadd.f32 %v3660, %v3120
  %v3662 = vadd.f32 %v3661, %v3121
  %v3663 = vadd.f32 %v3662, %v3122
  %v3664 = vadd.f32 %v3663, %v3123
  %v3665 = vadd.f32 %v3664, %v3124
  %v3666 = vadd.f32 %v3665, %v3125
  %v3667 = vadd.f32 %v3666, %v3126
  %v3668 = vadd.f32 %v3667, %v3127
  %v3669 = vadd.f32 %v3668, %v3128
  %v3670 = vadd.f32 %v3669, %v3129
  %v3671 = vadd.f32 %v3670, %v3130
  %v3672 = vadd.f32 %v3671, %v3131
  %v3673 = vadd.f32 %v3672, %v3132
  %v3674 = vadd.f32 %v3673, %v3133
  %v3675 = vadd.f32 %v3674, %v3134
  %v3676 = vadd.f32 %v3675, %v3135
  %v3677 = vadd.f32 %v3676, %v3136
  %v3678 = vadd.f32 %v3677, %v3137
  %v3679 = vrot.slane %v3678, 4
  %v3680 = vadd.f32 %v3678, %v3679
  %v3681 = vrot.slane %v3680, 2
  %v3682 = vadd.f32 %v3680, %v3681
  %v3683 = vrot.slane %v3682, 1
  %v3684 = vadd.f32 %v3682, %v3683
  %v3685 = vadd.f32 %v3138, %v3139
  %v3686 = vadd.f32 %v3685, %v3140
  %v3687 = vadd.f32 %v3686, %v3141
  %v3688 = vadd.f32 %v3687, %v3142
  %v3689 = vadd.f32 %v3688, %v3143
  %v3690 = vadd.f32 %v3689, %v3144
  %v3691 = vadd.f32 %v3690, %v3145
  %v3692 = vadd.f32 %v3691, %v3146
  %v3693 = vadd.f32 %v3692, %v3147
  %v3694 = vadd.f32 %v3693, %v3148
  %v3695 = vadd.f32 %v3694, %v3149
  %v3696 = vadd.f32 %v3695, %v3150
  %v3697 = vadd.f32 %v3696, %v3151
  %v3698 = vadd.f32 %v3697, %v3152
  %v3699 = vadd.f32 %v3698, %v3153
  %v3700 = vadd.f32 %v3699, %v3154
  %v3701 = vadd.f32 %v3700, %v3155
  %v3702 = vadd.f32 %v3701, %v3156
  %v3703 = vadd.f32 %v3702, %v3157
  %v3704 = vadd.f32 %v3703, %v3158
  %v3705 = vadd.f32 %v3704, %v3159
  %v3706 = vadd.f32 %v3705, %v3160
  %v3707 = vadd.f32 %v3706, %v3161
  %v3708 = vadd.f32 %v3707, %v3162
  %v3709 = vadd.f32 %v3708, %v3163
  %v3710 = vadd.f32 %v3709, %v3164
  %v3711 = vadd.f32 %v3710, %v3165
  %v3712 = vadd.f32 %v3711, %v3166
  %v3713 = vadd.f32 %v3712, %v3167
  %v3714 = vadd.f32 %v3713, %v3168
  %v3715 = vadd.f32 %v3714, %v3169
  %v3716 = vadd.f32 %v3715, %v3170
  %v3717 = vadd.f32 %v3716, %v3171
  %v3718 = vadd.f32 %v3717, %v3172
  %v3719 = vadd.f32 %v3718, %v3173
  %v3720 = vadd.f32 %v3719, %v3174
  %v3721 = vadd.f32 %v3720, %v3175
  %v3722 = vadd.f32 %v3721, %v3176
  %v3723 = vadd.f32 %v3722, %v3177
  %v3724 = vadd.f32 %v3723, %v3178
  %v3725 = vadd.f32 %v3724, %v3179
  %v3726 = vadd.f32 %v3725, %v3180
  %v3727 = vadd.f32 %v3726, %v3181
  %v3728 = vadd.f32 %v3727, %v3182
  %v3729 = vadd.f32 %v3728, %v3183
  %v3730 = vadd.f32 %v3729, %v3184
  %v3731 = vadd.f32 %v3730, %v3185
  %v3732 = vadd.f32 %v3731, %v3186
  %v3733 = vadd.f32 %v3732, %v3187
  %v3734 = vadd.f32 %v3733, %v3188
  %v3735 = vadd.f32 %v3734, %v3189
  %v3736 = vadd.f32 %v3735, %v3190
  %v3737 = vadd.f32 %v3736, %v3191
  %v3738 = vadd.f32 %v3737, %v3192
  %v3739 = vadd.f32 %v3738, %v3193
  %v3740 = vadd.f32 %v3739, %v3194
  %v3741 = vadd.f32 %v3740, %v3195
  %v3742 = vadd.f32 %v3741, %v3196
  %v3743 = vadd.f32 %v3742, %v3197
  %v3744 = vadd.f32 %v3743, %v3198
  %v3745 = vadd.f32 %v3744, %v3199
  %v3746 = vadd.f32 %v3745, %v3200
  %v3747 = vadd.f32 %v3746, %v3201
  %v3748 = vrot.slane %v3747, 4
  %v3749 = vadd.f32 %v3747, %v3748
  %v3750 = vrot.slane %v3749, 2
  %v3751 = vadd.f32 %v3749, %v3750
  %v3752 = vrot.slane %v3751, 1
  %v3753 = vadd.f32 %v3751, %v3752
  %vm3762 = vcmask 1041409
  %v3763 = vsel %vm3762, %v3339, %v3270
  %vm3764 = vcmask 1042434
  %v3765 = vsel %vm3764, %v3408, %v3763
  %vm3766 = vcmask 1043459
  %v3767 = vsel %vm3766, %v3477, %v3765
  %vm3768 = vcmask 1044484
  %v3769 = vsel %vm3768, %v3546, %v3767
  %vm3770 = vcmask 1045509
  %v3771 = vsel %vm3770, %v3615, %v3769
  %vm3772 = vcmask 1046534
  %v3773 = vsel %vm3772, %v3684, %v3771
  %vm3774 = vcmask 1047559
  %v3775 = vsel %vm3774, %v3753, %v3773
  %v3777 = vadd.f32 %v2689, %v3775
  %3778 = vst [vmem:[%s2] sm:$0xff] %v3777
  // Predicated region
  $region14: #{lj_shifted_energy.1} parent=0 // pred_check
    _
  $region15: #{lj_shifted_energy.1} parent=0 // pred_check_branch
    %3780 = sbr.rel (0) target = $region17
  $region16: #{lj_shifted_energy.1} parent=0 // pred_region
    _
  $region17: #{lj_shifted_energy.1} parent=0 // pred_fallthru
    _
  // Predicated region
  $region18: #{lj_shifted_energy.1} parent=0 // pred_check
    _
  $region19: #{lj_shifted_energy.1} parent=0 // pred_check_branch
    %3782 = sbr.rel (0) target = $region21
  $region20: #{lj_shifted_energy.1} parent=0 // pred_region
    _
  $region21: #{lj_shifted_energy.1} parent=0 // pred_fallthru
    _

</llo_original>
